<compile_context>
chip_gen: v7x
topology: tpu7x:2x2x1
jax: 0.10.0
libtpu: 0.0.40
codegen_flags: <defaults>
</compile_context>

<pallas_src>
import numpy as np
import jax
import jax.numpy as jnp
from jax import lax
from jax.experimental import pallas as pl
from jax.experimental.pallas import tpu as pltpu


def _round_up(x, m):
    return (x + m - 1) // m * m


# ----------------------------------------------------------------------------
# Kernel A: GRU recurrence + attention -> c_local, ht   (f32, latency-bound)
# ----------------------------------------------------------------------------
def narm_feat_kernel(embs_ref, step_mask_ref, seq_mask_ref,
                     w_ih_r_ref, w_ih_z_ref, w_ih_n_ref,
                     w_hh_r_ref, w_hh_z_ref, w_hh_n_ref,
                     b_ir_ref, b_iz_ref, b_in_ref, b_hn_ref,
                     a1_ref, a2_ref, vt_ref,
                     c_local_ref, ht_ref):
    T, B, E = embs_ref.shape
    H = a1_ref.shape[0]

    embs2d = embs_ref[...].reshape(T * B, E)

    # Hoisted input-side GRU matmuls, one per gate, so every per-step gate
    # tensor starts at lane offset 0 (no mid-lane slicing in the recurrence).
    # Bias folding: b_hh's r/z parts are already merged into b_ir/b_iz.
    gi_r = (jnp.dot(embs2d, w_ih_r_ref[...], preferred_element_type=jnp.float32)
            + b_ir_ref[...]).reshape(T, B, H)
    gi_z = (jnp.dot(embs2d, w_ih_z_ref[...], preferred_element_type=jnp.float32)
            + b_iz_ref[...]).reshape(T, B, H)
    gi_n = (jnp.dot(embs2d, w_ih_n_ref[...], preferred_element_type=jnp.float32)
            + b_in_ref[...]).reshape(T, B, H)

    w_hh_r = w_hh_r_ref[...]
    w_hh_z = w_hh_z_ref[...]
    w_hh_n = w_hh_n_ref[...]
    b_hn = b_hn_ref[...]                        # (1, H) hidden bias of n gate
    step_mask = step_mask_ref[...]              # (T, B, 1) float validity

    h = jnp.zeros((B, H), jnp.float32)
    gru_steps = []
    for t in range(T):                          # T static -> fully unrolled
        gh_r = jnp.dot(h, w_hh_r, preferred_element_type=jnp.float32)
        gh_z = jnp.dot(h, w_hh_z, preferred_element_type=jnp.float32)
        gh_n = jnp.dot(h, w_hh_n, preferred_element_type=jnp.float32)
        r = jax.nn.sigmoid(gi_r[t] + gh_r)
        z = jax.nn.sigmoid(gi_z[t] + gh_z)
        n = jnp.tanh(gi_n[t] + r * (gh_n + b_hn))
        h_new = (1.0 - z) * n + z * h
        m = step_mask[t] > 0.0                  # (B, 1) packed-seq validity
        h = jnp.where(m, h_new, h)              # freeze hidden past length[b]
        gru_steps.append(jnp.where(m, h, 0.0))  # pad_packed_sequence zeroing

    ht = h                                      # (B, H) == hidden[-1]
    gru = jnp.stack(gru_steps, axis=0)          # (T, B, H)

    # Attention over the session.
    q1 = jnp.dot(gru.reshape(T * B, H), a1_ref[...],
                 preferred_element_type=jnp.float32).reshape(T, B, H)
    q2 = jnp.dot(ht, a2_ref[...], preferred_element_type=jnp.float32)  # (B, H)
    sig = jax.nn.sigmoid(q1 + seq_mask_ref[...] * q2[None, :, :])
    # alpha via VPU/XLU lane reduction instead of a 1-wide MXU matmul.
    alpha = jnp.sum(sig * vt_ref[...][None, :, :], axis=-1, keepdims=True)

    c_local_ref[...] = jnp.sum(alpha * gru, axis=0)                    # (B, H)
    ht_ref[...] = ht


# ----------------------------------------------------------------------------
# Kernel B: tiled item scores. Using  feat @ (items @ W).T == (feat@W.T)@items.T
# the per-block work collapses to one (B, E_pad) @ (E_pad, TN) MXU matmul that
# streams the lane-dense transposed item table. bf16 operands, f32 accumulate.
# ----------------------------------------------------------------------------
def narm_scores_kernel(featp_ref, item_t_ref, scores_ref):
    scores_ref[...] = jnp.dot(featp_ref[...], item_t_ref[...],
                              preferred_element_type=jnp.float32)      # (B, TN)


# ----------------------------------------------------------------------------
# Glue: embeddings, masks, last-item M2 gather, padding, pallas_call wrappers.
# ----------------------------------------------------------------------------
def _last_item_rows(M2, seq, T, B):
    # Last item is seq[-1] if the sequence has no zeros, otherwise the element
    # right before the first zero (torch negative indexing wraps).
    # TODO(synk): an all-zero (length 0) column only occurs for batch-padding
    # rows here; it silently selects item 0 where torch would error.
    seq_bT = seq.T                                    # (B, T)
    has_zero = jnp.any(seq_bT == 0, axis=1)
    first_zero = jnp.argmax(seq_bT == 0, axis=1)
    idx = jnp.where(has_zero, first_zero - 1, T - 1)
    idx = jnp.mod(idx, T)
    last_items = seq_bT[jnp.arange(B), idx]
    return M2[last_items]                             # (B, n_items)


def narm_forward(params, seq, lengths, *, items_block=8192):
    T, B = seq.shape
    n_items, E = params["emb"].shape
    H = params["a1_T"].shape[0]

    # --- pad batch (sublane) dimension to a multiple of 8 ---------------------
    B_pad = _round_up(B, 8)
    seq_p = jnp.pad(seq, ((0, 0), (0, B_pad - B)))
    lengths_p = jnp.pad(lengths, (0, B_pad - B))

    embs = params["emb"][seq_p]                                               # (T,Bp,E)
    t_idx = jnp.arange(T)[:, None]
    step_mask = (t_idx < lengths_p[None, :]).astype(jnp.float32)[:, :, None]  # (T,Bp,1)
    seq_mask = (seq_p > 0).astype(jnp.float32)[:, :, None]                    # (T,Bp,1)

    # Per-gate weight / bias layout (PyTorch GRU gate order r, z, n preserved).
    # GRU bias folding: b_hh r/z merged into the hoisted input bias; b_hh n
    # part applied inside the n gate (matches nn.GRU semantics).
    w_ih_T, w_hh_T = params["w_ih_T"], params["w_hh_T"]                       # (E,3H),(H,3H)
    b_ih, b_hh = params["b_ih"], params["b_hh"]                               # (1,3H)
    w_ih_r, w_ih_z, w_ih_n = w_ih_T[:, :H], w_ih_T[:, H:2 * H], w_ih_T[:, 2 * H:]
    w_hh_r, w_hh_z, w_hh_n = w_hh_T[:, :H], w_hh_T[:, H:2 * H], w_hh_T[:, 2 * H:]
    b_ir = b_ih[:, :H] + b_hh[:, :H]
    b_iz = b_ih[:, H:2 * H] + b_hh[:, H:2 * H]
    b_in = b_ih[:, 2 * H:]
    b_hn = b_hh[:, 2 * H:]

    c_local, ht = pl.pallas_call(
        narm_feat_kernel,
        out_shape=(jax.ShapeDtypeStruct((B_pad, H), jnp.float32),
                   jax.ShapeDtypeStruct((B_pad, H), jnp.float32)),
        in_specs=[pl.BlockSpec(memory_space=pltpu.MemorySpace.VMEM)] * 16,
        out_specs=(pl.BlockSpec(memory_space=pltpu.MemorySpace.VMEM),
                   pl.BlockSpec(memory_space=pltpu.MemorySpace.VMEM)),
    )(embs, step_mask, seq_mask,
      w_ih_r, w_ih_z, w_ih_n, w_hh_r, w_hh_z, w_hh_n,
      b_ir, b_iz, b_in, b_hn,
      params["a1_T"], params["a2_T"], params["vt_row"])

    # trans_emb: B-row gather of M2 and the (B,N)@(N,E) contraction stay in XLA
    # (pure memory-bound gather; no reason to haul M2 rows through the kernel).
    trans_rows = _last_item_rows(params["M2"], seq_p, T, B_pad)               # (Bp, N)
    trans_emb = trans_rows @ params["emb"]                                    # (Bp, E)

    # Algebraic refactor: scores = feat @ (items @ W).T = (feat @ W.T) @ items.T
    feat = jnp.concatenate([c_local, ht, trans_emb], axis=1)                  # (Bp, 2H+E)
    feat_proj = feat @ params["bwT"].T                                        # (Bp, E) f32

    # Pad the contraction dim E 50 -> 64 (bf16 sublane multiple) and
    # pre-transpose the item table so TN sits in the lane dimension.
    E_pad = _round_up(E, 64)
    feat_proj = jnp.pad(feat_proj, ((0, 0), (0, E_pad - E))).astype(jnp.bfloat16)

    items_block = _round_up(items_block, 128)
    N_128 = _round_up(n_items, 128)
    TN = min(items_block, N_128)
    if N_128 >= 4 * 128:
        # keep >= 4 item blocks so a v7x megacore can shard the "parallel"
        # grid across both TensorCores (no-op on single-TC v5e/v6e).
        TN = min(TN, max(128, _round_up(-(-N_128 // 4), 128)))
    N_pad = _round_up(n_items, TN)

    item_t = jnp.pad(params["emb"].T,
                     ((0, E_pad - E), (0, N_pad - n_items))).astype(jnp.bfloat16)  # (Ep,Np)

    # Explicit double-buffered VMEM byte budget, capped well below physical
    # VMEM (v7x has only 64 MiB per TensorCore; leave compiler headroom).
    bf16b, f32b = 2, 4
    per_buf = (2 * E_pad * TN * bf16b            # double-buffered item blocks
               + 2 * B_pad * TN * f32b           # double-buffered output blocks
               + 2 * B_pad * E_pad * bf16b)      # resident feat_proj block
    try:
        vmem_cap = int(pltpu.get_tpu_info().vmem_capacity_bytes)
    except Exception:
        vmem_cap = 64 * 2 ** 20                  # assume the smallest (v7x per-TC)
    vmem_ceiling = max(8 * 2 ** 20, min(vmem_cap - 16 * 2 ** 20, 96 * 2 ** 20))
    vmem_limit = int(min(vmem_ceiling, max(4 * 2 ** 20, per_buf + 2 * 2 ** 20)))

    scores = pl.pallas_call(
        narm_scores_kernel,
        out_shape=jax.ShapeDtypeStruct((B_pad, N_pad), jnp.float32),
        grid=(N_pad // TN,),
        in_specs=[pl.BlockSpec((B_pad, E_pad), lambda j: (0, 0)),
                  pl.BlockSpec((E_pad, TN), lambda j: (0, j))],
        out_specs=pl.BlockSpec((B_pad, TN), lambda j: (0, j)),
        compiler_params=pltpu.CompilerParams(
            dimension_semantics=("parallel",),
            vmem_limit_bytes=vmem_limit),
    )(feat_proj, item_t)

    return scores[:B, :n_items]


# ----------------------------------------------------------------------------
# Pure-JAX reference (mirror of the torch forward in eval mode), for checking.
# ----------------------------------------------------------------------------
def narm_reference(params, seq, lengths):
    T, B = seq.shape
    n_items, E = params["emb"].shape
    H = params["a1_T"].shape[0]
    embs = params["emb"][seq]
    step_mask = (jnp.arange(T)[:, None] < lengths[None, :]).astype(jnp.float32)
    seq_mask = (seq > 0).astype(jnp.float32)

    def step(h, inp):
        x_t, m = inp
        gi = x_t @ params["w_ih_T"] + params["b_ih"]
        gh = h @ params["w_hh_T"] + params["b_hh"]
        r = jax.nn.sigmoid(gi[:, :H] + gh[:, :H])
        z = jax.nn.sigmoid(gi[:, H:2 * H] + gh[:, H:2 * H])
        n = jnp.tanh(gi[:, 2 * H:] + r * gh[:, 2 * H:])
        h_new = (1 - z) * n + z * h
        m = m[:, None]
        h_upd = m * h_new + (1 - m) * h
        return h_upd, m * h_upd

    ht, gru = lax.scan(step, jnp.zeros((B, H), jnp.float32), (embs, step_mask))
    q1 = (gru.reshape(T * B, H) @ params["a1_T"]).reshape(T, B, H)
    q2 = ht @ params["a2_T"]
    sig = jax.nn.sigmoid(q1 + seq_mask[:, :, None] * q2[None])
    alpha = jnp.sum(sig * params["vt_row"][None], axis=-1, keepdims=True)
    c_local = jnp.sum(alpha * gru, axis=0)
    trans_rows = _last_item_rows(params["M2"], seq, T, B)
    item_embs = params["emb"]
    trans_emb = trans_rows @ item_embs
    final = jnp.concatenate([c_local, ht, trans_emb], axis=1)
    b_items = item_embs @ params["bwT"]
    return final @ b_items.T


# ----------------------------------------------------------------------------
# Deterministic parameter initialization (synthetic; no checkpoint).
# ----------------------------------------------------------------------------
def init_params(key, n_items, H, E):
    ks = jax.random.split(key, 10)
    s = 0.1
    emb = jax.random.normal(ks[0], (n_items, E), jnp.float32) * s
    emb = emb.at[0].set(0.0)                       # padding_idx=0
    w_ih = jax.random.normal(ks[1], (3 * H, E), jnp.float32) * s
    w_hh = jax.random.normal(ks[2], (3 * H, H), jnp.float32) * s
    b_ih = jax.random.normal(ks[3], (3 * H,), jnp.float32) * s
    b_hh = jax.random.normal(ks[4], (3 * H,), jnp.float32) * s
    a1 = jax.random.normal(ks[5], (H, H), jnp.float32) * s
    a2 = jax.random.normal(ks[6], (H, H), jnp.float32) * s
    vt = jax.random.normal(ks[7], (1, H), jnp.float32) * s
    bw = jax.random.normal(ks[8], (2 * H + 50, E), jnp.float32) * s    # b: Linear(E, 2H+50)
    M2 = jax.random.uniform(ks[9], (n_items, n_items), jnp.float32) * 0.05
    return dict(
        emb=emb, M2=M2,
        w_ih_T=w_ih.T, w_hh_T=w_hh.T,
        b_ih=b_ih.reshape(1, -1), b_hh=b_hh.reshape(1, -1),
        a1_T=a1.T, a2_T=a2.T, vt_row=vt,
        bwT=bw.T,                                   # (E, 2H+50)
    )


if __name__ == "__main__":
    # Small but non-degenerate: n_items=512 gives 4 item blocks (grid exercised).
    n_items, H, E, T, B = 512, 32, 50, 8, 4   # E=50 forced by the model's concat/matmul
    key = jax.random.PRNGKey(0)
    pkey, skey = jax.random.split(key)
    params = init_params(pkey, n_items, H, E)

    lengths = jnp.array([8, 6, 5, 3], dtype=jnp.int32)          # sorted desc, max == T
    seq_vals = jax.random.randint(skey, (T, B), 1, n_items, dtype=jnp.int32)
    seq = jnp.where(jnp.arange(T)[:, None] < lengths[None, :], seq_vals, 0)

    scores = jax.block_until_ready(narm_forward(params, seq, lengths))
    ref = jax.block_until_ready(narm_reference(params, seq, lengths))

    assert scores.shape == (B, n_items)
    assert bool(jnp.all(jnp.isfinite(scores)))
    np.testing.assert_allclose(np.asarray(scores), np.asarray(ref), rtol=2e-2, atol=2e-2)
    # TODO(synk): emb_dropout/ct_dropout are identity (eval mode); pandas M2 column
    # lookup is modeled as a dense (n_items, n_items) transition-matrix row gather.
    print("KERNEL_OK")
</pallas_src>

<mosaic_0001>
module attributes {stable_mosaic.version = 11 : i64} {
  func.func @narm_feat_kernel(%arg0: memref<8x8x50xf32, #tpu.memory_space<vmem>>, %arg1: memref<8x8x1xf32, #tpu.memory_space<vmem>>, %arg2: memref<8x8x1xf32, #tpu.memory_space<vmem>>, %arg3: memref<50x32xf32, #tpu.memory_space<vmem>>, %arg4: memref<50x32xf32, #tpu.memory_space<vmem>>, %arg5: memref<50x32xf32, #tpu.memory_space<vmem>>, %arg6: memref<32x32xf32, #tpu.memory_space<vmem>>, %arg7: memref<32x32xf32, #tpu.memory_space<vmem>>, %arg8: memref<32x32xf32, #tpu.memory_space<vmem>>, %arg9: memref<1x32xf32, #tpu.memory_space<vmem>>, %arg10: memref<1x32xf32, #tpu.memory_space<vmem>>, %arg11: memref<1x32xf32, #tpu.memory_space<vmem>>, %arg12: memref<1x32xf32, #tpu.memory_space<vmem>>, %arg13: memref<32x32xf32, #tpu.memory_space<vmem>>, %arg14: memref<32x32xf32, #tpu.memory_space<vmem>>, %arg15: memref<1x32xf32, #tpu.memory_space<vmem>>, %arg16: memref<8x32xf32, #tpu.memory_space<vmem>>, %arg17: memref<8x32xf32, #tpu.memory_space<vmem>>) attributes {dimension_semantics = [], scalar_prefetch = 0 : i64, scratch_operands = 0 : i64, tpu.core_type = #tpu.core_type<tc>} {
    %c0 = arith.constant 0 : index
    %c0_0 = arith.constant 0 : index
    %c0_1 = arith.constant 0 : index
    %0 = vector.load %arg0[%c0, %c0_0, %c0_1] : memref<8x8x50xf32, #tpu.memory_space<vmem>>, vector<8x8x50xf32>
    %1 = vector.shape_cast %0 : vector<8x8x50xf32> to vector<64x50xf32>
    %c0_2 = arith.constant 0 : index
    %c0_3 = arith.constant 0 : index
    %2 = vector.load %arg3[%c0_2, %c0_3] : memref<50x32xf32, #tpu.memory_space<vmem>>, vector<50x32xf32>
    %cst = arith.constant dense<0.000000e+00> : vector<64x32xf32>
    %3 = tpu.matmul %1, %2, %cst {dimension_numbers = #tpu.dot_dimension_numbers<[1], [0], [0], [1], [0, 0, 1, 1], [], []>} : vector<64x50xf32>, vector<50x32xf32>, vector<64x32xf32> -> vector<64x32xf32>
    %c0_4 = arith.constant 0 : index
    %c0_5 = arith.constant 0 : index
    %4 = vector.load %arg9[%c0_4, %c0_5] : memref<1x32xf32, #tpu.memory_space<vmem>>, vector<1x32xf32>
    %5 = vector.broadcast %4 : vector<1x32xf32> to vector<64x32xf32>
    %6 = arith.addf %3, %5 : vector<64x32xf32>
    %7 = vector.shape_cast %6 : vector<64x32xf32> to vector<8x8x32xf32>
    %c0_6 = arith.constant 0 : index
    %c0_7 = arith.constant 0 : index
    %8 = vector.load %arg4[%c0_6, %c0_7] : memref<50x32xf32, #tpu.memory_space<vmem>>, vector<50x32xf32>
    %cst_8 = arith.constant dense<0.000000e+00> : vector<64x32xf32>
    %9 = tpu.matmul %1, %8, %cst_8 {dimension_numbers = #tpu.dot_dimension_numbers<[1], [0], [0], [1], [0, 0, 1, 1], [], []>} : vector<64x50xf32>, vector<50x32xf32>, vector<64x32xf32> -> vector<64x32xf32>
    %c0_9 = arith.constant 0 : index
    %c0_10 = arith.constant 0 : index
    %10 = vector.load %arg10[%c0_9, %c0_10] : memref<1x32xf32, #tpu.memory_space<vmem>>, vector<1x32xf32>
    %11 = vector.broadcast %10 : vector<1x32xf32> to vector<64x32xf32>
    %12 = arith.addf %9, %11 : vector<64x32xf32>
    %13 = vector.shape_cast %12 : vector<64x32xf32> to vector<8x8x32xf32>
    %c0_11 = arith.constant 0 : index
    %c0_12 = arith.constant 0 : index
    %14 = vector.load %arg5[%c0_11, %c0_12] : memref<50x32xf32, #tpu.memory_space<vmem>>, vector<50x32xf32>
    %cst_13 = arith.constant dense<0.000000e+00> : vector<64x32xf32>
    %15 = tpu.matmul %1, %14, %cst_13 {dimension_numbers = #tpu.dot_dimension_numbers<[1], [0], [0], [1], [0, 0, 1, 1], [], []>} : vector<64x50xf32>, vector<50x32xf32>, vector<64x32xf32> -> vector<64x32xf32>
    %c0_14 = arith.constant 0 : index
    %c0_15 = arith.constant 0 : index
    %16 = vector.load %arg11[%c0_14, %c0_15] : memref<1x32xf32, #tpu.memory_space<vmem>>, vector<1x32xf32>
    %17 = vector.broadcast %16 : vector<1x32xf32> to vector<64x32xf32>
    %18 = arith.addf %15, %17 : vector<64x32xf32>
    %19 = vector.shape_cast %18 : vector<64x32xf32> to vector<8x8x32xf32>
    %c0_16 = arith.constant 0 : index
    %c0_17 = arith.constant 0 : index
    %20 = vector.load %arg6[%c0_16, %c0_17] : memref<32x32xf32, #tpu.memory_space<vmem>>, vector<32x32xf32>
    %c0_18 = arith.constant 0 : index
    %c0_19 = arith.constant 0 : index
    %21 = vector.load %arg7[%c0_18, %c0_19] : memref<32x32xf32, #tpu.memory_space<vmem>>, vector<32x32xf32>
    %c0_20 = arith.constant 0 : index
    %c0_21 = arith.constant 0 : index
    %22 = vector.load %arg8[%c0_20, %c0_21] : memref<32x32xf32, #tpu.memory_space<vmem>>, vector<32x32xf32>
    %c0_22 = arith.constant 0 : index
    %c0_23 = arith.constant 0 : index
    %23 = vector.load %arg12[%c0_22, %c0_23] : memref<1x32xf32, #tpu.memory_space<vmem>>, vector<1x32xf32>
    %c0_24 = arith.constant 0 : index
    %c0_25 = arith.constant 0 : index
    %c0_26 = arith.constant 0 : index
    %24 = vector.load %arg1[%c0_24, %c0_25, %c0_26] : memref<8x8x1xf32, #tpu.memory_space<vmem>>, vector<8x8x1xf32>
    %cst_27 = arith.constant 0.000000e+00 : f32
    %25 = vector.broadcast %cst_27 : f32 to vector<8x32xf32>
    %cst_28 = arith.constant dense<0.000000e+00> : vector<8x32xf32>
    %26 = tpu.matmul %25, %20, %cst_28 {dimension_numbers = #tpu.dot_dimension_numbers<[1], [0], [0], [1], [0, 0, 1, 1], [], []>} : vector<8x32xf32>, vector<32x32xf32>, vector<8x32xf32> -> vector<8x32xf32>
    %cst_29 = arith.constant dense<0.000000e+00> : vector<8x32xf32>
    %27 = tpu.matmul %25, %21, %cst_29 {dimension_numbers = #tpu.dot_dimension_numbers<[1], [0], [0], [1], [0, 0, 1, 1], [], []>} : vector<8x32xf32>, vector<32x32xf32>, vector<8x32xf32> -> vector<8x32xf32>
    %cst_30 = arith.constant dense<0.000000e+00> : vector<8x32xf32>
    %28 = tpu.matmul %25, %22, %cst_30 {dimension_numbers = #tpu.dot_dimension_numbers<[1], [0], [0], [1], [0, 0, 1, 1], [], []>} : vector<8x32xf32>, vector<32x32xf32>, vector<8x32xf32> -> vector<8x32xf32>
    %29 = vector.extract_strided_slice %7 {offsets = [0, 0, 0], sizes = [1, 8, 32], strides = [1, 1, 1]} : vector<8x8x32xf32> to vector<1x8x32xf32>
    %30 = vector.shape_cast %29 : vector<1x8x32xf32> to vector<8x32xf32>
    %31 = arith.addf %30, %26 : vector<8x32xf32>
    %32 = arith.negf %31 : vector<8x32xf32>
    %33 = math.exp %32 : vector<8x32xf32>
    %cst_31 = arith.constant 1.000000e+00 : f32
    %34 = vector.broadcast %cst_31 : f32 to vector<8x32xf32>
    %35 = arith.addf %34, %33 : vector<8x32xf32>
    %36 = arith.divf %34, %35 : vector<8x32xf32>
    %37 = vector.extract_strided_slice %13 {offsets = [0, 0, 0], sizes = [1, 8, 32], strides = [1, 1, 1]} : vector<8x8x32xf32> to vector<1x8x32xf32>
    %38 = vector.shape_cast %37 : vector<1x8x32xf32> to vector<8x32xf32>
    %39 = arith.addf %38, %27 : vector<8x32xf32>
    %40 = arith.negf %39 : vector<8x32xf32>
    %41 = math.exp %40 : vector<8x32xf32>
    %cst_32 = arith.constant 1.000000e+00 : f32
    %42 = vector.broadcast %cst_32 : f32 to vector<8x32xf32>
    %43 = arith.addf %42, %41 : vector<8x32xf32>
    %44 = arith.divf %42, %43 : vector<8x32xf32>
    %45 = vector.extract_strided_slice %19 {offsets = [0, 0, 0], sizes = [1, 8, 32], strides = [1, 1, 1]} : vector<8x8x32xf32> to vector<1x8x32xf32>
    %46 = vector.shape_cast %45 : vector<1x8x32xf32> to vector<8x32xf32>
    %47 = vector.broadcast %23 : vector<1x32xf32> to vector<8x32xf32>
    %48 = arith.addf %28, %47 : vector<8x32xf32>
    %49 = arith.mulf %36, %48 : vector<8x32xf32>
    %50 = arith.addf %46, %49 : vector<8x32xf32>
    %51 = math.tanh %50 : vector<8x32xf32>
    %cst_33 = arith.constant 1.000000e+00 : f32
    %52 = vector.broadcast %cst_33 : f32 to vector<8x32xf32>
    %53 = arith.subf %52, %44 : vector<8x32xf32>
    %54 = arith.mulf %53, %51 : vector<8x32xf32>
    %55 = arith.mulf %44, %25 : vector<8x32xf32>
    %56 = arith.addf %54, %55 : vector<8x32xf32>
    %57 = vector.extract_strided_slice %24 {offsets = [0, 0, 0], sizes = [1, 8, 1], strides = [1, 1, 1]} : vector<8x8x1xf32> to vector<1x8x1xf32>
    %58 = vector.shape_cast %57 : vector<1x8x1xf32> to vector<8x1xf32>
    %cst_34 = arith.constant 0.000000e+00 : f32
    %59 = vector.broadcast %cst_34 : f32 to vector<8x1xf32>
    %60 = arith.cmpf ogt, %58, %59 : vector<8x1xf32>
    %61 = vector.shape_cast %60 : vector<8x1xi1> to vector<8x1xi1>
    %62 = vector.broadcast %61 : vector<8x1xi1> to vector<8x32xi1>
    %63 = arith.select %62, %56, %25 : vector<8x32xi1>, vector<8x32xf32>
    %cst_35 = arith.constant 0.000000e+00 : f32
    %64 = vector.shape_cast %60 : vector<8x1xi1> to vector<8x1xi1>
    %65 = vector.broadcast %64 : vector<8x1xi1> to vector<8x32xi1>
    %66 = vector.broadcast %cst_35 : f32 to vector<8x32xf32>
    %67 = arith.select %65, %63, %66 : vector<8x32xi1>, vector<8x32xf32>
    %cst_36 = arith.constant dense<0.000000e+00> : vector<8x32xf32>
    %68 = tpu.matmul %63, %20, %cst_36 {dimension_numbers = #tpu.dot_dimension_numbers<[1], [0], [0], [1], [0, 0, 1, 1], [], []>} : vector<8x32xf32>, vector<32x32xf32>, vector<8x32xf32> -> vector<8x32xf32>
    %cst_37 = arith.constant dense<0.000000e+00> : vector<8x32xf32>
    %69 = tpu.matmul %63, %21, %cst_37 {dimension_numbers = #tpu.dot_dimension_numbers<[1], [0], [0], [1], [0, 0, 1, 1], [], []>} : vector<8x32xf32>, vector<32x32xf32>, vector<8x32xf32> -> vector<8x32xf32>
    %cst_38 = arith.constant dense<0.000000e+00> : vector<8x32xf32>
    %70 = tpu.matmul %63, %22, %cst_38 {dimension_numbers = #tpu.dot_dimension_numbers<[1], [0], [0], [1], [0, 0, 1, 1], [], []>} : vector<8x32xf32>, vector<32x32xf32>, vector<8x32xf32> -> vector<8x32xf32>
    %71 = vector.extract_strided_slice %7 {offsets = [1, 0, 0], sizes = [1, 8, 32], strides = [1, 1, 1]} : vector<8x8x32xf32> to vector<1x8x32xf32>
    %72 = vector.shape_cast %71 : vector<1x8x32xf32> to vector<8x32xf32>
    %73 = arith.addf %72, %68 : vector<8x32xf32>
    %74 = arith.negf %73 : vector<8x32xf32>
    %75 = math.exp %74 : vector<8x32xf32>
    %cst_39 = arith.constant 1.000000e+00 : f32
    %76 = vector.broadcast %cst_39 : f32 to vector<8x32xf32>
    %77 = arith.addf %76, %75 : vector<8x32xf32>
    %78 = arith.divf %76, %77 : vector<8x32xf32>
    %79 = vector.extract_strided_slice %13 {offsets = [1, 0, 0], sizes = [1, 8, 32], strides = [1, 1, 1]} : vector<8x8x32xf32> to vector<1x8x32xf32>
    %80 = vector.shape_cast %79 : vector<1x8x32xf32> to vector<8x32xf32>
    %81 = arith.addf %80, %69 : vector<8x32xf32>
    %82 = arith.negf %81 : vector<8x32xf32>
    %83 = math.exp %82 : vector<8x32xf32>
    %cst_40 = arith.constant 1.000000e+00 : f32
    %84 = vector.broadcast %cst_40 : f32 to vector<8x32xf32>
    %85 = arith.addf %84, %83 : vector<8x32xf32>
    %86 = arith.divf %84, %85 : vector<8x32xf32>
    %87 = vector.extract_strided_slice %19 {offsets = [1, 0, 0], sizes = [1, 8, 32], strides = [1, 1, 1]} : vector<8x8x32xf32> to vector<1x8x32xf32>
    %88 = vector.shape_cast %87 : vector<1x8x32xf32> to vector<8x32xf32>
    %89 = vector.broadcast %23 : vector<1x32xf32> to vector<8x32xf32>
    %90 = arith.addf %70, %89 : vector<8x32xf32>
    %91 = arith.mulf %78, %90 : vector<8x32xf32>
    %92 = arith.addf %88, %91 : vector<8x32xf32>
    %93 = math.tanh %92 : vector<8x32xf32>
    %cst_41 = arith.constant 1.000000e+00 : f32
    %94 = vector.broadcast %cst_41 : f32 to vector<8x32xf32>
    %95 = arith.subf %94, %86 : vector<8x32xf32>
    %96 = arith.mulf %95, %93 : vector<8x32xf32>
    %97 = arith.mulf %86, %63 : vector<8x32xf32>
    %98 = arith.addf %96, %97 : vector<8x32xf32>
    %99 = vector.extract_strided_slice %24 {offsets = [1, 0, 0], sizes = [1, 8, 1], strides = [1, 1, 1]} : vector<8x8x1xf32> to vector<1x8x1xf32>
    %100 = vector.shape_cast %99 : vector<1x8x1xf32> to vector<8x1xf32>
    %cst_42 = arith.constant 0.000000e+00 : f32
    %101 = vector.broadcast %cst_42 : f32 to vector<8x1xf32>
    %102 = arith.cmpf ogt, %100, %101 : vector<8x1xf32>
    %103 = vector.shape_cast %102 : vector<8x1xi1> to vector<8x1xi1>
    %104 = vector.broadcast %103 : vector<8x1xi1> to vector<8x32xi1>
    %105 = arith.select %104, %98, %63 : vector<8x32xi1>, vector<8x32xf32>
    %cst_43 = arith.constant 0.000000e+00 : f32
    %106 = vector.shape_cast %102 : vector<8x1xi1> to vector<8x1xi1>
    %107 = vector.broadcast %106 : vector<8x1xi1> to vector<8x32xi1>
    %108 = vector.broadcast %cst_43 : f32 to vector<8x32xf32>
    %109 = arith.select %107, %105, %108 : vector<8x32xi1>, vector<8x32xf32>
    %cst_44 = arith.constant dense<0.000000e+00> : vector<8x32xf32>
    %110 = tpu.matmul %105, %20, %cst_44 {dimension_numbers = #tpu.dot_dimension_numbers<[1], [0], [0], [1], [0, 0, 1, 1], [], []>} : vector<8x32xf32>, vector<32x32xf32>, vector<8x32xf32> -> vector<8x32xf32>
    %cst_45 = arith.constant dense<0.000000e+00> : vector<8x32xf32>
    %111 = tpu.matmul %105, %21, %cst_45 {dimension_numbers = #tpu.dot_dimension_numbers<[1], [0], [0], [1], [0, 0, 1, 1], [], []>} : vector<8x32xf32>, vector<32x32xf32>, vector<8x32xf32> -> vector<8x32xf32>
    %cst_46 = arith.constant dense<0.000000e+00> : vector<8x32xf32>
    %112 = tpu.matmul %105, %22, %cst_46 {dimension_numbers = #tpu.dot_dimension_numbers<[1], [0], [0], [1], [0, 0, 1, 1], [], []>} : vector<8x32xf32>, vector<32x32xf32>, vector<8x32xf32> -> vector<8x32xf32>
    %113 = vector.extract_strided_slice %7 {offsets = [2, 0, 0], sizes = [1, 8, 32], strides = [1, 1, 1]} : vector<8x8x32xf32> to vector<1x8x32xf32>
    %114 = vector.shape_cast %113 : vector<1x8x32xf32> to vector<8x32xf32>
    %115 = arith.addf %114, %110 : vector<8x32xf32>
    %116 = arith.negf %115 : vector<8x32xf32>
    %117 = math.exp %116 : vector<8x32xf32>
    %cst_47 = arith.constant 1.000000e+00 : f32
    %118 = vector.broadcast %cst_47 : f32 to vector<8x32xf32>
    %119 = arith.addf %118, %117 : vector<8x32xf32>
    %120 = arith.divf %118, %119 : vector<8x32xf32>
    %121 = vector.extract_strided_slice %13 {offsets = [2, 0, 0], sizes = [1, 8, 32], strides = [1, 1, 1]} : vector<8x8x32xf32> to vector<1x8x32xf32>
    %122 = vector.shape_cast %121 : vector<1x8x32xf32> to vector<8x32xf32>
    %123 = arith.addf %122, %111 : vector<8x32xf32>
    %124 = arith.negf %123 : vector<8x32xf32>
    %125 = math.exp %124 : vector<8x32xf32>
    %cst_48 = arith.constant 1.000000e+00 : f32
    %126 = vector.broadcast %cst_48 : f32 to vector<8x32xf32>
    %127 = arith.addf %126, %125 : vector<8x32xf32>
    %128 = arith.divf %126, %127 : vector<8x32xf32>
    %129 = vector.extract_strided_slice %19 {offsets = [2, 0, 0], sizes = [1, 8, 32], strides = [1, 1, 1]} : vector<8x8x32xf32> to vector<1x8x32xf32>
    %130 = vector.shape_cast %129 : vector<1x8x32xf32> to vector<8x32xf32>
    %131 = vector.broadcast %23 : vector<1x32xf32> to vector<8x32xf32>
    %132 = arith.addf %112, %131 : vector<8x32xf32>
    %133 = arith.mulf %120, %132 : vector<8x32xf32>
    %134 = arith.addf %130, %133 : vector<8x32xf32>
    %135 = math.tanh %134 : vector<8x32xf32>
    %cst_49 = arith.constant 1.000000e+00 : f32
    %136 = vector.broadcast %cst_49 : f32 to vector<8x32xf32>
    %137 = arith.subf %136, %128 : vector<8x32xf32>
    %138 = arith.mulf %137, %135 : vector<8x32xf32>
    %139 = arith.mulf %128, %105 : vector<8x32xf32>
    %140 = arith.addf %138, %139 : vector<8x32xf32>
    %141 = vector.extract_strided_slice %24 {offsets = [2, 0, 0], sizes = [1, 8, 1], strides = [1, 1, 1]} : vector<8x8x1xf32> to vector<1x8x1xf32>
    %142 = vector.shape_cast %141 : vector<1x8x1xf32> to vector<8x1xf32>
    %cst_50 = arith.constant 0.000000e+00 : f32
    %143 = vector.broadcast %cst_50 : f32 to vector<8x1xf32>
    %144 = arith.cmpf ogt, %142, %143 : vector<8x1xf32>
    %145 = vector.shape_cast %144 : vector<8x1xi1> to vector<8x1xi1>
    %146 = vector.broadcast %145 : vector<8x1xi1> to vector<8x32xi1>
    %147 = arith.select %146, %140, %105 : vector<8x32xi1>, vector<8x32xf32>
    %cst_51 = arith.constant 0.000000e+00 : f32
    %148 = vector.shape_cast %144 : vector<8x1xi1> to vector<8x1xi1>
    %149 = vector.broadcast %148 : vector<8x1xi1> to vector<8x32xi1>
    %150 = vector.broadcast %cst_51 : f32 to vector<8x32xf32>
    %151 = arith.select %149, %147, %150 : vector<8x32xi1>, vector<8x32xf32>
    %cst_52 = arith.constant dense<0.000000e+00> : vector<8x32xf32>
    %152 = tpu.matmul %147, %20, %cst_52 {dimension_numbers = #tpu.dot_dimension_numbers<[1], [0], [0], [1], [0, 0, 1, 1], [], []>} : vector<8x32xf32>, vector<32x32xf32>, vector<8x32xf32> -> vector<8x32xf32>
    %cst_53 = arith.constant dense<0.000000e+00> : vector<8x32xf32>
    %153 = tpu.matmul %147, %21, %cst_53 {dimension_numbers = #tpu.dot_dimension_numbers<[1], [0], [0], [1], [0, 0, 1, 1], [], []>} : vector<8x32xf32>, vector<32x32xf32>, vector<8x32xf32> -> vector<8x32xf32>
    %cst_54 = arith.constant dense<0.000000e+00> : vector<8x32xf32>
    %154 = tpu.matmul %147, %22, %cst_54 {dimension_numbers = #tpu.dot_dimension_numbers<[1], [0], [0], [1], [0, 0, 1, 1], [], []>} : vector<8x32xf32>, vector<32x32xf32>, vector<8x32xf32> -> vector<8x32xf32>
    %155 = vector.extract_strided_slice %7 {offsets = [3, 0, 0], sizes = [1, 8, 32], strides = [1, 1, 1]} : vector<8x8x32xf32> to vector<1x8x32xf32>
    %156 = vector.shape_cast %155 : vector<1x8x32xf32> to vector<8x32xf32>
    %157 = arith.addf %156, %152 : vector<8x32xf32>
    %158 = arith.negf %157 : vector<8x32xf32>
    %159 = math.exp %158 : vector<8x32xf32>
    %cst_55 = arith.constant 1.000000e+00 : f32
    %160 = vector.broadcast %cst_55 : f32 to vector<8x32xf32>
    %161 = arith.addf %160, %159 : vector<8x32xf32>
    %162 = arith.divf %160, %161 : vector<8x32xf32>
    %163 = vector.extract_strided_slice %13 {offsets = [3, 0, 0], sizes = [1, 8, 32], strides = [1, 1, 1]} : vector<8x8x32xf32> to vector<1x8x32xf32>
    %164 = vector.shape_cast %163 : vector<1x8x32xf32> to vector<8x32xf32>
    %165 = arith.addf %164, %153 : vector<8x32xf32>
    %166 = arith.negf %165 : vector<8x32xf32>
    %167 = math.exp %166 : vector<8x32xf32>
    %cst_56 = arith.constant 1.000000e+00 : f32
    %168 = vector.broadcast %cst_56 : f32 to vector<8x32xf32>
    %169 = arith.addf %168, %167 : vector<8x32xf32>
    %170 = arith.divf %168, %169 : vector<8x32xf32>
    %171 = vector.extract_strided_slice %19 {offsets = [3, 0, 0], sizes = [1, 8, 32], strides = [1, 1, 1]} : vector<8x8x32xf32> to vector<1x8x32xf32>
    %172 = vector.shape_cast %171 : vector<1x8x32xf32> to vector<8x32xf32>
    %173 = vector.broadcast %23 : vector<1x32xf32> to vector<8x32xf32>
    %174 = arith.addf %154, %173 : vector<8x32xf32>
    %175 = arith.mulf %162, %174 : vector<8x32xf32>
    %176 = arith.addf %172, %175 : vector<8x32xf32>
    %177 = math.tanh %176 : vector<8x32xf32>
    %cst_57 = arith.constant 1.000000e+00 : f32
    %178 = vector.broadcast %cst_57 : f32 to vector<8x32xf32>
    %179 = arith.subf %178, %170 : vector<8x32xf32>
    %180 = arith.mulf %179, %177 : vector<8x32xf32>
    %181 = arith.mulf %170, %147 : vector<8x32xf32>
    %182 = arith.addf %180, %181 : vector<8x32xf32>
    %183 = vector.extract_strided_slice %24 {offsets = [3, 0, 0], sizes = [1, 8, 1], strides = [1, 1, 1]} : vector<8x8x1xf32> to vector<1x8x1xf32>
    %184 = vector.shape_cast %183 : vector<1x8x1xf32> to vector<8x1xf32>
    %cst_58 = arith.constant 0.000000e+00 : f32
    %185 = vector.broadcast %cst_58 : f32 to vector<8x1xf32>
    %186 = arith.cmpf ogt, %184, %185 : vector<8x1xf32>
    %187 = vector.shape_cast %186 : vector<8x1xi1> to vector<8x1xi1>
    %188 = vector.broadcast %187 : vector<8x1xi1> to vector<8x32xi1>
    %189 = arith.select %188, %182, %147 : vector<8x32xi1>, vector<8x32xf32>
    %cst_59 = arith.constant 0.000000e+00 : f32
    %190 = vector.shape_cast %186 : vector<8x1xi1> to vector<8x1xi1>
    %191 = vector.broadcast %190 : vector<8x1xi1> to vector<8x32xi1>
    %192 = vector.broadcast %cst_59 : f32 to vector<8x32xf32>
    %193 = arith.select %191, %189, %192 : vector<8x32xi1>, vector<8x32xf32>
    %cst_60 = arith.constant dense<0.000000e+00> : vector<8x32xf32>
    %194 = tpu.matmul %189, %20, %cst_60 {dimension_numbers = #tpu.dot_dimension_numbers<[1], [0], [0], [1], [0, 0, 1, 1], [], []>} : vector<8x32xf32>, vector<32x32xf32>, vector<8x32xf32> -> vector<8x32xf32>
    %cst_61 = arith.constant dense<0.000000e+00> : vector<8x32xf32>
    %195 = tpu.matmul %189, %21, %cst_61 {dimension_numbers = #tpu.dot_dimension_numbers<[1], [0], [0], [1], [0, 0, 1, 1], [], []>} : vector<8x32xf32>, vector<32x32xf32>, vector<8x32xf32> -> vector<8x32xf32>
    %cst_62 = arith.constant dense<0.000000e+00> : vector<8x32xf32>
    %196 = tpu.matmul %189, %22, %cst_62 {dimension_numbers = #tpu.dot_dimension_numbers<[1], [0], [0], [1], [0, 0, 1, 1], [], []>} : vector<8x32xf32>, vector<32x32xf32>, vector<8x32xf32> -> vector<8x32xf32>
    %197 = vector.extract_strided_slice %7 {offsets = [4, 0, 0], sizes = [1, 8, 32], strides = [1, 1, 1]} : vector<8x8x32xf32> to vector<1x8x32xf32>
    %198 = vector.shape_cast %197 : vector<1x8x32xf32> to vector<8x32xf32>
    %199 = arith.addf %198, %194 : vector<8x32xf32>
    %200 = arith.negf %199 : vector<8x32xf32>
    %201 = math.exp %200 : vector<8x32xf32>
    %cst_63 = arith.constant 1.000000e+00 : f32
    %202 = vector.broadcast %cst_63 : f32 to vector<8x32xf32>
    %203 = arith.addf %202, %201 : vector<8x32xf32>
    %204 = arith.divf %202, %203 : vector<8x32xf32>
    %205 = vector.extract_strided_slice %13 {offsets = [4, 0, 0], sizes = [1, 8, 32], strides = [1, 1, 1]} : vector<8x8x32xf32> to vector<1x8x32xf32>
    %206 = vector.shape_cast %205 : vector<1x8x32xf32> to vector<8x32xf32>
    %207 = arith.addf %206, %195 : vector<8x32xf32>
    %208 = arith.negf %207 : vector<8x32xf32>
    %209 = math.exp %208 : vector<8x32xf32>
    %cst_64 = arith.constant 1.000000e+00 : f32
    %210 = vector.broadcast %cst_64 : f32 to vector<8x32xf32>
    %211 = arith.addf %210, %209 : vector<8x32xf32>
    %212 = arith.divf %210, %211 : vector<8x32xf32>
    %213 = vector.extract_strided_slice %19 {offsets = [4, 0, 0], sizes = [1, 8, 32], strides = [1, 1, 1]} : vector<8x8x32xf32> to vector<1x8x32xf32>
    %214 = vector.shape_cast %213 : vector<1x8x32xf32> to vector<8x32xf32>
    %215 = vector.broadcast %23 : vector<1x32xf32> to vector<8x32xf32>
    %216 = arith.addf %196, %215 : vector<8x32xf32>
    %217 = arith.mulf %204, %216 : vector<8x32xf32>
    %218 = arith.addf %214, %217 : vector<8x32xf32>
    %219 = math.tanh %218 : vector<8x32xf32>
    %cst_65 = arith.constant 1.000000e+00 : f32
    %220 = vector.broadcast %cst_65 : f32 to vector<8x32xf32>
    %221 = arith.subf %220, %212 : vector<8x32xf32>
    %222 = arith.mulf %221, %219 : vector<8x32xf32>
    %223 = arith.mulf %212, %189 : vector<8x32xf32>
    %224 = arith.addf %222, %223 : vector<8x32xf32>
    %225 = vector.extract_strided_slice %24 {offsets = [4, 0, 0], sizes = [1, 8, 1], strides = [1, 1, 1]} : vector<8x8x1xf32> to vector<1x8x1xf32>
    %226 = vector.shape_cast %225 : vector<1x8x1xf32> to vector<8x1xf32>
    %cst_66 = arith.constant 0.000000e+00 : f32
    %227 = vector.broadcast %cst_66 : f32 to vector<8x1xf32>
    %228 = arith.cmpf ogt, %226, %227 : vector<8x1xf32>
    %229 = vector.shape_cast %228 : vector<8x1xi1> to vector<8x1xi1>
    %230 = vector.broadcast %229 : vector<8x1xi1> to vector<8x32xi1>
    %231 = arith.select %230, %224, %189 : vector<8x32xi1>, vector<8x32xf32>
    %cst_67 = arith.constant 0.000000e+00 : f32
    %232 = vector.shape_cast %228 : vector<8x1xi1> to vector<8x1xi1>
    %233 = vector.broadcast %232 : vector<8x1xi1> to vector<8x32xi1>
    %234 = vector.broadcast %cst_67 : f32 to vector<8x32xf32>
    %235 = arith.select %233, %231, %234 : vector<8x32xi1>, vector<8x32xf32>
    %cst_68 = arith.constant dense<0.000000e+00> : vector<8x32xf32>
    %236 = tpu.matmul %231, %20, %cst_68 {dimension_numbers = #tpu.dot_dimension_numbers<[1], [0], [0], [1], [0, 0, 1, 1], [], []>} : vector<8x32xf32>, vector<32x32xf32>, vector<8x32xf32> -> vector<8x32xf32>
    %cst_69 = arith.constant dense<0.000000e+00> : vector<8x32xf32>
    %237 = tpu.matmul %231, %21, %cst_69 {dimension_numbers = #tpu.dot_dimension_numbers<[1], [0], [0], [1], [0, 0, 1, 1], [], []>} : vector<8x32xf32>, vector<32x32xf32>, vector<8x32xf32> -> vector<8x32xf32>
    %cst_70 = arith.constant dense<0.000000e+00> : vector<8x32xf32>
    %238 = tpu.matmul %231, %22, %cst_70 {dimension_numbers = #tpu.dot_dimension_numbers<[1], [0], [0], [1], [0, 0, 1, 1], [], []>} : vector<8x32xf32>, vector<32x32xf32>, vector<8x32xf32> -> vector<8x32xf32>
    %239 = vector.extract_strided_slice %7 {offsets = [5, 0, 0], sizes = [1, 8, 32], strides = [1, 1, 1]} : vector<8x8x32xf32> to vector<1x8x32xf32>
    %240 = vector.shape_cast %239 : vector<1x8x32xf32> to vector<8x32xf32>
    %241 = arith.addf %240, %236 : vector<8x32xf32>
    %242 = arith.negf %241 : vector<8x32xf32>
    %243 = math.exp %242 : vector<8x32xf32>
    %cst_71 = arith.constant 1.000000e+00 : f32
    %244 = vector.broadcast %cst_71 : f32 to vector<8x32xf32>
    %245 = arith.addf %244, %243 : vector<8x32xf32>
    %246 = arith.divf %244, %245 : vector<8x32xf32>
    %247 = vector.extract_strided_slice %13 {offsets = [5, 0, 0], sizes = [1, 8, 32], strides = [1, 1, 1]} : vector<8x8x32xf32> to vector<1x8x32xf32>
    %248 = vector.shape_cast %247 : vector<1x8x32xf32> to vector<8x32xf32>
    %249 = arith.addf %248, %237 : vector<8x32xf32>
    %250 = arith.negf %249 : vector<8x32xf32>
    %251 = math.exp %250 : vector<8x32xf32>
    %cst_72 = arith.constant 1.000000e+00 : f32
    %252 = vector.broadcast %cst_72 : f32 to vector<8x32xf32>
    %253 = arith.addf %252, %251 : vector<8x32xf32>
    %254 = arith.divf %252, %253 : vector<8x32xf32>
    %255 = vector.extract_strided_slice %19 {offsets = [5, 0, 0], sizes = [1, 8, 32], strides = [1, 1, 1]} : vector<8x8x32xf32> to vector<1x8x32xf32>
    %256 = vector.shape_cast %255 : vector<1x8x32xf32> to vector<8x32xf32>
    %257 = vector.broadcast %23 : vector<1x32xf32> to vector<8x32xf32>
    %258 = arith.addf %238, %257 : vector<8x32xf32>
    %259 = arith.mulf %246, %258 : vector<8x32xf32>
    %260 = arith.addf %256, %259 : vector<8x32xf32>
    %261 = math.tanh %260 : vector<8x32xf32>
    %cst_73 = arith.constant 1.000000e+00 : f32
    %262 = vector.broadcast %cst_73 : f32 to vector<8x32xf32>
    %263 = arith.subf %262, %254 : vector<8x32xf32>
    %264 = arith.mulf %263, %261 : vector<8x32xf32>
    %265 = arith.mulf %254, %231 : vector<8x32xf32>
    %266 = arith.addf %264, %265 : vector<8x32xf32>
    %267 = vector.extract_strided_slice %24 {offsets = [5, 0, 0], sizes = [1, 8, 1], strides = [1, 1, 1]} : vector<8x8x1xf32> to vector<1x8x1xf32>
    %268 = vector.shape_cast %267 : vector<1x8x1xf32> to vector<8x1xf32>
    %cst_74 = arith.constant 0.000000e+00 : f32
    %269 = vector.broadcast %cst_74 : f32 to vector<8x1xf32>
    %270 = arith.cmpf ogt, %268, %269 : vector<8x1xf32>
    %271 = vector.shape_cast %270 : vector<8x1xi1> to vector<8x1xi1>
    %272 = vector.broadcast %271 : vector<8x1xi1> to vector<8x32xi1>
    %273 = arith.select %272, %266, %231 : vector<8x32xi1>, vector<8x32xf32>
    %cst_75 = arith.constant 0.000000e+00 : f32
    %274 = vector.shape_cast %270 : vector<8x1xi1> to vector<8x1xi1>
    %275 = vector.broadcast %274 : vector<8x1xi1> to vector<8x32xi1>
    %276 = vector.broadcast %cst_75 : f32 to vector<8x32xf32>
    %277 = arith.select %275, %273, %276 : vector<8x32xi1>, vector<8x32xf32>
    %cst_76 = arith.constant dense<0.000000e+00> : vector<8x32xf32>
    %278 = tpu.matmul %273, %20, %cst_76 {dimension_numbers = #tpu.dot_dimension_numbers<[1], [0], [0], [1], [0, 0, 1, 1], [], []>} : vector<8x32xf32>, vector<32x32xf32>, vector<8x32xf32> -> vector<8x32xf32>
    %cst_77 = arith.constant dense<0.000000e+00> : vector<8x32xf32>
    %279 = tpu.matmul %273, %21, %cst_77 {dimension_numbers = #tpu.dot_dimension_numbers<[1], [0], [0], [1], [0, 0, 1, 1], [], []>} : vector<8x32xf32>, vector<32x32xf32>, vector<8x32xf32> -> vector<8x32xf32>
    %cst_78 = arith.constant dense<0.000000e+00> : vector<8x32xf32>
    %280 = tpu.matmul %273, %22, %cst_78 {dimension_numbers = #tpu.dot_dimension_numbers<[1], [0], [0], [1], [0, 0, 1, 1], [], []>} : vector<8x32xf32>, vector<32x32xf32>, vector<8x32xf32> -> vector<8x32xf32>
    %281 = vector.extract_strided_slice %7 {offsets = [6, 0, 0], sizes = [1, 8, 32], strides = [1, 1, 1]} : vector<8x8x32xf32> to vector<1x8x32xf32>
    %282 = vector.shape_cast %281 : vector<1x8x32xf32> to vector<8x32xf32>
    %283 = arith.addf %282, %278 : vector<8x32xf32>
    %284 = arith.negf %283 : vector<8x32xf32>
    %285 = math.exp %284 : vector<8x32xf32>
    %cst_79 = arith.constant 1.000000e+00 : f32
    %286 = vector.broadcast %cst_79 : f32 to vector<8x32xf32>
    %287 = arith.addf %286, %285 : vector<8x32xf32>
    %288 = arith.divf %286, %287 : vector<8x32xf32>
    %289 = vector.extract_strided_slice %13 {offsets = [6, 0, 0], sizes = [1, 8, 32], strides = [1, 1, 1]} : vector<8x8x32xf32> to vector<1x8x32xf32>
    %290 = vector.shape_cast %289 : vector<1x8x32xf32> to vector<8x32xf32>
    %291 = arith.addf %290, %279 : vector<8x32xf32>
    %292 = arith.negf %291 : vector<8x32xf32>
    %293 = math.exp %292 : vector<8x32xf32>
    %cst_80 = arith.constant 1.000000e+00 : f32
    %294 = vector.broadcast %cst_80 : f32 to vector<8x32xf32>
    %295 = arith.addf %294, %293 : vector<8x32xf32>
    %296 = arith.divf %294, %295 : vector<8x32xf32>
    %297 = vector.extract_strided_slice %19 {offsets = [6, 0, 0], sizes = [1, 8, 32], strides = [1, 1, 1]} : vector<8x8x32xf32> to vector<1x8x32xf32>
    %298 = vector.shape_cast %297 : vector<1x8x32xf32> to vector<8x32xf32>
    %299 = vector.broadcast %23 : vector<1x32xf32> to vector<8x32xf32>
    %300 = arith.addf %280, %299 : vector<8x32xf32>
    %301 = arith.mulf %288, %300 : vector<8x32xf32>
    %302 = arith.addf %298, %301 : vector<8x32xf32>
    %303 = math.tanh %302 : vector<8x32xf32>
    %cst_81 = arith.constant 1.000000e+00 : f32
    %304 = vector.broadcast %cst_81 : f32 to vector<8x32xf32>
    %305 = arith.subf %304, %296 : vector<8x32xf32>
    %306 = arith.mulf %305, %303 : vector<8x32xf32>
    %307 = arith.mulf %296, %273 : vector<8x32xf32>
    %308 = arith.addf %306, %307 : vector<8x32xf32>
    %309 = vector.extract_strided_slice %24 {offsets = [6, 0, 0], sizes = [1, 8, 1], strides = [1, 1, 1]} : vector<8x8x1xf32> to vector<1x8x1xf32>
    %310 = vector.shape_cast %309 : vector<1x8x1xf32> to vector<8x1xf32>
    %cst_82 = arith.constant 0.000000e+00 : f32
    %311 = vector.broadcast %cst_82 : f32 to vector<8x1xf32>
    %312 = arith.cmpf ogt, %310, %311 : vector<8x1xf32>
    %313 = vector.shape_cast %312 : vector<8x1xi1> to vector<8x1xi1>
    %314 = vector.broadcast %313 : vector<8x1xi1> to vector<8x32xi1>
    %315 = arith.select %314, %308, %273 : vector<8x32xi1>, vector<8x32xf32>
    %cst_83 = arith.constant 0.000000e+00 : f32
    %316 = vector.shape_cast %312 : vector<8x1xi1> to vector<8x1xi1>
    %317 = vector.broadcast %316 : vector<8x1xi1> to vector<8x32xi1>
    %318 = vector.broadcast %cst_83 : f32 to vector<8x32xf32>
    %319 = arith.select %317, %315, %318 : vector<8x32xi1>, vector<8x32xf32>
    %cst_84 = arith.constant dense<0.000000e+00> : vector<8x32xf32>
    %320 = tpu.matmul %315, %20, %cst_84 {dimension_numbers = #tpu.dot_dimension_numbers<[1], [0], [0], [1], [0, 0, 1, 1], [], []>} : vector<8x32xf32>, vector<32x32xf32>, vector<8x32xf32> -> vector<8x32xf32>
    %cst_85 = arith.constant dense<0.000000e+00> : vector<8x32xf32>
    %321 = tpu.matmul %315, %21, %cst_85 {dimension_numbers = #tpu.dot_dimension_numbers<[1], [0], [0], [1], [0, 0, 1, 1], [], []>} : vector<8x32xf32>, vector<32x32xf32>, vector<8x32xf32> -> vector<8x32xf32>
    %cst_86 = arith.constant dense<0.000000e+00> : vector<8x32xf32>
    %322 = tpu.matmul %315, %22, %cst_86 {dimension_numbers = #tpu.dot_dimension_numbers<[1], [0], [0], [1], [0, 0, 1, 1], [], []>} : vector<8x32xf32>, vector<32x32xf32>, vector<8x32xf32> -> vector<8x32xf32>
    %323 = vector.extract_strided_slice %7 {offsets = [7, 0, 0], sizes = [1, 8, 32], strides = [1, 1, 1]} : vector<8x8x32xf32> to vector<1x8x32xf32>
    %324 = vector.shape_cast %323 : vector<1x8x32xf32> to vector<8x32xf32>
    %325 = arith.addf %324, %320 : vector<8x32xf32>
    %326 = arith.negf %325 : vector<8x32xf32>
    %327 = math.exp %326 : vector<8x32xf32>
    %cst_87 = arith.constant 1.000000e+00 : f32
    %328 = vector.broadcast %cst_87 : f32 to vector<8x32xf32>
    %329 = arith.addf %328, %327 : vector<8x32xf32>
    %330 = arith.divf %328, %329 : vector<8x32xf32>
    %331 = vector.extract_strided_slice %13 {offsets = [7, 0, 0], sizes = [1, 8, 32], strides = [1, 1, 1]} : vector<8x8x32xf32> to vector<1x8x32xf32>
    %332 = vector.shape_cast %331 : vector<1x8x32xf32> to vector<8x32xf32>
    %333 = arith.addf %332, %321 : vector<8x32xf32>
    %334 = arith.negf %333 : vector<8x32xf32>
    %335 = math.exp %334 : vector<8x32xf32>
    %cst_88 = arith.constant 1.000000e+00 : f32
    %336 = vector.broadcast %cst_88 : f32 to vector<8x32xf32>
    %337 = arith.addf %336, %335 : vector<8x32xf32>
    %338 = arith.divf %336, %337 : vector<8x32xf32>
    %339 = vector.extract_strided_slice %19 {offsets = [7, 0, 0], sizes = [1, 8, 32], strides = [1, 1, 1]} : vector<8x8x32xf32> to vector<1x8x32xf32>
    %340 = vector.shape_cast %339 : vector<1x8x32xf32> to vector<8x32xf32>
    %341 = vector.broadcast %23 : vector<1x32xf32> to vector<8x32xf32>
    %342 = arith.addf %322, %341 : vector<8x32xf32>
    %343 = arith.mulf %330, %342 : vector<8x32xf32>
    %344 = arith.addf %340, %343 : vector<8x32xf32>
    %345 = math.tanh %344 : vector<8x32xf32>
    %cst_89 = arith.constant 1.000000e+00 : f32
    %346 = vector.broadcast %cst_89 : f32 to vector<8x32xf32>
    %347 = arith.subf %346, %338 : vector<8x32xf32>
    %348 = arith.mulf %347, %345 : vector<8x32xf32>
    %349 = arith.mulf %338, %315 : vector<8x32xf32>
    %350 = arith.addf %348, %349 : vector<8x32xf32>
    %351 = vector.extract_strided_slice %24 {offsets = [7, 0, 0], sizes = [1, 8, 1], strides = [1, 1, 1]} : vector<8x8x1xf32> to vector<1x8x1xf32>
    %352 = vector.shape_cast %351 : vector<1x8x1xf32> to vector<8x1xf32>
    %cst_90 = arith.constant 0.000000e+00 : f32
    %353 = vector.broadcast %cst_90 : f32 to vector<8x1xf32>
    %354 = arith.cmpf ogt, %352, %353 : vector<8x1xf32>
    %355 = vector.shape_cast %354 : vector<8x1xi1> to vector<8x1xi1>
    %356 = vector.broadcast %355 : vector<8x1xi1> to vector<8x32xi1>
    %357 = arith.select %356, %350, %315 : vector<8x32xi1>, vector<8x32xf32>
    %cst_91 = arith.constant 0.000000e+00 : f32
    %358 = vector.shape_cast %354 : vector<8x1xi1> to vector<8x1xi1>
    %359 = vector.broadcast %358 : vector<8x1xi1> to vector<8x32xi1>
    %360 = vector.broadcast %cst_91 : f32 to vector<8x32xf32>
    %361 = arith.select %359, %357, %360 : vector<8x32xi1>, vector<8x32xf32>
    %362 = vector.shape_cast %67 : vector<8x32xf32> to vector<1x8x32xf32>
    %363 = vector.shape_cast %109 : vector<8x32xf32> to vector<1x8x32xf32>
    %364 = vector.shape_cast %151 : vector<8x32xf32> to vector<1x8x32xf32>
    %365 = vector.shape_cast %193 : vector<8x32xf32> to vector<1x8x32xf32>
    %366 = vector.shape_cast %235 : vector<8x32xf32> to vector<1x8x32xf32>
    %367 = vector.shape_cast %277 : vector<8x32xf32> to vector<1x8x32xf32>
    %368 = vector.shape_cast %319 : vector<8x32xf32> to vector<1x8x32xf32>
    %369 = vector.shape_cast %361 : vector<8x32xf32> to vector<1x8x32xf32>
    %370 = tpu.concatenate %362, %363, %364, %365, %366, %367, %368, %369 in 0 : vector<1x8x32xf32>, vector<1x8x32xf32>, vector<1x8x32xf32>, vector<1x8x32xf32>, vector<1x8x32xf32>, vector<1x8x32xf32>, vector<1x8x32xf32>, vector<1x8x32xf32> -> vector<8x8x32xf32>
    %371 = vector.shape_cast %370 : vector<8x8x32xf32> to vector<64x32xf32>
    %c0_92 = arith.constant 0 : index
    %c0_93 = arith.constant 0 : index
    %372 = vector.load %arg13[%c0_92, %c0_93] : memref<32x32xf32, #tpu.memory_space<vmem>>, vector<32x32xf32>
    %cst_94 = arith.constant dense<0.000000e+00> : vector<64x32xf32>
    %373 = tpu.matmul %371, %372, %cst_94 {dimension_numbers = #tpu.dot_dimension_numbers<[1], [0], [0], [1], [0, 0, 1, 1], [], []>} : vector<64x32xf32>, vector<32x32xf32>, vector<64x32xf32> -> vector<64x32xf32>
    %374 = vector.shape_cast %373 : vector<64x32xf32> to vector<8x8x32xf32>
    %c0_95 = arith.constant 0 : index
    %c0_96 = arith.constant 0 : index
    %375 = vector.load %arg14[%c0_95, %c0_96] : memref<32x32xf32, #tpu.memory_space<vmem>>, vector<32x32xf32>
    %cst_97 = arith.constant dense<0.000000e+00> : vector<8x32xf32>
    %376 = tpu.matmul %357, %375, %cst_97 {dimension_numbers = #tpu.dot_dimension_numbers<[1], [0], [0], [1], [0, 0, 1, 1], [], []>} : vector<8x32xf32>, vector<32x32xf32>, vector<8x32xf32> -> vector<8x32xf32>
    %c0_98 = arith.constant 0 : index
    %c0_99 = arith.constant 0 : index
    %c0_100 = arith.constant 0 : index
    %377 = vector.load %arg2[%c0_98, %c0_99, %c0_100] : memref<8x8x1xf32, #tpu.memory_space<vmem>>, vector<8x8x1xf32>
    %378 = vector.shape_cast %376 : vector<8x32xf32> to vector<1x8x32xf32>
    %379 = vector.broadcast %377 : vector<8x8x1xf32> to vector<8x8x32xf32>
    %380 = vector.broadcast %378 : vector<1x8x32xf32> to vector<8x8x32xf32>
    %381 = arith.mulf %379, %380 : vector<8x8x32xf32>
    %382 = arith.addf %374, %381 : vector<8x8x32xf32>
    %383 = arith.negf %382 : vector<8x8x32xf32>
    %384 = math.exp %383 : vector<8x8x32xf32>
    %cst_101 = arith.constant 1.000000e+00 : f32
    %385 = vector.broadcast %cst_101 : f32 to vector<8x8x32xf32>
    %386 = arith.addf %385, %384 : vector<8x8x32xf32>
    %387 = arith.divf %385, %386 : vector<8x8x32xf32>
    %c0_102 = arith.constant 0 : index
    %c0_103 = arith.constant 0 : index
    %388 = vector.load %arg15[%c0_102, %c0_103] : memref<1x32xf32, #tpu.memory_space<vmem>>, vector<1x32xf32>
    %389 = vector.shape_cast %388 : vector<1x32xf32> to vector<1x1x32xf32>
    %390 = vector.broadcast %389 : vector<1x1x32xf32> to vector<8x8x32xf32>
    %391 = arith.mulf %387, %390 : vector<8x8x32xf32>
    %cst_104 = arith.constant dense<0.000000e+00> : vector<8x8xf32>
    %392 = vector.multi_reduction <add>, %391, %cst_104 [2] : vector<8x8x32xf32> to vector<8x8xf32>
    %393 = vector.shape_cast %392 : vector<8x8xf32> to vector<8x8x1xf32>
    %394 = vector.broadcast %393 : vector<8x8x1xf32> to vector<8x8x32xf32>
    %395 = arith.mulf %394, %370 : vector<8x8x32xf32>
    %cst_105 = arith.constant dense<0.000000e+00> : vector<8x32xf32>
    %396 = vector.multi_reduction <add>, %395, %cst_105 [0] : vector<8x8x32xf32> to vector<8x32xf32>
    %c0_106 = arith.constant 0 : index
    %c0_107 = arith.constant 0 : index
    %397 = vector.load %arg16[%c0_106, %c0_107] : memref<8x32xf32, #tpu.memory_space<vmem>>, vector<8x32xf32>
    tpu.vector_store %arg16[%c0_106, %c0_107], %396 {strides = array<i32>} : memref<8x32xf32, #tpu.memory_space<vmem>>, vector<8x32xf32>,
    %c0_108 = arith.constant 0 : index
    %c0_109 = arith.constant 0 : index
    %398 = vector.load %arg17[%c0_108, %c0_109] : memref<8x32xf32, #tpu.memory_space<vmem>>, vector<8x32xf32>
    tpu.vector_store %arg17[%c0_108, %c0_109], %357 {strides = array<i32>} : memref<8x32xf32, #tpu.memory_space<vmem>>, vector<8x32xf32>,
    return
  }
}

</mosaic_0001>

<llo_original>
// kernel: tpu_custom_call.1
$region0: #{tpu_custom_call.1}
  #allocation0 [shape = 'u32[]', space=smem, size = 0x4, offset = 0x4, fixed_abs, tag = 'smem constant byte address 0x4 - core index']
  #allocation1 [shape = 'u32[144,128]{1,0:T(1,128)}', space=vmem, size = 0x12000, scoped, tag = 'internal scratch']
  %s0 = inlined_call_operand.vmem [shape: f32[8,8,50], index: 0, kind: input, shape index: {}]
  %s1 = inlined_call_operand.vmem [shape: f32[8,8,1], index: 1, kind: input, shape index: {}]
  %s2 = inlined_call_operand.vmem [shape: f32[8,8,1], index: 2, kind: input, shape index: {}]
  %s3 = inlined_call_operand.vmem [shape: f32[50,32], index: 3, kind: input, shape index: {}]
  %s4 = inlined_call_operand.vmem [shape: f32[50,32], index: 4, kind: input, shape index: {}]
  %s5 = inlined_call_operand.vmem [shape: f32[50,32], index: 5, kind: input, shape index: {}]
  %s6 = inlined_call_operand.vmem [shape: f32[32,32], index: 6, kind: input, shape index: {}]
  %s7 = inlined_call_operand.vmem [shape: f32[32,32], index: 7, kind: input, shape index: {}]
  %s8 = inlined_call_operand.vmem [shape: f32[32,32], index: 8, kind: input, shape index: {}]
  %s9 = inlined_call_operand.vmem [shape: f32[1,32], index: 9, kind: input, shape index: {}]
  %s10 = inlined_call_operand.vmem [shape: f32[1,32], index: 10, kind: input, shape index: {}]
  %s11 = inlined_call_operand.vmem [shape: f32[1,32], index: 11, kind: input, shape index: {}]
  %s12 = inlined_call_operand.vmem [shape: f32[1,32], index: 12, kind: input, shape index: {}]
  %s13 = inlined_call_operand.vmem [shape: f32[32,32], index: 13, kind: input, shape index: {}]
  %s14 = inlined_call_operand.vmem [shape: f32[32,32], index: 14, kind: input, shape index: {}]
  %s15 = inlined_call_operand.vmem [shape: f32[1,32], index: 15, kind: input, shape index: {}]
  %s16 = inlined_call_operand.hbm [shape: f32[8,32], index: 16, kind: output, shape index: {0}]
  %s17 = inlined_call_operand.hbm [shape: f32[8,32], index: 17, kind: output, shape index: {1}]
  %18 = xla_tuple %s16, %s17
  %s19 = sld [smem:[#allocation0]]
  $region82: #{tpu_custom_call.1} parent=0
    _
  %s21 = ssub.s32 1, %s19
  %s22 = scalar_select 0, %s21, %s19
  $region1: #{tpu_custom_call.1} parent=0
    #allocation2 [shape = 'u8[4096]{0}', space=vmem, size = 0x1000, scoped, tag = 'output window, operand 0, single buffered']
    #allocation3 [shape = 's32[1]{0}', space=sflag, size = 0x4, scoped, tag = 'scoped memory for tpu_custom_call.1']
    #allocation4 [shape = 'u8[4096]{0}', space=vmem, size = 0x1000, scoped, tag = 'output window, operand 1, single buffered']
    #allocation5 [shape = 's32[1]{0}', space=sflag, size = 0x4, scoped, tag = 'scoped memory for tpu_custom_call.1']
    %23 = vsyncpa [#allocation3], 0
    %24 = vsyncpa [#allocation5], 0
    // Predicated region
    $region2: #{tpu_custom_call.1} parent=1 // pred_check
      _
    $region3: #{tpu_custom_call.1} parent=1 // pred_check_branch
      %26 = sbr.rel (0) target = $region5
    $region4: #{tpu_custom_call.1} parent=1 // pred_region
      _
    $region5: #{tpu_custom_call.1} parent=1 // pred_fallthru
      _
    // Predicated region
    $region6: #{tpu_custom_call.1} parent=1 // pred_check
      _
    $region7: #{tpu_custom_call.1} parent=1 // pred_check_branch
      %28 = sbr.rel (0) target = $region9
    $region8: #{tpu_custom_call.1} parent=1 // pred_region
      _
    $region9: #{tpu_custom_call.1} parent=1 // pred_fallthru
      _
    // Predicated region
    $region10: #{tpu_custom_call.1} parent=1 // pred_check
      _
    $region11: #{tpu_custom_call.1} parent=1 // pred_check_branch
      %30 = sbr.rel (0) target = $region13
    $region12: #{tpu_custom_call.1} parent=1 // pred_region
      _
    $region13: #{tpu_custom_call.1} parent=1 // pred_fallthru
      _
    // Predicated region
    $region14: #{tpu_custom_call.1} parent=1 // pred_check
      _
    $region15: #{tpu_custom_call.1} parent=1 // pred_check_branch
      %32 = sbr.rel (0) target = $region17
    $region16: #{tpu_custom_call.1} parent=1 // pred_region
      _
    $region17: #{tpu_custom_call.1} parent=1 // pred_fallthru
      _
    // Predicated region
    $region18: #{tpu_custom_call.1} parent=1 // pred_check
      _
    $region19: #{tpu_custom_call.1} parent=1 // pred_check_branch
      %34 = sbr.rel (0) target = $region21
    $region20: #{tpu_custom_call.1} parent=1 // pred_region
      _
    $region21: #{tpu_custom_call.1} parent=1 // pred_fallthru
      _
    // Predicated region
    $region22: #{tpu_custom_call.1} parent=1 // pred_check
      _
    $region23: #{tpu_custom_call.1} parent=1 // pred_check_branch
      %36 = sbr.rel (0) target = $region25
    $region24: #{tpu_custom_call.1} parent=1 // pred_region
      _
    $region25: #{tpu_custom_call.1} parent=1 // pred_fallthru
      _
    // Predicated region
    $region26: #{tpu_custom_call.1} parent=1 // pred_check
      _
    $region27: #{tpu_custom_call.1} parent=1 // pred_check_branch
      %38 = sbr.rel (0) target = $region29
    $region28: #{tpu_custom_call.1} parent=1 // pred_region
      _
    $region29: #{tpu_custom_call.1} parent=1 // pred_fallthru
      _
    // Predicated region
    $region30: #{tpu_custom_call.1} parent=1 // pred_check
      _
    $region31: #{tpu_custom_call.1} parent=1 // pred_check_branch
      %40 = sbr.rel (0) target = $region33
    $region32: #{tpu_custom_call.1} parent=1 // pred_region
      _
    $region33: #{tpu_custom_call.1} parent=1 // pred_fallthru
      _
    // Predicated region
    $region34: #{tpu_custom_call.1} parent=1 // pred_check
      _
    $region35: #{tpu_custom_call.1} parent=1 // pred_check_branch
      %42 = sbr.rel (0) target = $region37
    $region36: #{tpu_custom_call.1} parent=1 // pred_region
      _
    $region37: #{tpu_custom_call.1} parent=1 // pred_fallthru
      _
    // Predicated region
    $region38: #{tpu_custom_call.1} parent=1 // pred_check
      _
    $region39: #{tpu_custom_call.1} parent=1 // pred_check_branch
      %44 = sbr.rel (0) target = $region41
    $region40: #{tpu_custom_call.1} parent=1 // pred_region
      _
    $region41: #{tpu_custom_call.1} parent=1 // pred_fallthru
      _
    // Predicated region
    $region42: #{tpu_custom_call.1} parent=1 // pred_check
      _
    $region43: #{tpu_custom_call.1} parent=1 // pred_check_branch
      %46 = sbr.rel (0) target = $region45
    $region44: #{tpu_custom_call.1} parent=1 // pred_region
      _
    $region45: #{tpu_custom_call.1} parent=1 // pred_fallthru
      _
    // Predicated region
    $region46: #{tpu_custom_call.1} parent=1 // pred_check
      _
    $region47: #{tpu_custom_call.1} parent=1 // pred_check_branch
      %48 = sbr.rel (0) target = $region49
    $region48: #{tpu_custom_call.1} parent=1 // pred_region
      _
    $region49: #{tpu_custom_call.1} parent=1 // pred_fallthru
      _
    // Predicated region
    $region50: #{tpu_custom_call.1} parent=1 // pred_check
      _
    $region51: #{tpu_custom_call.1} parent=1 // pred_check_branch
      %50 = sbr.rel (0) target = $region53
    $region52: #{tpu_custom_call.1} parent=1 // pred_region
      _
    $region53: #{tpu_custom_call.1} parent=1 // pred_fallthru
      _
    // Predicated region
    $region54: #{tpu_custom_call.1} parent=1 // pred_check
      _
    $region55: #{tpu_custom_call.1} parent=1 // pred_check_branch
      %52 = sbr.rel (0) target = $region57
    $region56: #{tpu_custom_call.1} parent=1 // pred_region
      _
    $region57: #{tpu_custom_call.1} parent=1 // pred_fallthru
      _
    // Predicated region
    $region58: #{tpu_custom_call.1} parent=1 // pred_check
      _
    $region59: #{tpu_custom_call.1} parent=1 // pred_check_branch
      %54 = sbr.rel (0) target = $region61
    $region60: #{tpu_custom_call.1} parent=1 // pred_region
      _
    $region61: #{tpu_custom_call.1} parent=1 // pred_fallthru
      _
    // Predicated region
    $region62: #{tpu_custom_call.1} parent=1 // pred_check
      _
    $region63: #{tpu_custom_call.1} parent=1 // pred_check_branch
      %56 = sbr.rel (0) target = $region65
    $region64: #{tpu_custom_call.1} parent=1 // pred_region
      _
    $region65: #{tpu_custom_call.1} parent=1 // pred_fallthru
      _
    %v57 = vld [vmem:[%s0] sm:$0xff]
    %v58 = vld [vmem:[%s0 + $0x8] sm:$0xff]
    %v59 = vld [vmem:[%s0 + $0x10] sm:$0xff]
    %v60 = vld [vmem:[%s0 + $0x18] sm:$0xff]
    %v61 = vld [vmem:[%s0 + $0x20] sm:$0xff]
    %v62 = vld [vmem:[%s0 + $0x28] sm:$0xff]
    %v63 = vld [vmem:[%s0 + $0x30] sm:$0xff]
    %v64 = vld [vmem:[%s0 + $0x38] sm:$0xff]
    %v65 = vld [vmem:[%s3] sm:$0xff]
    %v66 = vld [vmem:[%s3 + $0x8] sm:$0xff]
    %v67 = vld [vmem:[%s3 + $0x10] sm:$0xff]
    %v68 = vld [vmem:[%s3 + $0x18] sm:$0xff]
    %v69 = vld [vmem:[%s3 + $0x20] sm:$0xff]
    %v70 = vld [vmem:[%s3 + $0x28] sm:$0xff]
    %v71 = vld [vmem:[%s3 + $0x30] sm:$0x3]
    %v72 = vld [vmem:[%s9] sm:$0x1]
    %v74 = vlaneseq
    %v75 = vshrl.u32 %v74, 7
    %v76 = vsub.s32 0, %v75
    %v77 = vrot.slane %v72, %v76
    %vm79 = vcmask 408576
    %v81 = vsel %vm79, %v57, 0
    %v84 = vsel %vm79, %v58, 0
    %v87 = vsel %vm79, %v59, 0
    %v90 = vsel %vm79, %v60, 0
    %v93 = vsel %vm79, %v61, 0
    %v96 = vsel %vm79, %v62, 0
    %v99 = vsel %vm79, %v63, 0
    %v102 = vsel %vm79, %v64, 0
    %vm104 = vcmask 1041408
    %v106 = vsel %vm104, %v71, 0
    %108 = vmatprep.subr.mxu0 0.0
    %109 = vmatpush1.msra.mxu0 %v65
    %110 = vmatprep.subr.mxu0 0.0
    %111 = vmatpush1.msra.mxu0 %v66
    %112 = vmatprep.subr.mxu0 0.0
    %113 = vmatpush1.msra.mxu0 %v67
    %114 = vmatprep.subr.mxu0 0.0
    %115 = vmatpush1.msra.mxu0 %v68
    %116 = vmatprep.subr.mxu0 0.0
    %117 = vmatpush1.msra.mxu0 %v69
    %118 = vmatprep.subr.mxu0 0.0
    %119 = vmatpush1.msra.mxu0 %v70
    %120 = vmatprep.subr.mxu0 0.0
    %121 = vmatpush1.msra.mxu0 %v106
    %122 = vmatprep.subr.mxu0 0.0
    %123 = vmatpush1.msra.mxu0 0.0
    %124 = vmatprep.subr.mxu0 0.0
    %125 = vmatpush1.msra.mxu0 0.0
    %126 = vmatprep.subr.mxu0 0.0
    %127 = vmatpush1.msra.mxu0 0.0
    %128 = vmatprep.subr.mxu0 0.0
    %129 = vmatpush1.msra.mxu0 0.0
    %130 = vmatprep.subr.mxu0 0.0
    %131 = vmatpush1.msra.mxu0 0.0
    %132 = vmatprep.subr.mxu0 0.0
    %133 = vmatpush1.msra.mxu0 0.0
    %134 = vmatprep.subr.mxu0 0.0
    %135 = vmatpush1.msra.mxu0 0.0
    %136 = vmatprep.subr.mxu0 0.0
    %137 = vmatpush1.msra.mxu0 0.0
    %138 = vmatprep.subr.mxu0 0.0
    %139 = vmatpush1.msra.mxu0 0.0
    %140 = vmatprep.subr.mxu0 0.0
    %141 = vmatpush1.msra.mxu0 0.0
    %142 = vmatprep.subr.mxu0 0.0
    %143 = vmatpush1.msra.mxu0 0.0
    %144 = vmatprep.subr.mxu0 0.0
    %145 = vmatpush1.msra.mxu0 0.0
    %146 = vmatprep.subr.mxu0 0.0
    %147 = vmatpush1.msra.mxu0 0.0
    %148 = vmatprep.subr.mxu0 0.0
    %149 = vmatpush1.msra.mxu0 0.0
    %150 = vmatprep.subr.mxu0 0.0
    %151 = vmatpush1.msra.mxu0 0.0
    %152 = vmatprep.subr.mxu0 0.0
    %153 = vmatpush1.msra.mxu0 0.0
    %154 = vmatprep.subr.mxu0 0.0
    %155 = vmatpush1.msra.mxu0 0.0
    %156 = vmatprep.subr.mxu0 0.0
    %157 = vmatpush1.msra.mxu0 0.0
    %158 = vmatprep.subr.mxu0 0.0
    %159 = vmatpush1.msra.mxu0 0.0
    %160 = vmatprep.subr.mxu0 0.0
    %161 = vmatpush1.msra.mxu0 0.0
    %162 = vmatprep.subr.mxu0 0.0
    %163 = vmatpush1.msra.mxu0 0.0
    %164 = vmatprep.subr.mxu0 0.0
    %165 = vmatpush1.msra.mxu0 0.0
    %166 = vmatprep.subr.mxu0 0.0
    %167 = vmatpush1.msra.mxu0 0.0
    %168 = vmatprep.subr.mxu0 0.0
    %169 = vmatpush1.msra.mxu0 0.0
    %170 = vmatprep.subr.mxu0 0.0
    %171 = vmatpush1.msra.mxu0 0.0
    %172 = vmatprep.mubr.f32.mxu0 0.0
    %173 = vmatmul.mubr.f32.gmra.mrb[0].mxu0 %v81
    %v174 = vpop.f32.mrb[0].mxu0
    %v175 = vadd.f32 %v77, %v174
    %v176 = vpop.f32.mrb[0].mxu0
    %177 = vmatprep.mubr.f32.mxu0 0.0
    %178 = vmatmul.mubr.f32.gmra.mrb[0].mxu0 %v84
    %v179 = vpop.f32.mrb[0].mxu0
    %v180 = vadd.f32 %v77, %v179
    %v181 = vpop.f32.mrb[0].mxu0
    %182 = vmatprep.mubr.f32.mxu0 0.0
    %183 = vmatmul.mubr.f32.gmra.mrb[0].mxu0 %v87
    %v184 = vpop.f32.mrb[0].mxu0
    %v185 = vadd.f32 %v77, %v184
    %v186 = vpop.f32.mrb[0].mxu0
    %187 = vmatprep.mubr.f32.mxu0 0.0
    %188 = vmatmul.mubr.f32.gmra.mrb[0].mxu0 %v90
    %v189 = vpop.f32.mrb[0].mxu0
    %v190 = vadd.f32 %v77, %v189
    %v191 = vpop.f32.mrb[0].mxu0
    %192 = vmatprep.mubr.f32.mxu0 0.0
    %193 = vmatmul.mubr.f32.gmra.mrb[0].mxu0 %v93
    %v194 = vpop.f32.mrb[0].mxu0
    %v195 = vadd.f32 %v77, %v194
    %v196 = vpop.f32.mrb[0].mxu0
    %197 = vmatprep.mubr.f32.mxu0 0.0
    %198 = vmatmul.mubr.f32.gmra.mrb[0].mxu0 %v96
    %v199 = vpop.f32.mrb[0].mxu0
    %v200 = vadd.f32 %v77, %v199
    %v201 = vpop.f32.mrb[0].mxu0
    %202 = vmatprep.mubr.f32.mxu0 0.0
    %203 = vmatmul.mubr.f32.gmra.mrb[0].mxu0 %v99
    %v204 = vpop.f32.mrb[0].mxu0
    %v205 = vadd.f32 %v77, %v204
    %v206 = vpop.f32.mrb[0].mxu0
    %207 = vmatprep.mubr.f32.mxu0 0.0
    %208 = vmatmul.mubr.f32.gmra.mrb[0].mxu0 %v102
    %v209 = vpop.f32.mrb[0].mxu0
    %v210 = vadd.f32 %v77, %v209
    %v211 = vpop.f32.mrb[0].mxu0
    %212 = vdwg.mxu0
    %v213 = vld [vmem:[%s4] sm:$0xff]
    %v214 = vld [vmem:[%s4 + $0x8] sm:$0xff]
    %v215 = vld [vmem:[%s4 + $0x10] sm:$0xff]
    %v216 = vld [vmem:[%s4 + $0x18] sm:$0xff]
    %v217 = vld [vmem:[%s4 + $0x20] sm:$0xff]
    %v218 = vld [vmem:[%s4 + $0x28] sm:$0xff]
    %v219 = vld [vmem:[%s4 + $0x30] sm:$0x3]
    %v220 = vld [vmem:[%s10] sm:$0x1]
    %v222 = vlaneseq
    %v223 = vshrl.u32 %v222, 7
    %v224 = vsub.s32 0, %v223
    %v225 = vrot.slane %v220, %v224
    %v228 = vsel %vm104, %v219, 0
    %230 = vmatprep.subr.mxu0 0.0
    %231 = vmatpush1.msra.mxu0 %v213
    %232 = vmatprep.subr.mxu0 0.0
    %233 = vmatpush1.msra.mxu0 %v214
    %234 = vmatprep.subr.mxu0 0.0
    %235 = vmatpush1.msra.mxu0 %v215
    %236 = vmatprep.subr.mxu0 0.0
    %237 = vmatpush1.msra.mxu0 %v216
    %238 = vmatprep.subr.mxu0 0.0
    %239 = vmatpush1.msra.mxu0 %v217
    %240 = vmatprep.subr.mxu0 0.0
    %241 = vmatpush1.msra.mxu0 %v218
    %242 = vmatprep.subr.mxu0 0.0
    %243 = vmatpush1.msra.mxu0 %v228
    %244 = vmatprep.subr.mxu0 0.0
    %245 = vmatpush1.msra.mxu0 0.0
    %246 = vmatprep.subr.mxu0 0.0
    %247 = vmatpush1.msra.mxu0 0.0
    %248 = vmatprep.subr.mxu0 0.0
    %249 = vmatpush1.msra.mxu0 0.0
    %250 = vmatprep.subr.mxu0 0.0
    %251 = vmatpush1.msra.mxu0 0.0
    %252 = vmatprep.subr.mxu0 0.0
    %253 = vmatpush1.msra.mxu0 0.0
    %254 = vmatprep.subr.mxu0 0.0
    %255 = vmatpush1.msra.mxu0 0.0
    %256 = vmatprep.subr.mxu0 0.0
    %257 = vmatpush1.msra.mxu0 0.0
    %258 = vmatprep.subr.mxu0 0.0
    %259 = vmatpush1.msra.mxu0 0.0
    %260 = vmatprep.subr.mxu0 0.0
    %261 = vmatpush1.msra.mxu0 0.0
    %262 = vmatprep.subr.mxu0 0.0
    %263 = vmatpush1.msra.mxu0 0.0
    %264 = vmatprep.subr.mxu0 0.0
    %265 = vmatpush1.msra.mxu0 0.0
    %266 = vmatprep.subr.mxu0 0.0
    %267 = vmatpush1.msra.mxu0 0.0
    %268 = vmatprep.subr.mxu0 0.0
    %269 = vmatpush1.msra.mxu0 0.0
    %270 = vmatprep.subr.mxu0 0.0
    %271 = vmatpush1.msra.mxu0 0.0
    %272 = vmatprep.subr.mxu0 0.0
    %273 = vmatpush1.msra.mxu0 0.0
    %274 = vmatprep.subr.mxu0 0.0
    %275 = vmatpush1.msra.mxu0 0.0
    %276 = vmatprep.subr.mxu0 0.0
    %277 = vmatpush1.msra.mxu0 0.0
    %278 = vmatprep.subr.mxu0 0.0
    %279 = vmatpush1.msra.mxu0 0.0
    %280 = vmatprep.subr.mxu0 0.0
    %281 = vmatpush1.msra.mxu0 0.0
    %282 = vmatprep.subr.mxu0 0.0
    %283 = vmatpush1.msra.mxu0 0.0
    %284 = vmatprep.subr.mxu0 0.0
    %285 = vmatpush1.msra.mxu0 0.0
    %286 = vmatprep.subr.mxu0 0.0
    %287 = vmatpush1.msra.mxu0 0.0
    %288 = vmatprep.subr.mxu0 0.0
    %289 = vmatpush1.msra.mxu0 0.0
    %290 = vmatprep.subr.mxu0 0.0
    %291 = vmatpush1.msra.mxu0 0.0
    %292 = vmatprep.subr.mxu0 0.0
    %293 = vmatpush1.msra.mxu0 0.0
    %294 = vmatprep.mubr.f32.mxu0 0.0
    %295 = vmatmul.mubr.f32.gmra.mrb[0].mxu0 %v81
    %v296 = vpop.f32.mrb[0].mxu0
    %v297 = vadd.f32 %v225, %v296
    %v298 = vpop.f32.mrb[0].mxu0
    %299 = vmatprep.mubr.f32.mxu0 0.0
    %300 = vmatmul.mubr.f32.gmra.mrb[0].mxu0 %v84
    %v301 = vpop.f32.mrb[0].mxu0
    %v302 = vadd.f32 %v225, %v301
    %v303 = vpop.f32.mrb[0].mxu0
    %304 = vmatprep.mubr.f32.mxu0 0.0
    %305 = vmatmul.mubr.f32.gmra.mrb[0].mxu0 %v87
    %v306 = vpop.f32.mrb[0].mxu0
    %v307 = vadd.f32 %v225, %v306
    %v308 = vpop.f32.mrb[0].mxu0
    %309 = vmatprep.mubr.f32.mxu0 0.0
    %310 = vmatmul.mubr.f32.gmra.mrb[0].mxu0 %v90
    %v311 = vpop.f32.mrb[0].mxu0
    %v312 = vadd.f32 %v225, %v311
    %v313 = vpop.f32.mrb[0].mxu0
    %314 = vmatprep.mubr.f32.mxu0 0.0
    %315 = vmatmul.mubr.f32.gmra.mrb[0].mxu0 %v93
    %v316 = vpop.f32.mrb[0].mxu0
    %v317 = vadd.f32 %v225, %v316
    %v318 = vpop.f32.mrb[0].mxu0
    %319 = vmatprep.mubr.f32.mxu0 0.0
    %320 = vmatmul.mubr.f32.gmra.mrb[0].mxu0 %v96
    %v321 = vpop.f32.mrb[0].mxu0
    %v322 = vadd.f32 %v225, %v321
    %v323 = vpop.f32.mrb[0].mxu0
    %324 = vmatprep.mubr.f32.mxu0 0.0
    %325 = vmatmul.mubr.f32.gmra.mrb[0].mxu0 %v99
    %v326 = vpop.f32.mrb[0].mxu0
    %v327 = vadd.f32 %v225, %v326
    %v328 = vpop.f32.mrb[0].mxu0
    %329 = vmatprep.mubr.f32.mxu0 0.0
    %330 = vmatmul.mubr.f32.gmra.mrb[0].mxu0 %v102
    %v331 = vpop.f32.mrb[0].mxu0
    %v332 = vadd.f32 %v225, %v331
    %v333 = vpop.f32.mrb[0].mxu0
    %334 = vdwg.mxu0
    %v335 = vld [vmem:[%s5] sm:$0xff]
    %v336 = vld [vmem:[%s5 + $0x8] sm:$0xff]
    %v337 = vld [vmem:[%s5 + $0x10] sm:$0xff]
    %v338 = vld [vmem:[%s5 + $0x18] sm:$0xff]
    %v339 = vld [vmem:[%s5 + $0x20] sm:$0xff]
    %v340 = vld [vmem:[%s5 + $0x28] sm:$0xff]
    %v341 = vld [vmem:[%s5 + $0x30] sm:$0x3]
    %v342 = vld [vmem:[%s11] sm:$0x1]
    %v344 = vlaneseq
    %v345 = vshrl.u32 %v344, 7
    %v346 = vsub.s32 0, %v345
    %v347 = vrot.slane %v342, %v346
    %v350 = vsel %vm104, %v341, 0
    %352 = vmatprep.subr.mxu0 0.0
    %353 = vmatpush1.msra.mxu0 %v335
    %354 = vmatprep.subr.mxu0 0.0
    %355 = vmatpush1.msra.mxu0 %v336
    %356 = vmatprep.subr.mxu0 0.0
    %357 = vmatpush1.msra.mxu0 %v337
    %358 = vmatprep.subr.mxu0 0.0
    %359 = vmatpush1.msra.mxu0 %v338
    %360 = vmatprep.subr.mxu0 0.0
    %361 = vmatpush1.msra.mxu0 %v339
    %362 = vmatprep.subr.mxu0 0.0
    %363 = vmatpush1.msra.mxu0 %v340
    %364 = vmatprep.subr.mxu0 0.0
    %365 = vmatpush1.msra.mxu0 %v350
    %366 = vmatprep.subr.mxu0 0.0
    %367 = vmatpush1.msra.mxu0 0.0
    %368 = vmatprep.subr.mxu0 0.0
    %369 = vmatpush1.msra.mxu0 0.0
    %370 = vmatprep.subr.mxu0 0.0
    %371 = vmatpush1.msra.mxu0 0.0
    %372 = vmatprep.subr.mxu0 0.0
    %373 = vmatpush1.msra.mxu0 0.0
    %374 = vmatprep.subr.mxu0 0.0
    %375 = vmatpush1.msra.mxu0 0.0
    %376 = vmatprep.subr.mxu0 0.0
    %377 = vmatpush1.msra.mxu0 0.0
    %378 = vmatprep.subr.mxu0 0.0
    %379 = vmatpush1.msra.mxu0 0.0
    %380 = vmatprep.subr.mxu0 0.0
    %381 = vmatpush1.msra.mxu0 0.0
    %382 = vmatprep.subr.mxu0 0.0
    %383 = vmatpush1.msra.mxu0 0.0
    %384 = vmatprep.subr.mxu0 0.0
    %385 = vmatpush1.msra.mxu0 0.0
    %386 = vmatprep.subr.mxu0 0.0
    %387 = vmatpush1.msra.mxu0 0.0
    %388 = vmatprep.subr.mxu0 0.0
    %389 = vmatpush1.msra.mxu0 0.0
    %390 = vmatprep.subr.mxu0 0.0
    %391 = vmatpush1.msra.mxu0 0.0
    %392 = vmatprep.subr.mxu0 0.0
    %393 = vmatpush1.msra.mxu0 0.0
    %394 = vmatprep.subr.mxu0 0.0
    %395 = vmatpush1.msra.mxu0 0.0
    %396 = vmatprep.subr.mxu0 0.0
    %397 = vmatpush1.msra.mxu0 0.0
    %398 = vmatprep.subr.mxu0 0.0
    %399 = vmatpush1.msra.mxu0 0.0
    %400 = vmatprep.subr.mxu0 0.0
    %401 = vmatpush1.msra.mxu0 0.0
    %402 = vmatprep.subr.mxu0 0.0
    %403 = vmatpush1.msra.mxu0 0.0
    %404 = vmatprep.subr.mxu0 0.0
    %405 = vmatpush1.msra.mxu0 0.0
    %406 = vmatprep.subr.mxu0 0.0
    %407 = vmatpush1.msra.mxu0 0.0
    %408 = vmatprep.subr.mxu0 0.0
    %409 = vmatpush1.msra.mxu0 0.0
    %410 = vmatprep.subr.mxu0 0.0
    %411 = vmatpush1.msra.mxu0 0.0
    %412 = vmatprep.subr.mxu0 0.0
    %413 = vmatpush1.msra.mxu0 0.0
    %414 = vmatprep.subr.mxu0 0.0
    %415 = vmatpush1.msra.mxu0 0.0
    %416 = vmatprep.mubr.f32.mxu0 0.0
    %417 = vmatmul.mubr.f32.gmra.mrb[0].mxu0 %v81
    %v418 = vpop.f32.mrb[0].mxu0
    %v419 = vadd.f32 %v347, %v418
    %v420 = vpop.f32.mrb[0].mxu0
    %421 = vmatprep.mubr.f32.mxu0 0.0
    %422 = vmatmul.mubr.f32.gmra.mrb[0].mxu0 %v84
    %v423 = vpop.f32.mrb[0].mxu0
    %v424 = vadd.f32 %v347, %v423
    %v425 = vpop.f32.mrb[0].mxu0
    %426 = vmatprep.mubr.f32.mxu0 0.0
    %427 = vmatmul.mubr.f32.gmra.mrb[0].mxu0 %v87
    %v428 = vpop.f32.mrb[0].mxu0
    %v429 = vadd.f32 %v347, %v428
    %v430 = vpop.f32.mrb[0].mxu0
    %431 = vmatprep.mubr.f32.mxu0 0.0
    %432 = vmatmul.mubr.f32.gmra.mrb[0].mxu0 %v90
    %v433 = vpop.f32.mrb[0].mxu0
    %v434 = vadd.f32 %v347, %v433
    %v435 = vpop.f32.mrb[0].mxu0
    %436 = vmatprep.mubr.f32.mxu0 0.0
    %437 = vmatmul.mubr.f32.gmra.mrb[0].mxu0 %v93
    %v438 = vpop.f32.mrb[0].mxu0
    %v439 = vadd.f32 %v347, %v438
    %v440 = vpop.f32.mrb[0].mxu0
    %441 = vmatprep.mubr.f32.mxu0 0.0
    %442 = vmatmul.mubr.f32.gmra.mrb[0].mxu0 %v96
    %v443 = vpop.f32.mrb[0].mxu0
    %v444 = vadd.f32 %v347, %v443
    %v445 = vpop.f32.mrb[0].mxu0
    %446 = vmatprep.mubr.f32.mxu0 0.0
    %447 = vmatmul.mubr.f32.gmra.mrb[0].mxu0 %v99
    %v448 = vpop.f32.mrb[0].mxu0
    %v449 = vadd.f32 %v347, %v448
    %v450 = vpop.f32.mrb[0].mxu0
    %451 = vmatprep.mubr.f32.mxu0 0.0
    %452 = vmatmul.mubr.f32.gmra.mrb[0].mxu0 %v102
    %v453 = vpop.f32.mrb[0].mxu0
    %v454 = vadd.f32 %v347, %v453
    %v455 = vpop.f32.mrb[0].mxu0
    %456 = vdwg.mxu0
    %v457 = vld [vmem:[%s6] sm:$0xff]
    %v458 = vld [vmem:[%s6 + $0x8] sm:$0xff]
    %v459 = vld [vmem:[%s6 + $0x10] sm:$0xff]
    %v460 = vld [vmem:[%s6 + $0x18] sm:$0xff]
    %v461 = vld [vmem:[%s7] sm:$0xff]
    %v462 = vld [vmem:[%s7 + $0x8] sm:$0xff]
    %v463 = vld [vmem:[%s7 + $0x10] sm:$0xff]
    %v464 = vld [vmem:[%s7 + $0x18] sm:$0xff]
    %v465 = vld [vmem:[%s8] sm:$0xff]
    %v466 = vld [vmem:[%s8 + $0x8] sm:$0xff]
    %v467 = vld [vmem:[%s8 + $0x10] sm:$0xff]
    %v468 = vld [vmem:[%s8 + $0x18] sm:$0xff]
    %v469 = vld [vmem:[%s12] sm:$0x1]
    %v470 = vld [vmem:[%s1] sm:$0xff]
    %v471 = vld [vmem:[%s1 + $0x8] sm:$0xff]
    %v472 = vld [vmem:[%s1 + $0x10] sm:$0xff]
    %v473 = vld [vmem:[%s1 + $0x18] sm:$0xff]
    %v474 = vld [vmem:[%s1 + $0x20] sm:$0xff]
    %v475 = vld [vmem:[%s1 + $0x28] sm:$0xff]
    %v476 = vld [vmem:[%s1 + $0x30] sm:$0xff]
    %v477 = vld [vmem:[%s1 + $0x38] sm:$0xff]
    %vm478 = vcmask 261120
    %v480 = vsel %vm478, 0.0, 0
    %482 = vmatprep.subr.mxu0 0.0
    %483 = vmatpush1.msra.mxu0 %v457
    %484 = vmatprep.subr.mxu0 0.0
    %485 = vmatpush1.msra.mxu0 %v458
    %486 = vmatprep.subr.mxu0 0.0
    %487 = vmatpush1.msra.mxu0 %v459
    %488 = vmatprep.subr.mxu0 0.0
    %489 = vmatpush1.msra.mxu0 %v460
    %490 = vmatprep.subr.mxu0 0.0
    %491 = vmatpush1.msra.mxu0 0.0
    %492 = vmatprep.subr.mxu0 0.0
    %493 = vmatpush1.msra.mxu0 0.0
    %494 = vmatprep.subr.mxu0 0.0
    %495 = vmatpush1.msra.mxu0 0.0
    %496 = vmatprep.subr.mxu0 0.0
    %497 = vmatpush1.msra.mxu0 0.0
    %498 = vmatprep.subr.mxu0 0.0
    %499 = vmatpush1.msra.mxu0 0.0
    %500 = vmatprep.subr.mxu0 0.0
    %501 = vmatpush1.msra.mxu0 0.0
    %502 = vmatprep.subr.mxu0 0.0
    %503 = vmatpush1.msra.mxu0 0.0
    %504 = vmatprep.subr.mxu0 0.0
    %505 = vmatpush1.msra.mxu0 0.0
    %506 = vmatprep.subr.mxu0 0.0
    %507 = vmatpush1.msra.mxu0 0.0
    %508 = vmatprep.subr.mxu0 0.0
    %509 = vmatpush1.msra.mxu0 0.0
    %510 = vmatprep.subr.mxu0 0.0
    %511 = vmatpush1.msra.mxu0 0.0
    %512 = vmatprep.subr.mxu0 0.0
    %513 = vmatpush1.msra.mxu0 0.0
    %514 = vmatprep.subr.mxu0 0.0
    %515 = vmatpush1.msra.mxu0 0.0
    %516 = vmatprep.subr.mxu0 0.0
    %517 = vmatpush1.msra.mxu0 0.0
    %518 = vmatprep.subr.mxu0 0.0
    %519 = vmatpush1.msra.mxu0 0.0
    %520 = vmatprep.subr.mxu0 0.0
    %521 = vmatpush1.msra.mxu0 0.0
    %522 = vmatprep.subr.mxu0 0.0
    %523 = vmatpush1.msra.mxu0 0.0
    %524 = vmatprep.subr.mxu0 0.0
    %525 = vmatpush1.msra.mxu0 0.0
    %526 = vmatprep.subr.mxu0 0.0
    %527 = vmatpush1.msra.mxu0 0.0
    %528 = vmatprep.subr.mxu0 0.0
    %529 = vmatpush1.msra.mxu0 0.0
    %530 = vmatprep.subr.mxu0 0.0
    %531 = vmatpush1.msra.mxu0 0.0
    %532 = vmatprep.subr.mxu0 0.0
    %533 = vmatpush1.msra.mxu0 0.0
    %534 = vmatprep.subr.mxu0 0.0
    %535 = vmatpush1.msra.mxu0 0.0
    %536 = vmatprep.subr.mxu0 0.0
    %537 = vmatpush1.msra.mxu0 0.0
    %538 = vmatprep.subr.mxu0 0.0
    %539 = vmatpush1.msra.mxu0 0.0
    %540 = vmatprep.subr.mxu0 0.0
    %541 = vmatpush1.msra.mxu0 0.0
    %542 = vmatprep.subr.mxu0 0.0
    %543 = vmatpush1.msra.mxu0 0.0
    %544 = vmatprep.subr.mxu0 0.0
    %545 = vmatpush1.msra.mxu0 0.0
    %546 = vmatprep.mubr.f32.mxu0 0.0
    %547 = vmatmul.mubr.f32.gmra.mrb[0].mxu0 %v480
    %v548 = vpop.f32.mrb[0].mxu0
    %v549 = vadd.f32 0.0, %v548
    %v550 = vpop.f32.mrb[0].mxu0
    %551 = vdwg.mxu0
    %552 = vmatprep.subr.mxu0 0.0
    %553 = vmatpush1.msra.mxu0 %v461
    %554 = vmatprep.subr.mxu0 0.0
    %555 = vmatpush1.msra.mxu0 %v462
    %556 = vmatprep.subr.mxu0 0.0
    %557 = vmatpush1.msra.mxu0 %v463
    %558 = vmatprep.subr.mxu0 0.0
    %559 = vmatpush1.msra.mxu0 %v464
    %560 = vmatprep.subr.mxu0 0.0
    %561 = vmatpush1.msra.mxu0 0.0
    %562 = vmatprep.subr.mxu0 0.0
    %563 = vmatpush1.msra.mxu0 0.0
    %564 = vmatprep.subr.mxu0 0.0
    %565 = vmatpush1.msra.mxu0 0.0
    %566 = vmatprep.subr.mxu0 0.0
    %567 = vmatpush1.msra.mxu0 0.0
    %568 = vmatprep.subr.mxu0 0.0
    %569 = vmatpush1.msra.mxu0 0.0
    %570 = vmatprep.subr.mxu0 0.0
    %571 = vmatpush1.msra.mxu0 0.0
    %572 = vmatprep.subr.mxu0 0.0
    %573 = vmatpush1.msra.mxu0 0.0
    %574 = vmatprep.subr.mxu0 0.0
    %575 = vmatpush1.msra.mxu0 0.0
    %576 = vmatprep.subr.mxu0 0.0
    %577 = vmatpush1.msra.mxu0 0.0
    %578 = vmatprep.subr.mxu0 0.0
    %579 = vmatpush1.msra.mxu0 0.0
    %580 = vmatprep.subr.mxu0 0.0
    %581 = vmatpush1.msra.mxu0 0.0
    %582 = vmatprep.subr.mxu0 0.0
    %583 = vmatpush1.msra.mxu0 0.0
    %584 = vmatprep.subr.mxu0 0.0
    %585 = vmatpush1.msra.mxu0 0.0
    %586 = vmatprep.subr.mxu0 0.0
    %587 = vmatpush1.msra.mxu0 0.0
    %588 = vmatprep.subr.mxu0 0.0
    %589 = vmatpush1.msra.mxu0 0.0
    %590 = vmatprep.subr.mxu0 0.0
    %591 = vmatpush1.msra.mxu0 0.0
    %592 = vmatprep.subr.mxu0 0.0
    %593 = vmatpush1.msra.mxu0 0.0
    %594 = vmatprep.subr.mxu0 0.0
    %595 = vmatpush1.msra.mxu0 0.0
    %596 = vmatprep.subr.mxu0 0.0
    %597 = vmatpush1.msra.mxu0 0.0
    %598 = vmatprep.subr.mxu0 0.0
    %599 = vmatpush1.msra.mxu0 0.0
    %600 = vmatprep.subr.mxu0 0.0
    %601 = vmatpush1.msra.mxu0 0.0
    %602 = vmatprep.subr.mxu0 0.0
    %603 = vmatpush1.msra.mxu0 0.0
    %604 = vmatprep.subr.mxu0 0.0
    %605 = vmatpush1.msra.mxu0 0.0
    %606 = vmatprep.subr.mxu0 0.0
    %607 = vmatpush1.msra.mxu0 0.0
    %608 = vmatprep.subr.mxu0 0.0
    %609 = vmatpush1.msra.mxu0 0.0
    %610 = vmatprep.subr.mxu0 0.0
    %611 = vmatpush1.msra.mxu0 0.0
    %612 = vmatprep.subr.mxu0 0.0
    %613 = vmatpush1.msra.mxu0 0.0
    %614 = vmatprep.subr.mxu0 0.0
    %615 = vmatpush1.msra.mxu0 0.0
    %616 = vmatprep.mubr.f32.mxu0 0.0
    %617 = vmatmul.mubr.f32.gmra.mrb[0].mxu0 %v480
    %v618 = vpop.f32.mrb[0].mxu0
    %v619 = vadd.f32 0.0, %v618
    %v620 = vpop.f32.mrb[0].mxu0
    %621 = vdwg.mxu0
    %v622 = vadd.f32 %v175, %v549
    %v623 = vxor.u32 %v622, 2147483648
    %v624 = vmul.f32 %v623, 1.442695
    %v625 = vpow.pop %v624
    %v626 = vadd.f32 %v625, 1.0
    %v627 = vrcp.pop %v626
    %v628 = vmul.f32 1.0, %v627
    %v629 = vadd.f32 %v297, %v619
    %v630 = vxor.u32 %v629, 2147483648
    %v631 = vmul.f32 %v630, 1.442695
    %v632 = vpow.pop %v631
    %v633 = vadd.f32 %v632, 1.0
    %v634 = vrcp.pop %v633
    %v635 = vmul.f32 1.0, %v634
    %v637 = vlaneseq
    %v638 = vshrl.u32 %v637, 7
    %v639 = vsub.s32 0, %v638
    %v640 = vrot.slane %v469, %v639
    %642 = vmatprep.subr.mxu0 0.0
    %643 = vmatpush1.msra.mxu0 %v465
    %644 = vmatprep.subr.mxu0 0.0
    %645 = vmatpush1.msra.mxu0 %v466
    %646 = vmatprep.subr.mxu0 0.0
    %647 = vmatpush1.msra.mxu0 %v467
    %648 = vmatprep.subr.mxu0 0.0
    %649 = vmatpush1.msra.mxu0 %v468
    %650 = vmatprep.subr.mxu0 0.0
    %651 = vmatpush1.msra.mxu0 0.0
    %652 = vmatprep.subr.mxu0 0.0
    %653 = vmatpush1.msra.mxu0 0.0
    %654 = vmatprep.subr.mxu0 0.0
    %655 = vmatpush1.msra.mxu0 0.0
    %656 = vmatprep.subr.mxu0 0.0
    %657 = vmatpush1.msra.mxu0 0.0
    %658 = vmatprep.subr.mxu0 0.0
    %659 = vmatpush1.msra.mxu0 0.0
    %660 = vmatprep.subr.mxu0 0.0
    %661 = vmatpush1.msra.mxu0 0.0
    %662 = vmatprep.subr.mxu0 0.0
    %663 = vmatpush1.msra.mxu0 0.0
    %664 = vmatprep.subr.mxu0 0.0
    %665 = vmatpush1.msra.mxu0 0.0
    %666 = vmatprep.subr.mxu0 0.0
    %667 = vmatpush1.msra.mxu0 0.0
    %668 = vmatprep.subr.mxu0 0.0
    %669 = vmatpush1.msra.mxu0 0.0
    %670 = vmatprep.subr.mxu0 0.0
    %671 = vmatpush1.msra.mxu0 0.0
    %672 = vmatprep.subr.mxu0 0.0
    %673 = vmatpush1.msra.mxu0 0.0
    %674 = vmatprep.subr.mxu0 0.0
    %675 = vmatpush1.msra.mxu0 0.0
    %676 = vmatprep.subr.mxu0 0.0
    %677 = vmatpush1.msra.mxu0 0.0
    %678 = vmatprep.subr.mxu0 0.0
    %679 = vmatpush1.msra.mxu0 0.0
    %680 = vmatprep.subr.mxu0 0.0
    %681 = vmatpush1.msra.mxu0 0.0
    %682 = vmatprep.subr.mxu0 0.0
    %683 = vmatpush1.msra.mxu0 0.0
    %684 = vmatprep.subr.mxu0 0.0
    %685 = vmatpush1.msra.mxu0 0.0
    %686 = vmatprep.subr.mxu0 0.0
    %687 = vmatpush1.msra.mxu0 0.0
    %688 = vmatprep.subr.mxu0 0.0
    %689 = vmatpush1.msra.mxu0 0.0
    %690 = vmatprep.subr.mxu0 0.0
    %691 = vmatpush1.msra.mxu0 0.0
    %692 = vmatprep.subr.mxu0 0.0
    %693 = vmatpush1.msra.mxu0 0.0
    %694 = vmatprep.subr.mxu0 0.0
    %695 = vmatpush1.msra.mxu0 0.0
    %696 = vmatprep.subr.mxu0 0.0
    %697 = vmatpush1.msra.mxu0 0.0
    %698 = vmatprep.subr.mxu0 0.0
    %699 = vmatpush1.msra.mxu0 0.0
    %700 = vmatprep.subr.mxu0 0.0
    %701 = vmatpush1.msra.mxu0 0.0
    %702 = vmatprep.subr.mxu0 0.0
    %703 = vmatpush1.msra.mxu0 0.0
    %704 = vmatprep.subr.mxu0 0.0
    %705 = vmatpush1.msra.mxu0 0.0
    %706 = vmatprep.mubr.f32.mxu0 0.0
    %707 = vmatmul.mubr.f32.gmra.mrb[0].mxu0 %v480
    %v708 = vpop.f32.mrb[0].mxu0
    %v709 = vadd.f32 %v640, %v708
    %v710 = vpop.f32.mrb[0].mxu0
    %711 = vdwg.mxu0
    %v712 = vmul.f32 %v628, %v709
    %v713 = vadd.f32 %v419, %v712
    %v714 = vtanh.pop %v713
    %v715 = vsub.f32 1.0, %v635
    %v716 = vmul.f32 %v715, %v714
    %v717 = vmul.f32 %v635, 0.0
    %v718 = vadd.f32 %v716, %v717
    %vm719 = vcmp.gt.f32.partialorder %v470, 0.0
    %v720 = vsel %vm719, 1, 0
    %721 = vset.pattern.permute.xlu0 0
    %722 = vperm.xlu0 %721, %v720
    %v723 = vpop.permute.xlu0 %722
    %vm724 = vcmp.eq.s32.totalorder %v723, 1
    %v725 = vsel %vm724, %v718, 0.0
    %v727 = vsel %vm478, %v725, 0
    %729 = vmatprep.subr.mxu0 0.0
    %730 = vmatpush1.msra.mxu0 %v457
    %731 = vmatprep.subr.mxu0 0.0
    %732 = vmatpush1.msra.mxu0 %v458
    %733 = vmatprep.subr.mxu0 0.0
    %734 = vmatpush1.msra.mxu0 %v459
    %735 = vmatprep.subr.mxu0 0.0
    %736 = vmatpush1.msra.mxu0 %v460
    %737 = vmatprep.subr.mxu0 0.0
    %738 = vmatpush1.msra.mxu0 0.0
    %739 = vmatprep.subr.mxu0 0.0
    %740 = vmatpush1.msra.mxu0 0.0
    %741 = vmatprep.subr.mxu0 0.0
    %742 = vmatpush1.msra.mxu0 0.0
    %743 = vmatprep.subr.mxu0 0.0
    %744 = vmatpush1.msra.mxu0 0.0
    %745 = vmatprep.subr.mxu0 0.0
    %746 = vmatpush1.msra.mxu0 0.0
    %747 = vmatprep.subr.mxu0 0.0
    %748 = vmatpush1.msra.mxu0 0.0
    %749 = vmatprep.subr.mxu0 0.0
    %750 = vmatpush1.msra.mxu0 0.0
    %751 = vmatprep.subr.mxu0 0.0
    %752 = vmatpush1.msra.mxu0 0.0
    %753 = vmatprep.subr.mxu0 0.0
    %754 = vmatpush1.msra.mxu0 0.0
    %755 = vmatprep.subr.mxu0 0.0
    %756 = vmatpush1.msra.mxu0 0.0
    %757 = vmatprep.subr.mxu0 0.0
    %758 = vmatpush1.msra.mxu0 0.0
    %759 = vmatprep.subr.mxu0 0.0
    %760 = vmatpush1.msra.mxu0 0.0
    %761 = vmatprep.subr.mxu0 0.0
    %762 = vmatpush1.msra.mxu0 0.0
    %763 = vmatprep.subr.mxu0 0.0
    %764 = vmatpush1.msra.mxu0 0.0
    %765 = vmatprep.subr.mxu0 0.0
    %766 = vmatpush1.msra.mxu0 0.0
    %767 = vmatprep.subr.mxu0 0.0
    %768 = vmatpush1.msra.mxu0 0.0
    %769 = vmatprep.subr.mxu0 0.0
    %770 = vmatpush1.msra.mxu0 0.0
    %771 = vmatprep.subr.mxu0 0.0
    %772 = vmatpush1.msra.mxu0 0.0
    %773 = vmatprep.subr.mxu0 0.0
    %774 = vmatpush1.msra.mxu0 0.0
    %775 = vmatprep.subr.mxu0 0.0
    %776 = vmatpush1.msra.mxu0 0.0
    %777 = vmatprep.subr.mxu0 0.0
    %778 = vmatpush1.msra.mxu0 0.0
    %779 = vmatprep.subr.mxu0 0.0
    %780 = vmatpush1.msra.mxu0 0.0
    %781 = vmatprep.subr.mxu0 0.0
    %782 = vmatpush1.msra.mxu0 0.0
    %783 = vmatprep.subr.mxu0 0.0
    %784 = vmatpush1.msra.mxu0 0.0
    %785 = vmatprep.subr.mxu0 0.0
    %786 = vmatpush1.msra.mxu0 0.0
    %787 = vmatprep.subr.mxu0 0.0
    %788 = vmatpush1.msra.mxu0 0.0
    %789 = vmatprep.subr.mxu0 0.0
    %790 = vmatpush1.msra.mxu0 0.0
    %791 = vmatprep.subr.mxu0 0.0
    %792 = vmatpush1.msra.mxu0 0.0
    %793 = vmatprep.mubr.f32.mxu0 0.0
    %794 = vmatmul.mubr.f32.gmra.mrb[0].mxu0 %v727
    %v795 = vpop.f32.mrb[0].mxu0
    %v796 = vadd.f32 0.0, %v795
    %v797 = vpop.f32.mrb[0].mxu0
    %798 = vdwg.mxu0
    %799 = vmatprep.subr.mxu0 0.0
    %800 = vmatpush1.msra.mxu0 %v461
    %801 = vmatprep.subr.mxu0 0.0
    %802 = vmatpush1.msra.mxu0 %v462
    %803 = vmatprep.subr.mxu0 0.0
    %804 = vmatpush1.msra.mxu0 %v463
    %805 = vmatprep.subr.mxu0 0.0
    %806 = vmatpush1.msra.mxu0 %v464
    %807 = vmatprep.subr.mxu0 0.0
    %808 = vmatpush1.msra.mxu0 0.0
    %809 = vmatprep.subr.mxu0 0.0
    %810 = vmatpush1.msra.mxu0 0.0
    %811 = vmatprep.subr.mxu0 0.0
    %812 = vmatpush1.msra.mxu0 0.0
    %813 = vmatprep.subr.mxu0 0.0
    %814 = vmatpush1.msra.mxu0 0.0
    %815 = vmatprep.subr.mxu0 0.0
    %816 = vmatpush1.msra.mxu0 0.0
    %817 = vmatprep.subr.mxu0 0.0
    %818 = vmatpush1.msra.mxu0 0.0
    %819 = vmatprep.subr.mxu0 0.0
    %820 = vmatpush1.msra.mxu0 0.0
    %821 = vmatprep.subr.mxu0 0.0
    %822 = vmatpush1.msra.mxu0 0.0
    %823 = vmatprep.subr.mxu0 0.0
    %824 = vmatpush1.msra.mxu0 0.0
    %825 = vmatprep.subr.mxu0 0.0
    %826 = vmatpush1.msra.mxu0 0.0
    %827 = vmatprep.subr.mxu0 0.0
    %828 = vmatpush1.msra.mxu0 0.0
    %829 = vmatprep.subr.mxu0 0.0
    %830 = vmatpush1.msra.mxu0 0.0
    %831 = vmatprep.subr.mxu0 0.0
    %832 = vmatpush1.msra.mxu0 0.0
    %833 = vmatprep.subr.mxu0 0.0
    %834 = vmatpush1.msra.mxu0 0.0
    %835 = vmatprep.subr.mxu0 0.0
    %836 = vmatpush1.msra.mxu0 0.0
    %837 = vmatprep.subr.mxu0 0.0
    %838 = vmatpush1.msra.mxu0 0.0
    %839 = vmatprep.subr.mxu0 0.0
    %840 = vmatpush1.msra.mxu0 0.0
    %841 = vmatprep.subr.mxu0 0.0
    %842 = vmatpush1.msra.mxu0 0.0
    %843 = vmatprep.subr.mxu0 0.0
    %844 = vmatpush1.msra.mxu0 0.0
    %845 = vmatprep.subr.mxu0 0.0
    %846 = vmatpush1.msra.mxu0 0.0
    %847 = vmatprep.subr.mxu0 0.0
    %848 = vmatpush1.msra.mxu0 0.0
    %849 = vmatprep.subr.mxu0 0.0
    %850 = vmatpush1.msra.mxu0 0.0
    %851 = vmatprep.subr.mxu0 0.0
    %852 = vmatpush1.msra.mxu0 0.0
    %853 = vmatprep.subr.mxu0 0.0
    %854 = vmatpush1.msra.mxu0 0.0
    %855 = vmatprep.subr.mxu0 0.0
    %856 = vmatpush1.msra.mxu0 0.0
    %857 = vmatprep.subr.mxu0 0.0
    %858 = vmatpush1.msra.mxu0 0.0
    %859 = vmatprep.subr.mxu0 0.0
    %860 = vmatpush1.msra.mxu0 0.0
    %861 = vmatprep.subr.mxu0 0.0
    %862 = vmatpush1.msra.mxu0 0.0
    %863 = vmatprep.mubr.f32.mxu0 0.0
    %864 = vmatmul.mubr.f32.gmra.mrb[0].mxu0 %v727
    %v865 = vpop.f32.mrb[0].mxu0
    %v866 = vadd.f32 0.0, %v865
    %v867 = vpop.f32.mrb[0].mxu0
    %868 = vdwg.mxu0
    %v869 = vadd.f32 %v180, %v796
    %v870 = vxor.u32 %v869, 2147483648
    %v871 = vmul.f32 %v870, 1.442695
    %v872 = vpow.pop %v871
    %v873 = vadd.f32 %v872, 1.0
    %v874 = vrcp.pop %v873
    %v875 = vmul.f32 1.0, %v874
    %v876 = vadd.f32 %v302, %v866
    %v877 = vxor.u32 %v876, 2147483648
    %v878 = vmul.f32 %v877, 1.442695
    %v879 = vpow.pop %v878
    %v880 = vadd.f32 %v879, 1.0
    %v881 = vrcp.pop %v880
    %v882 = vmul.f32 1.0, %v881
    %883 = vmatprep.subr.mxu0 0.0
    %884 = vmatpush1.msra.mxu0 %v465
    %885 = vmatprep.subr.mxu0 0.0
    %886 = vmatpush1.msra.mxu0 %v466
    %887 = vmatprep.subr.mxu0 0.0
    %888 = vmatpush1.msra.mxu0 %v467
    %889 = vmatprep.subr.mxu0 0.0
    %890 = vmatpush1.msra.mxu0 %v468
    %891 = vmatprep.subr.mxu0 0.0
    %892 = vmatpush1.msra.mxu0 0.0
    %893 = vmatprep.subr.mxu0 0.0
    %894 = vmatpush1.msra.mxu0 0.0
    %895 = vmatprep.subr.mxu0 0.0
    %896 = vmatpush1.msra.mxu0 0.0
    %897 = vmatprep.subr.mxu0 0.0
    %898 = vmatpush1.msra.mxu0 0.0
    %899 = vmatprep.subr.mxu0 0.0
    %900 = vmatpush1.msra.mxu0 0.0
    %901 = vmatprep.subr.mxu0 0.0
    %902 = vmatpush1.msra.mxu0 0.0
    %903 = vmatprep.subr.mxu0 0.0
    %904 = vmatpush1.msra.mxu0 0.0
    %905 = vmatprep.subr.mxu0 0.0
    %906 = vmatpush1.msra.mxu0 0.0
    %907 = vmatprep.subr.mxu0 0.0
    %908 = vmatpush1.msra.mxu0 0.0
    %909 = vmatprep.subr.mxu0 0.0
    %910 = vmatpush1.msra.mxu0 0.0
    %911 = vmatprep.subr.mxu0 0.0
    %912 = vmatpush1.msra.mxu0 0.0
    %913 = vmatprep.subr.mxu0 0.0
    %914 = vmatpush1.msra.mxu0 0.0
    %915 = vmatprep.subr.mxu0 0.0
    %916 = vmatpush1.msra.mxu0 0.0
    %917 = vmatprep.subr.mxu0 0.0
    %918 = vmatpush1.msra.mxu0 0.0
    %919 = vmatprep.subr.mxu0 0.0
    %920 = vmatpush1.msra.mxu0 0.0
    %921 = vmatprep.subr.mxu0 0.0
    %922 = vmatpush1.msra.mxu0 0.0
    %923 = vmatprep.subr.mxu0 0.0
    %924 = vmatpush1.msra.mxu0 0.0
    %925 = vmatprep.subr.mxu0 0.0
    %926 = vmatpush1.msra.mxu0 0.0
    %927 = vmatprep.subr.mxu0 0.0
    %928 = vmatpush1.msra.mxu0 0.0
    %929 = vmatprep.subr.mxu0 0.0
    %930 = vmatpush1.msra.mxu0 0.0
    %931 = vmatprep.subr.mxu0 0.0
    %932 = vmatpush1.msra.mxu0 0.0
    %933 = vmatprep.subr.mxu0 0.0
    %934 = vmatpush1.msra.mxu0 0.0
    %935 = vmatprep.subr.mxu0 0.0
    %936 = vmatpush1.msra.mxu0 0.0
    %937 = vmatprep.subr.mxu0 0.0
    %938 = vmatpush1.msra.mxu0 0.0
    %939 = vmatprep.subr.mxu0 0.0
    %940 = vmatpush1.msra.mxu0 0.0
    %941 = vmatprep.subr.mxu0 0.0
    %942 = vmatpush1.msra.mxu0 0.0
    %943 = vmatprep.subr.mxu0 0.0
    %944 = vmatpush1.msra.mxu0 0.0
    %945 = vmatprep.subr.mxu0 0.0
    %946 = vmatpush1.msra.mxu0 0.0
    %947 = vmatprep.mubr.f32.mxu0 0.0
    %948 = vmatmul.mubr.f32.gmra.mrb[0].mxu0 %v727
    %v949 = vpop.f32.mrb[0].mxu0
    %v950 = vadd.f32 %v640, %v949
    %v951 = vpop.f32.mrb[0].mxu0
    %952 = vdwg.mxu0
    %v953 = vmul.f32 %v875, %v950
    %v954 = vadd.f32 %v424, %v953
    %v955 = vtanh.pop %v954
    %v956 = vsub.f32 1.0, %v882
    %v957 = vmul.f32 %v956, %v955
    %v958 = vmul.f32 %v882, %v725
    %v959 = vadd.f32 %v957, %v958
    %vm960 = vcmp.gt.f32.partialorder %v471, 0.0
    %v961 = vsel %vm960, 1, 0
    %962 = vset.pattern.permute.xlu0 0
    %963 = vperm.xlu0 %962, %v961
    %v964 = vpop.permute.xlu0 %963
    %vm965 = vcmp.eq.s32.totalorder %v964, 1
    %v966 = vsel %vm965, %v959, %v725
    %v967 = vsel %vm965, %v959, 0.0
    %v969 = vsel %vm478, %v966, 0
    %971 = vmatprep.subr.mxu0 0.0
    %972 = vmatpush1.msra.mxu0 %v457
    %973 = vmatprep.subr.mxu0 0.0
    %974 = vmatpush1.msra.mxu0 %v458
    %975 = vmatprep.subr.mxu0 0.0
    %976 = vmatpush1.msra.mxu0 %v459
    %977 = vmatprep.subr.mxu0 0.0
    %978 = vmatpush1.msra.mxu0 %v460
    %979 = vmatprep.subr.mxu0 0.0
    %980 = vmatpush1.msra.mxu0 0.0
    %981 = vmatprep.subr.mxu0 0.0
    %982 = vmatpush1.msra.mxu0 0.0
    %983 = vmatprep.subr.mxu0 0.0
    %984 = vmatpush1.msra.mxu0 0.0
    %985 = vmatprep.subr.mxu0 0.0
    %986 = vmatpush1.msra.mxu0 0.0
    %987 = vmatprep.subr.mxu0 0.0
    %988 = vmatpush1.msra.mxu0 0.0
    %989 = vmatprep.subr.mxu0 0.0
    %990 = vmatpush1.msra.mxu0 0.0
    %991 = vmatprep.subr.mxu0 0.0
    %992 = vmatpush1.msra.mxu0 0.0
    %993 = vmatprep.subr.mxu0 0.0
    %994 = vmatpush1.msra.mxu0 0.0
    %995 = vmatprep.subr.mxu0 0.0
    %996 = vmatpush1.msra.mxu0 0.0
    %997 = vmatprep.subr.mxu0 0.0
    %998 = vmatpush1.msra.mxu0 0.0
    %999 = vmatprep.subr.mxu0 0.0
    %1000 = vmatpush1.msra.mxu0 0.0
    %1001 = vmatprep.subr.mxu0 0.0
    %1002 = vmatpush1.msra.mxu0 0.0
    %1003 = vmatprep.subr.mxu0 0.0
    %1004 = vmatpush1.msra.mxu0 0.0
    %1005 = vmatprep.subr.mxu0 0.0
    %1006 = vmatpush1.msra.mxu0 0.0
    %1007 = vmatprep.subr.mxu0 0.0
    %1008 = vmatpush1.msra.mxu0 0.0
    %1009 = vmatprep.subr.mxu0 0.0
    %1010 = vmatpush1.msra.mxu0 0.0
    %1011 = vmatprep.subr.mxu0 0.0
    %1012 = vmatpush1.msra.mxu0 0.0
    %1013 = vmatprep.subr.mxu0 0.0
    %1014 = vmatpush1.msra.mxu0 0.0
    %1015 = vmatprep.subr.mxu0 0.0
    %1016 = vmatpush1.msra.mxu0 0.0
    %1017 = vmatprep.subr.mxu0 0.0
    %1018 = vmatpush1.msra.mxu0 0.0
    %1019 = vmatprep.subr.mxu0 0.0
    %1020 = vmatpush1.msra.mxu0 0.0
    %1021 = vmatprep.subr.mxu0 0.0
    %1022 = vmatpush1.msra.mxu0 0.0
    %1023 = vmatprep.subr.mxu0 0.0
    %1024 = vmatpush1.msra.mxu0 0.0
    %1025 = vmatprep.subr.mxu0 0.0
    %1026 = vmatpush1.msra.mxu0 0.0
    %1027 = vmatprep.subr.mxu0 0.0
    %1028 = vmatpush1.msra.mxu0 0.0
    %1029 = vmatprep.subr.mxu0 0.0
    %1030 = vmatpush1.msra.mxu0 0.0
    %1031 = vmatprep.subr.mxu0 0.0
    %1032 = vmatpush1.msra.mxu0 0.0
    %1033 = vmatprep.subr.mxu0 0.0
    %1034 = vmatpush1.msra.mxu0 0.0
    %1035 = vmatprep.mubr.f32.mxu0 0.0
    %1036 = vmatmul.mubr.f32.gmra.mrb[0].mxu0 %v969
    %v1037 = vpop.f32.mrb[0].mxu0
    %v1038 = vadd.f32 0.0, %v1037
    %v1039 = vpop.f32.mrb[0].mxu0
    %1040 = vdwg.mxu0
    %1041 = vmatprep.subr.mxu0 0.0
    %1042 = vmatpush1.msra.mxu0 %v461
    %1043 = vmatprep.subr.mxu0 0.0
    %1044 = vmatpush1.msra.mxu0 %v462
    %1045 = vmatprep.subr.mxu0 0.0
    %1046 = vmatpush1.msra.mxu0 %v463
    %1047 = vmatprep.subr.mxu0 0.0
    %1048 = vmatpush1.msra.mxu0 %v464
    %1049 = vmatprep.subr.mxu0 0.0
    %1050 = vmatpush1.msra.mxu0 0.0
    %1051 = vmatprep.subr.mxu0 0.0
    %1052 = vmatpush1.msra.mxu0 0.0
    %1053 = vmatprep.subr.mxu0 0.0
    %1054 = vmatpush1.msra.mxu0 0.0
    %1055 = vmatprep.subr.mxu0 0.0
    %1056 = vmatpush1.msra.mxu0 0.0
    %1057 = vmatprep.subr.mxu0 0.0
    %1058 = vmatpush1.msra.mxu0 0.0
    %1059 = vmatprep.subr.mxu0 0.0
    %1060 = vmatpush1.msra.mxu0 0.0
    %1061 = vmatprep.subr.mxu0 0.0
    %1062 = vmatpush1.msra.mxu0 0.0
    %1063 = vmatprep.subr.mxu0 0.0
    %1064 = vmatpush1.msra.mxu0 0.0
    %1065 = vmatprep.subr.mxu0 0.0
    %1066 = vmatpush1.msra.mxu0 0.0
    %1067 = vmatprep.subr.mxu0 0.0
    %1068 = vmatpush1.msra.mxu0 0.0
    %1069 = vmatprep.subr.mxu0 0.0
    %1070 = vmatpush1.msra.mxu0 0.0
    %1071 = vmatprep.subr.mxu0 0.0
    %1072 = vmatpush1.msra.mxu0 0.0
    %1073 = vmatprep.subr.mxu0 0.0
    %1074 = vmatpush1.msra.mxu0 0.0
    %1075 = vmatprep.subr.mxu0 0.0
    %1076 = vmatpush1.msra.mxu0 0.0
    %1077 = vmatprep.subr.mxu0 0.0
    %1078 = vmatpush1.msra.mxu0 0.0
    %1079 = vmatprep.subr.mxu0 0.0
    %1080 = vmatpush1.msra.mxu0 0.0
    %1081 = vmatprep.subr.mxu0 0.0
    %1082 = vmatpush1.msra.mxu0 0.0
    %1083 = vmatprep.subr.mxu0 0.0
    %1084 = vmatpush1.msra.mxu0 0.0
    %1085 = vmatprep.subr.mxu0 0.0
    %1086 = vmatpush1.msra.mxu0 0.0
    %1087 = vmatprep.subr.mxu0 0.0
    %1088 = vmatpush1.msra.mxu0 0.0
    %1089 = vmatprep.subr.mxu0 0.0
    %1090 = vmatpush1.msra.mxu0 0.0
    %1091 = vmatprep.subr.mxu0 0.0
    %1092 = vmatpush1.msra.mxu0 0.0
    %1093 = vmatprep.subr.mxu0 0.0
    %1094 = vmatpush1.msra.mxu0 0.0
    %1095 = vmatprep.subr.mxu0 0.0
    %1096 = vmatpush1.msra.mxu0 0.0
    %1097 = vmatprep.subr.mxu0 0.0
    %1098 = vmatpush1.msra.mxu0 0.0
    %1099 = vmatprep.subr.mxu0 0.0
    %1100 = vmatpush1.msra.mxu0 0.0
    %1101 = vmatprep.subr.mxu0 0.0
    %1102 = vmatpush1.msra.mxu0 0.0
    %1103 = vmatprep.subr.mxu0 0.0
    %1104 = vmatpush1.msra.mxu0 0.0
    %1105 = vmatprep.mubr.f32.mxu0 0.0
    %1106 = vmatmul.mubr.f32.gmra.mrb[0].mxu0 %v969
    %v1107 = vpop.f32.mrb[0].mxu0
    %v1108 = vadd.f32 0.0, %v1107
    %v1109 = vpop.f32.mrb[0].mxu0
    %1110 = vdwg.mxu0
    %v1111 = vadd.f32 %v185, %v1038
    %v1112 = vxor.u32 %v1111, 2147483648
    %v1113 = vmul.f32 %v1112, 1.442695
    %v1114 = vpow.pop %v1113
    %v1115 = vadd.f32 %v1114, 1.0
    %v1116 = vrcp.pop %v1115
    %v1117 = vmul.f32 1.0, %v1116
    %v1118 = vadd.f32 %v307, %v1108
    %v1119 = vxor.u32 %v1118, 2147483648
    %v1120 = vmul.f32 %v1119, 1.442695
    %v1121 = vpow.pop %v1120
    %v1122 = vadd.f32 %v1121, 1.0
    %v1123 = vrcp.pop %v1122
    %v1124 = vmul.f32 1.0, %v1123
    %1125 = vmatprep.subr.mxu0 0.0
    %1126 = vmatpush1.msra.mxu0 %v465
    %1127 = vmatprep.subr.mxu0 0.0
    %1128 = vmatpush1.msra.mxu0 %v466
    %1129 = vmatprep.subr.mxu0 0.0
    %1130 = vmatpush1.msra.mxu0 %v467
    %1131 = vmatprep.subr.mxu0 0.0
    %1132 = vmatpush1.msra.mxu0 %v468
    %1133 = vmatprep.subr.mxu0 0.0
    %1134 = vmatpush1.msra.mxu0 0.0
    %1135 = vmatprep.subr.mxu0 0.0
    %1136 = vmatpush1.msra.mxu0 0.0
    %1137 = vmatprep.subr.mxu0 0.0
    %1138 = vmatpush1.msra.mxu0 0.0
    %1139 = vmatprep.subr.mxu0 0.0
    %1140 = vmatpush1.msra.mxu0 0.0
    %1141 = vmatprep.subr.mxu0 0.0
    %1142 = vmatpush1.msra.mxu0 0.0
    %1143 = vmatprep.subr.mxu0 0.0
    %1144 = vmatpush1.msra.mxu0 0.0
    %1145 = vmatprep.subr.mxu0 0.0
    %1146 = vmatpush1.msra.mxu0 0.0
    %1147 = vmatprep.subr.mxu0 0.0
    %1148 = vmatpush1.msra.mxu0 0.0
    %1149 = vmatprep.subr.mxu0 0.0
    %1150 = vmatpush1.msra.mxu0 0.0
    %1151 = vmatprep.subr.mxu0 0.0
    %1152 = vmatpush1.msra.mxu0 0.0
    %1153 = vmatprep.subr.mxu0 0.0
    %1154 = vmatpush1.msra.mxu0 0.0
    %1155 = vmatprep.subr.mxu0 0.0
    %1156 = vmatpush1.msra.mxu0 0.0
    %1157 = vmatprep.subr.mxu0 0.0
    %1158 = vmatpush1.msra.mxu0 0.0
    %1159 = vmatprep.subr.mxu0 0.0
    %1160 = vmatpush1.msra.mxu0 0.0
    %1161 = vmatprep.subr.mxu0 0.0
    %1162 = vmatpush1.msra.mxu0 0.0
    %1163 = vmatprep.subr.mxu0 0.0
    %1164 = vmatpush1.msra.mxu0 0.0
    %1165 = vmatprep.subr.mxu0 0.0
    %1166 = vmatpush1.msra.mxu0 0.0
    %1167 = vmatprep.subr.mxu0 0.0
    %1168 = vmatpush1.msra.mxu0 0.0
    %1169 = vmatprep.subr.mxu0 0.0
    %1170 = vmatpush1.msra.mxu0 0.0
    %1171 = vmatprep.subr.mxu0 0.0
    %1172 = vmatpush1.msra.mxu0 0.0
    %1173 = vmatprep.subr.mxu0 0.0
    %1174 = vmatpush1.msra.mxu0 0.0
    %1175 = vmatprep.subr.mxu0 0.0
    %1176 = vmatpush1.msra.mxu0 0.0
    %1177 = vmatprep.subr.mxu0 0.0
    %1178 = vmatpush1.msra.mxu0 0.0
    %1179 = vmatprep.subr.mxu0 0.0
    %1180 = vmatpush1.msra.mxu0 0.0
    %1181 = vmatprep.subr.mxu0 0.0
    %1182 = vmatpush1.msra.mxu0 0.0
    %1183 = vmatprep.subr.mxu0 0.0
    %1184 = vmatpush1.msra.mxu0 0.0
    %1185 = vmatprep.subr.mxu0 0.0
    %1186 = vmatpush1.msra.mxu0 0.0
    %1187 = vmatprep.subr.mxu0 0.0
    %1188 = vmatpush1.msra.mxu0 0.0
    %1189 = vmatprep.mubr.f32.mxu0 0.0
    %1190 = vmatmul.mubr.f32.gmra.mrb[0].mxu0 %v969
    %v1191 = vpop.f32.mrb[0].mxu0
    %v1192 = vadd.f32 %v640, %v1191
    %v1193 = vpop.f32.mrb[0].mxu0
    %1194 = vdwg.mxu0
    %v1195 = vmul.f32 %v1117, %v1192
    %v1196 = vadd.f32 %v429, %v1195
    %v1197 = vtanh.pop %v1196
    %v1198 = vsub.f32 1.0, %v1124
    %v1199 = vmul.f32 %v1198, %v1197
    %v1200 = vmul.f32 %v1124, %v966
    %v1201 = vadd.f32 %v1199, %v1200
    %vm1202 = vcmp.gt.f32.partialorder %v472, 0.0
    %v1203 = vsel %vm1202, 1, 0
    %1204 = vset.pattern.permute.xlu0 0
    %1205 = vperm.xlu0 %1204, %v1203
    %v1206 = vpop.permute.xlu0 %1205
    %vm1207 = vcmp.eq.s32.totalorder %v1206, 1
    %v1208 = vsel %vm1207, %v1201, %v966
    %v1209 = vsel %vm1207, %v1201, 0.0
    %v1211 = vsel %vm478, %v1208, 0
    %1213 = vmatprep.subr.mxu0 0.0
    %1214 = vmatpush1.msra.mxu0 %v457
    %1215 = vmatprep.subr.mxu0 0.0
    %1216 = vmatpush1.msra.mxu0 %v458
    %1217 = vmatprep.subr.mxu0 0.0
    %1218 = vmatpush1.msra.mxu0 %v459
    %1219 = vmatprep.subr.mxu0 0.0
    %1220 = vmatpush1.msra.mxu0 %v460
    %1221 = vmatprep.subr.mxu0 0.0
    %1222 = vmatpush1.msra.mxu0 0.0
    %1223 = vmatprep.subr.mxu0 0.0
    %1224 = vmatpush1.msra.mxu0 0.0
    %1225 = vmatprep.subr.mxu0 0.0
    %1226 = vmatpush1.msra.mxu0 0.0
    %1227 = vmatprep.subr.mxu0 0.0
    %1228 = vmatpush1.msra.mxu0 0.0
    %1229 = vmatprep.subr.mxu0 0.0
    %1230 = vmatpush1.msra.mxu0 0.0
    %1231 = vmatprep.subr.mxu0 0.0
    %1232 = vmatpush1.msra.mxu0 0.0
    %1233 = vmatprep.subr.mxu0 0.0
    %1234 = vmatpush1.msra.mxu0 0.0
    %1235 = vmatprep.subr.mxu0 0.0
    %1236 = vmatpush1.msra.mxu0 0.0
    %1237 = vmatprep.subr.mxu0 0.0
    %1238 = vmatpush1.msra.mxu0 0.0
    %1239 = vmatprep.subr.mxu0 0.0
    %1240 = vmatpush1.msra.mxu0 0.0
    %1241 = vmatprep.subr.mxu0 0.0
    %1242 = vmatpush1.msra.mxu0 0.0
    %1243 = vmatprep.subr.mxu0 0.0
    %1244 = vmatpush1.msra.mxu0 0.0
    %1245 = vmatprep.subr.mxu0 0.0
    %1246 = vmatpush1.msra.mxu0 0.0
    %1247 = vmatprep.subr.mxu0 0.0
    %1248 = vmatpush1.msra.mxu0 0.0
    %1249 = vmatprep.subr.mxu0 0.0
    %1250 = vmatpush1.msra.mxu0 0.0
    %1251 = vmatprep.subr.mxu0 0.0
    %1252 = vmatpush1.msra.mxu0 0.0
    %1253 = vmatprep.subr.mxu0 0.0
    %1254 = vmatpush1.msra.mxu0 0.0
    %1255 = vmatprep.subr.mxu0 0.0
    %1256 = vmatpush1.msra.mxu0 0.0
    %1257 = vmatprep.subr.mxu0 0.0
    %1258 = vmatpush1.msra.mxu0 0.0
    %1259 = vmatprep.subr.mxu0 0.0
    %1260 = vmatpush1.msra.mxu0 0.0
    %1261 = vmatprep.subr.mxu0 0.0
    %1262 = vmatpush1.msra.mxu0 0.0
    %1263 = vmatprep.subr.mxu0 0.0
    %1264 = vmatpush1.msra.mxu0 0.0
    %1265 = vmatprep.subr.mxu0 0.0
    %1266 = vmatpush1.msra.mxu0 0.0
    %1267 = vmatprep.subr.mxu0 0.0
    %1268 = vmatpush1.msra.mxu0 0.0
    %1269 = vmatprep.subr.mxu0 0.0
    %1270 = vmatpush1.msra.mxu0 0.0
    %1271 = vmatprep.subr.mxu0 0.0
    %1272 = vmatpush1.msra.mxu0 0.0
    %1273 = vmatprep.subr.mxu0 0.0
    %1274 = vmatpush1.msra.mxu0 0.0
    %1275 = vmatprep.subr.mxu0 0.0
    %1276 = vmatpush1.msra.mxu0 0.0
    %1277 = vmatprep.mubr.f32.mxu0 0.0
    %1278 = vmatmul.mubr.f32.gmra.mrb[0].mxu0 %v1211
    %v1279 = vpop.f32.mrb[0].mxu0
    %v1280 = vadd.f32 0.0, %v1279
    %v1281 = vpop.f32.mrb[0].mxu0
    %1282 = vdwg.mxu0
    %1283 = vmatprep.subr.mxu0 0.0
    %1284 = vmatpush1.msra.mxu0 %v461
    %1285 = vmatprep.subr.mxu0 0.0
    %1286 = vmatpush1.msra.mxu0 %v462
    %1287 = vmatprep.subr.mxu0 0.0
    %1288 = vmatpush1.msra.mxu0 %v463
    %1289 = vmatprep.subr.mxu0 0.0
    %1290 = vmatpush1.msra.mxu0 %v464
    %1291 = vmatprep.subr.mxu0 0.0
    %1292 = vmatpush1.msra.mxu0 0.0
    %1293 = vmatprep.subr.mxu0 0.0
    %1294 = vmatpush1.msra.mxu0 0.0
    %1295 = vmatprep.subr.mxu0 0.0
    %1296 = vmatpush1.msra.mxu0 0.0
    %1297 = vmatprep.subr.mxu0 0.0
    %1298 = vmatpush1.msra.mxu0 0.0
    %1299 = vmatprep.subr.mxu0 0.0
    %1300 = vmatpush1.msra.mxu0 0.0
    %1301 = vmatprep.subr.mxu0 0.0
    %1302 = vmatpush1.msra.mxu0 0.0
    %1303 = vmatprep.subr.mxu0 0.0
    %1304 = vmatpush1.msra.mxu0 0.0
    %1305 = vmatprep.subr.mxu0 0.0
    %1306 = vmatpush1.msra.mxu0 0.0
    %1307 = vmatprep.subr.mxu0 0.0
    %1308 = vmatpush1.msra.mxu0 0.0
    %1309 = vmatprep.subr.mxu0 0.0
    %1310 = vmatpush1.msra.mxu0 0.0
    %1311 = vmatprep.subr.mxu0 0.0
    %1312 = vmatpush1.msra.mxu0 0.0
    %1313 = vmatprep.subr.mxu0 0.0
    %1314 = vmatpush1.msra.mxu0 0.0
    %1315 = vmatprep.subr.mxu0 0.0
    %1316 = vmatpush1.msra.mxu0 0.0
    %1317 = vmatprep.subr.mxu0 0.0
    %1318 = vmatpush1.msra.mxu0 0.0
    %1319 = vmatprep.subr.mxu0 0.0
    %1320 = vmatpush1.msra.mxu0 0.0
    %1321 = vmatprep.subr.mxu0 0.0
    %1322 = vmatpush1.msra.mxu0 0.0
    %1323 = vmatprep.subr.mxu0 0.0
    %1324 = vmatpush1.msra.mxu0 0.0
    %1325 = vmatprep.subr.mxu0 0.0
    %1326 = vmatpush1.msra.mxu0 0.0
    %1327 = vmatprep.subr.mxu0 0.0
    %1328 = vmatpush1.msra.mxu0 0.0
    %1329 = vmatprep.subr.mxu0 0.0
    %1330 = vmatpush1.msra.mxu0 0.0
    %1331 = vmatprep.subr.mxu0 0.0
    %1332 = vmatpush1.msra.mxu0 0.0
    %1333 = vmatprep.subr.mxu0 0.0
    %1334 = vmatpush1.msra.mxu0 0.0
    %1335 = vmatprep.subr.mxu0 0.0
    %1336 = vmatpush1.msra.mxu0 0.0
    %1337 = vmatprep.subr.mxu0 0.0
    %1338 = vmatpush1.msra.mxu0 0.0
    %1339 = vmatprep.subr.mxu0 0.0
    %1340 = vmatpush1.msra.mxu0 0.0
    %1341 = vmatprep.subr.mxu0 0.0
    %1342 = vmatpush1.msra.mxu0 0.0
    %1343 = vmatprep.subr.mxu0 0.0
    %1344 = vmatpush1.msra.mxu0 0.0
    %1345 = vmatprep.subr.mxu0 0.0
    %1346 = vmatpush1.msra.mxu0 0.0
    %1347 = vmatprep.mubr.f32.mxu0 0.0
    %1348 = vmatmul.mubr.f32.gmra.mrb[0].mxu0 %v1211
    %v1349 = vpop.f32.mrb[0].mxu0
    %v1350 = vadd.f32 0.0, %v1349
    %v1351 = vpop.f32.mrb[0].mxu0
    %1352 = vdwg.mxu0
    %v1353 = vadd.f32 %v190, %v1280
    %v1354 = vxor.u32 %v1353, 2147483648
    %v1355 = vmul.f32 %v1354, 1.442695
    %v1356 = vpow.pop %v1355
    %v1357 = vadd.f32 %v1356, 1.0
    %v1358 = vrcp.pop %v1357
    %v1359 = vmul.f32 1.0, %v1358
    %v1360 = vadd.f32 %v312, %v1350
    %v1361 = vxor.u32 %v1360, 2147483648
    %v1362 = vmul.f32 %v1361, 1.442695
    %v1363 = vpow.pop %v1362
    %v1364 = vadd.f32 %v1363, 1.0
    %v1365 = vrcp.pop %v1364
    %v1366 = vmul.f32 1.0, %v1365
    %1367 = vmatprep.subr.mxu0 0.0
    %1368 = vmatpush1.msra.mxu0 %v465
    %1369 = vmatprep.subr.mxu0 0.0
    %1370 = vmatpush1.msra.mxu0 %v466
    %1371 = vmatprep.subr.mxu0 0.0
    %1372 = vmatpush1.msra.mxu0 %v467
    %1373 = vmatprep.subr.mxu0 0.0
    %1374 = vmatpush1.msra.mxu0 %v468
    %1375 = vmatprep.subr.mxu0 0.0
    %1376 = vmatpush1.msra.mxu0 0.0
    %1377 = vmatprep.subr.mxu0 0.0
    %1378 = vmatpush1.msra.mxu0 0.0
    %1379 = vmatprep.subr.mxu0 0.0
    %1380 = vmatpush1.msra.mxu0 0.0
    %1381 = vmatprep.subr.mxu0 0.0
    %1382 = vmatpush1.msra.mxu0 0.0
    %1383 = vmatprep.subr.mxu0 0.0
    %1384 = vmatpush1.msra.mxu0 0.0
    %1385 = vmatprep.subr.mxu0 0.0
    %1386 = vmatpush1.msra.mxu0 0.0
    %1387 = vmatprep.subr.mxu0 0.0
    %1388 = vmatpush1.msra.mxu0 0.0
    %1389 = vmatprep.subr.mxu0 0.0
    %1390 = vmatpush1.msra.mxu0 0.0
    %1391 = vmatprep.subr.mxu0 0.0
    %1392 = vmatpush1.msra.mxu0 0.0
    %1393 = vmatprep.subr.mxu0 0.0
    %1394 = vmatpush1.msra.mxu0 0.0
    %1395 = vmatprep.subr.mxu0 0.0
    %1396 = vmatpush1.msra.mxu0 0.0
    %1397 = vmatprep.subr.mxu0 0.0
    %1398 = vmatpush1.msra.mxu0 0.0
    %1399 = vmatprep.subr.mxu0 0.0
    %1400 = vmatpush1.msra.mxu0 0.0
    %1401 = vmatprep.subr.mxu0 0.0
    %1402 = vmatpush1.msra.mxu0 0.0
    %1403 = vmatprep.subr.mxu0 0.0
    %1404 = vmatpush1.msra.mxu0 0.0
    %1405 = vmatprep.subr.mxu0 0.0
    %1406 = vmatpush1.msra.mxu0 0.0
    %1407 = vmatprep.subr.mxu0 0.0
    %1408 = vmatpush1.msra.mxu0 0.0
    %1409 = vmatprep.subr.mxu0 0.0
    %1410 = vmatpush1.msra.mxu0 0.0
    %1411 = vmatprep.subr.mxu0 0.0
    %1412 = vmatpush1.msra.mxu0 0.0
    %1413 = vmatprep.subr.mxu0 0.0
    %1414 = vmatpush1.msra.mxu0 0.0
    %1415 = vmatprep.subr.mxu0 0.0
    %1416 = vmatpush1.msra.mxu0 0.0
    %1417 = vmatprep.subr.mxu0 0.0
    %1418 = vmatpush1.msra.mxu0 0.0
    %1419 = vmatprep.subr.mxu0 0.0
    %1420 = vmatpush1.msra.mxu0 0.0
    %1421 = vmatprep.subr.mxu0 0.0
    %1422 = vmatpush1.msra.mxu0 0.0
    %1423 = vmatprep.subr.mxu0 0.0
    %1424 = vmatpush1.msra.mxu0 0.0
    %1425 = vmatprep.subr.mxu0 0.0
    %1426 = vmatpush1.msra.mxu0 0.0
    %1427 = vmatprep.subr.mxu0 0.0
    %1428 = vmatpush1.msra.mxu0 0.0
    %1429 = vmatprep.subr.mxu0 0.0
    %1430 = vmatpush1.msra.mxu0 0.0
    %1431 = vmatprep.mubr.f32.mxu0 0.0
    %1432 = vmatmul.mubr.f32.gmra.mrb[0].mxu0 %v1211
    %v1433 = vpop.f32.mrb[0].mxu0
    %v1434 = vadd.f32 %v640, %v1433
    %v1435 = vpop.f32.mrb[0].mxu0
    %1436 = vdwg.mxu0
    %v1437 = vmul.f32 %v1359, %v1434
    %v1438 = vadd.f32 %v434, %v1437
    %v1439 = vtanh.pop %v1438
    %v1440 = vsub.f32 1.0, %v1366
    %v1441 = vmul.f32 %v1440, %v1439
    %v1442 = vmul.f32 %v1366, %v1208
    %v1443 = vadd.f32 %v1441, %v1442
    %vm1444 = vcmp.gt.f32.partialorder %v473, 0.0
    %v1445 = vsel %vm1444, 1, 0
    %1446 = vset.pattern.permute.xlu0 0
    %1447 = vperm.xlu0 %1446, %v1445
    %v1448 = vpop.permute.xlu0 %1447
    %vm1449 = vcmp.eq.s32.totalorder %v1448, 1
    %v1450 = vsel %vm1449, %v1443, %v1208
    %v1451 = vsel %vm1449, %v1443, 0.0
    %v1453 = vsel %vm478, %v1450, 0
    %1455 = vmatprep.subr.mxu0 0.0
    %1456 = vmatpush1.msra.mxu0 %v457
    %1457 = vmatprep.subr.mxu0 0.0
    %1458 = vmatpush1.msra.mxu0 %v458
    %1459 = vmatprep.subr.mxu0 0.0
    %1460 = vmatpush1.msra.mxu0 %v459
    %1461 = vmatprep.subr.mxu0 0.0
    %1462 = vmatpush1.msra.mxu0 %v460
    %1463 = vmatprep.subr.mxu0 0.0
    %1464 = vmatpush1.msra.mxu0 0.0
    %1465 = vmatprep.subr.mxu0 0.0
    %1466 = vmatpush1.msra.mxu0 0.0
    %1467 = vmatprep.subr.mxu0 0.0
    %1468 = vmatpush1.msra.mxu0 0.0
    %1469 = vmatprep.subr.mxu0 0.0
    %1470 = vmatpush1.msra.mxu0 0.0
    %1471 = vmatprep.subr.mxu0 0.0
    %1472 = vmatpush1.msra.mxu0 0.0
    %1473 = vmatprep.subr.mxu0 0.0
    %1474 = vmatpush1.msra.mxu0 0.0
    %1475 = vmatprep.subr.mxu0 0.0
    %1476 = vmatpush1.msra.mxu0 0.0
    %1477 = vmatprep.subr.mxu0 0.0
    %1478 = vmatpush1.msra.mxu0 0.0
    %1479 = vmatprep.subr.mxu0 0.0
    %1480 = vmatpush1.msra.mxu0 0.0
    %1481 = vmatprep.subr.mxu0 0.0
    %1482 = vmatpush1.msra.mxu0 0.0
    %1483 = vmatprep.subr.mxu0 0.0
    %1484 = vmatpush1.msra.mxu0 0.0
    %1485 = vmatprep.subr.mxu0 0.0
    %1486 = vmatpush1.msra.mxu0 0.0
    %1487 = vmatprep.subr.mxu0 0.0
    %1488 = vmatpush1.msra.mxu0 0.0
    %1489 = vmatprep.subr.mxu0 0.0
    %1490 = vmatpush1.msra.mxu0 0.0
    %1491 = vmatprep.subr.mxu0 0.0
    %1492 = vmatpush1.msra.mxu0 0.0
    %1493 = vmatprep.subr.mxu0 0.0
    %1494 = vmatpush1.msra.mxu0 0.0
    %1495 = vmatprep.subr.mxu0 0.0
    %1496 = vmatpush1.msra.mxu0 0.0
    %1497 = vmatprep.subr.mxu0 0.0
    %1498 = vmatpush1.msra.mxu0 0.0
    %1499 = vmatprep.subr.mxu0 0.0
    %1500 = vmatpush1.msra.mxu0 0.0
    %1501 = vmatprep.subr.mxu0 0.0
    %1502 = vmatpush1.msra.mxu0 0.0
    %1503 = vmatprep.subr.mxu0 0.0
    %1504 = vmatpush1.msra.mxu0 0.0
    %1505 = vmatprep.subr.mxu0 0.0
    %1506 = vmatpush1.msra.mxu0 0.0
    %1507 = vmatprep.subr.mxu0 0.0
    %1508 = vmatpush1.msra.mxu0 0.0
    %1509 = vmatprep.subr.mxu0 0.0
    %1510 = vmatpush1.msra.mxu0 0.0
    %1511 = vmatprep.subr.mxu0 0.0
    %1512 = vmatpush1.msra.mxu0 0.0
    %1513 = vmatprep.subr.mxu0 0.0
    %1514 = vmatpush1.msra.mxu0 0.0
    %1515 = vmatprep.subr.mxu0 0.0
    %1516 = vmatpush1.msra.mxu0 0.0
    %1517 = vmatprep.subr.mxu0 0.0
    %1518 = vmatpush1.msra.mxu0 0.0
    %1519 = vmatprep.mubr.f32.mxu0 0.0
    %1520 = vmatmul.mubr.f32.gmra.mrb[0].mxu0 %v1453
    %v1521 = vpop.f32.mrb[0].mxu0
    %v1522 = vadd.f32 0.0, %v1521
    %v1523 = vpop.f32.mrb[0].mxu0
    %1524 = vdwg.mxu0
    %1525 = vmatprep.subr.mxu0 0.0
    %1526 = vmatpush1.msra.mxu0 %v461
    %1527 = vmatprep.subr.mxu0 0.0
    %1528 = vmatpush1.msra.mxu0 %v462
    %1529 = vmatprep.subr.mxu0 0.0
    %1530 = vmatpush1.msra.mxu0 %v463
    %1531 = vmatprep.subr.mxu0 0.0
    %1532 = vmatpush1.msra.mxu0 %v464
    %1533 = vmatprep.subr.mxu0 0.0
    %1534 = vmatpush1.msra.mxu0 0.0
    %1535 = vmatprep.subr.mxu0 0.0
    %1536 = vmatpush1.msra.mxu0 0.0
    %1537 = vmatprep.subr.mxu0 0.0
    %1538 = vmatpush1.msra.mxu0 0.0
    %1539 = vmatprep.subr.mxu0 0.0
    %1540 = vmatpush1.msra.mxu0 0.0
    %1541 = vmatprep.subr.mxu0 0.0
    %1542 = vmatpush1.msra.mxu0 0.0
    %1543 = vmatprep.subr.mxu0 0.0
    %1544 = vmatpush1.msra.mxu0 0.0
    %1545 = vmatprep.subr.mxu0 0.0
    %1546 = vmatpush1.msra.mxu0 0.0
    %1547 = vmatprep.subr.mxu0 0.0
    %1548 = vmatpush1.msra.mxu0 0.0
    %1549 = vmatprep.subr.mxu0 0.0
    %1550 = vmatpush1.msra.mxu0 0.0
    %1551 = vmatprep.subr.mxu0 0.0
    %1552 = vmatpush1.msra.mxu0 0.0
    %1553 = vmatprep.subr.mxu0 0.0
    %1554 = vmatpush1.msra.mxu0 0.0
    %1555 = vmatprep.subr.mxu0 0.0
    %1556 = vmatpush1.msra.mxu0 0.0
    %1557 = vmatprep.subr.mxu0 0.0
    %1558 = vmatpush1.msra.mxu0 0.0
    %1559 = vmatprep.subr.mxu0 0.0
    %1560 = vmatpush1.msra.mxu0 0.0
    %1561 = vmatprep.subr.mxu0 0.0
    %1562 = vmatpush1.msra.mxu0 0.0
    %1563 = vmatprep.subr.mxu0 0.0
    %1564 = vmatpush1.msra.mxu0 0.0
    %1565 = vmatprep.subr.mxu0 0.0
    %1566 = vmatpush1.msra.mxu0 0.0
    %1567 = vmatprep.subr.mxu0 0.0
    %1568 = vmatpush1.msra.mxu0 0.0
    %1569 = vmatprep.subr.mxu0 0.0
    %1570 = vmatpush1.msra.mxu0 0.0
    %1571 = vmatprep.subr.mxu0 0.0
    %1572 = vmatpush1.msra.mxu0 0.0
    %1573 = vmatprep.subr.mxu0 0.0
    %1574 = vmatpush1.msra.mxu0 0.0
    %1575 = vmatprep.subr.mxu0 0.0
    %1576 = vmatpush1.msra.mxu0 0.0
    %1577 = vmatprep.subr.mxu0 0.0
    %1578 = vmatpush1.msra.mxu0 0.0
    %1579 = vmatprep.subr.mxu0 0.0
    %1580 = vmatpush1.msra.mxu0 0.0
    %1581 = vmatprep.subr.mxu0 0.0
    %1582 = vmatpush1.msra.mxu0 0.0
    %1583 = vmatprep.subr.mxu0 0.0
    %1584 = vmatpush1.msra.mxu0 0.0
    %1585 = vmatprep.subr.mxu0 0.0
    %1586 = vmatpush1.msra.mxu0 0.0
    %1587 = vmatprep.subr.mxu0 0.0
    %1588 = vmatpush1.msra.mxu0 0.0
    %1589 = vmatprep.mubr.f32.mxu0 0.0
    %1590 = vmatmul.mubr.f32.gmra.mrb[0].mxu0 %v1453
    %v1591 = vpop.f32.mrb[0].mxu0
    %v1592 = vadd.f32 0.0, %v1591
    %v1593 = vpop.f32.mrb[0].mxu0
    %1594 = vdwg.mxu0
    %v1595 = vadd.f32 %v195, %v1522
    %v1596 = vxor.u32 %v1595, 2147483648
    %v1597 = vmul.f32 %v1596, 1.442695
    %v1598 = vpow.pop %v1597
    %v1599 = vadd.f32 %v1598, 1.0
    %v1600 = vrcp.pop %v1599
    %v1601 = vmul.f32 1.0, %v1600
    %v1602 = vadd.f32 %v317, %v1592
    %v1603 = vxor.u32 %v1602, 2147483648
    %v1604 = vmul.f32 %v1603, 1.442695
    %v1605 = vpow.pop %v1604
    %v1606 = vadd.f32 %v1605, 1.0
    %v1607 = vrcp.pop %v1606
    %v1608 = vmul.f32 1.0, %v1607
    %1609 = vmatprep.subr.mxu0 0.0
    %1610 = vmatpush1.msra.mxu0 %v465
    %1611 = vmatprep.subr.mxu0 0.0
    %1612 = vmatpush1.msra.mxu0 %v466
    %1613 = vmatprep.subr.mxu0 0.0
    %1614 = vmatpush1.msra.mxu0 %v467
    %1615 = vmatprep.subr.mxu0 0.0
    %1616 = vmatpush1.msra.mxu0 %v468
    %1617 = vmatprep.subr.mxu0 0.0
    %1618 = vmatpush1.msra.mxu0 0.0
    %1619 = vmatprep.subr.mxu0 0.0
    %1620 = vmatpush1.msra.mxu0 0.0
    %1621 = vmatprep.subr.mxu0 0.0
    %1622 = vmatpush1.msra.mxu0 0.0
    %1623 = vmatprep.subr.mxu0 0.0
    %1624 = vmatpush1.msra.mxu0 0.0
    %1625 = vmatprep.subr.mxu0 0.0
    %1626 = vmatpush1.msra.mxu0 0.0
    %1627 = vmatprep.subr.mxu0 0.0
    %1628 = vmatpush1.msra.mxu0 0.0
    %1629 = vmatprep.subr.mxu0 0.0
    %1630 = vmatpush1.msra.mxu0 0.0
    %1631 = vmatprep.subr.mxu0 0.0
    %1632 = vmatpush1.msra.mxu0 0.0
    %1633 = vmatprep.subr.mxu0 0.0
    %1634 = vmatpush1.msra.mxu0 0.0
    %1635 = vmatprep.subr.mxu0 0.0
    %1636 = vmatpush1.msra.mxu0 0.0
    %1637 = vmatprep.subr.mxu0 0.0
    %1638 = vmatpush1.msra.mxu0 0.0
    %1639 = vmatprep.subr.mxu0 0.0
    %1640 = vmatpush1.msra.mxu0 0.0
    %1641 = vmatprep.subr.mxu0 0.0
    %1642 = vmatpush1.msra.mxu0 0.0
    %1643 = vmatprep.subr.mxu0 0.0
    %1644 = vmatpush1.msra.mxu0 0.0
    %1645 = vmatprep.subr.mxu0 0.0
    %1646 = vmatpush1.msra.mxu0 0.0
    %1647 = vmatprep.subr.mxu0 0.0
    %1648 = vmatpush1.msra.mxu0 0.0
    %1649 = vmatprep.subr.mxu0 0.0
    %1650 = vmatpush1.msra.mxu0 0.0
    %1651 = vmatprep.subr.mxu0 0.0
    %1652 = vmatpush1.msra.mxu0 0.0
    %1653 = vmatprep.subr.mxu0 0.0
    %1654 = vmatpush1.msra.mxu0 0.0
    %1655 = vmatprep.subr.mxu0 0.0
    %1656 = vmatpush1.msra.mxu0 0.0
    %1657 = vmatprep.subr.mxu0 0.0
    %1658 = vmatpush1.msra.mxu0 0.0
    %1659 = vmatprep.subr.mxu0 0.0
    %1660 = vmatpush1.msra.mxu0 0.0
    %1661 = vmatprep.subr.mxu0 0.0
    %1662 = vmatpush1.msra.mxu0 0.0
    %1663 = vmatprep.subr.mxu0 0.0
    %1664 = vmatpush1.msra.mxu0 0.0
    %1665 = vmatprep.subr.mxu0 0.0
    %1666 = vmatpush1.msra.mxu0 0.0
    %1667 = vmatprep.subr.mxu0 0.0
    %1668 = vmatpush1.msra.mxu0 0.0
    %1669 = vmatprep.subr.mxu0 0.0
    %1670 = vmatpush1.msra.mxu0 0.0
    %1671 = vmatprep.subr.mxu0 0.0
    %1672 = vmatpush1.msra.mxu0 0.0
    %1673 = vmatprep.mubr.f32.mxu0 0.0
    %1674 = vmatmul.mubr.f32.gmra.mrb[0].mxu0 %v1453
    %v1675 = vpop.f32.mrb[0].mxu0
    %v1676 = vadd.f32 %v640, %v1675
    %v1677 = vpop.f32.mrb[0].mxu0
    %1678 = vdwg.mxu0
    %v1679 = vmul.f32 %v1601, %v1676
    %v1680 = vadd.f32 %v439, %v1679
    %v1681 = vtanh.pop %v1680
    %v1682 = vsub.f32 1.0, %v1608
    %v1683 = vmul.f32 %v1682, %v1681
    %v1684 = vmul.f32 %v1608, %v1450
    %v1685 = vadd.f32 %v1683, %v1684
    %vm1686 = vcmp.gt.f32.partialorder %v474, 0.0
    %v1687 = vsel %vm1686, 1, 0
    %1688 = vset.pattern.permute.xlu0 0
    %1689 = vperm.xlu0 %1688, %v1687
    %v1690 = vpop.permute.xlu0 %1689
    %vm1691 = vcmp.eq.s32.totalorder %v1690, 1
    %v1692 = vsel %vm1691, %v1685, %v1450
    %v1693 = vsel %vm1691, %v1685, 0.0
    %v1695 = vsel %vm478, %v1692, 0
    %1697 = vmatprep.subr.mxu0 0.0
    %1698 = vmatpush1.msra.mxu0 %v457
    %1699 = vmatprep.subr.mxu0 0.0
    %1700 = vmatpush1.msra.mxu0 %v458
    %1701 = vmatprep.subr.mxu0 0.0
    %1702 = vmatpush1.msra.mxu0 %v459
    %1703 = vmatprep.subr.mxu0 0.0
    %1704 = vmatpush1.msra.mxu0 %v460
    %1705 = vmatprep.subr.mxu0 0.0
    %1706 = vmatpush1.msra.mxu0 0.0
    %1707 = vmatprep.subr.mxu0 0.0
    %1708 = vmatpush1.msra.mxu0 0.0
    %1709 = vmatprep.subr.mxu0 0.0
    %1710 = vmatpush1.msra.mxu0 0.0
    %1711 = vmatprep.subr.mxu0 0.0
    %1712 = vmatpush1.msra.mxu0 0.0
    %1713 = vmatprep.subr.mxu0 0.0
    %1714 = vmatpush1.msra.mxu0 0.0
    %1715 = vmatprep.subr.mxu0 0.0
    %1716 = vmatpush1.msra.mxu0 0.0
    %1717 = vmatprep.subr.mxu0 0.0
    %1718 = vmatpush1.msra.mxu0 0.0
    %1719 = vmatprep.subr.mxu0 0.0
    %1720 = vmatpush1.msra.mxu0 0.0
    %1721 = vmatprep.subr.mxu0 0.0
    %1722 = vmatpush1.msra.mxu0 0.0
    %1723 = vmatprep.subr.mxu0 0.0
    %1724 = vmatpush1.msra.mxu0 0.0
    %1725 = vmatprep.subr.mxu0 0.0
    %1726 = vmatpush1.msra.mxu0 0.0
    %1727 = vmatprep.subr.mxu0 0.0
    %1728 = vmatpush1.msra.mxu0 0.0
    %1729 = vmatprep.subr.mxu0 0.0
    %1730 = vmatpush1.msra.mxu0 0.0
    %1731 = vmatprep.subr.mxu0 0.0
    %1732 = vmatpush1.msra.mxu0 0.0
    %1733 = vmatprep.subr.mxu0 0.0
    %1734 = vmatpush1.msra.mxu0 0.0
    %1735 = vmatprep.subr.mxu0 0.0
    %1736 = vmatpush1.msra.mxu0 0.0
    %1737 = vmatprep.subr.mxu0 0.0
    %1738 = vmatpush1.msra.mxu0 0.0
    %1739 = vmatprep.subr.mxu0 0.0
    %1740 = vmatpush1.msra.mxu0 0.0
    %1741 = vmatprep.subr.mxu0 0.0
    %1742 = vmatpush1.msra.mxu0 0.0
    %1743 = vmatprep.subr.mxu0 0.0
    %1744 = vmatpush1.msra.mxu0 0.0
    %1745 = vmatprep.subr.mxu0 0.0
    %1746 = vmatpush1.msra.mxu0 0.0
    %1747 = vmatprep.subr.mxu0 0.0
    %1748 = vmatpush1.msra.mxu0 0.0
    %1749 = vmatprep.subr.mxu0 0.0
    %1750 = vmatpush1.msra.mxu0 0.0
    %1751 = vmatprep.subr.mxu0 0.0
    %1752 = vmatpush1.msra.mxu0 0.0
    %1753 = vmatprep.subr.mxu0 0.0
    %1754 = vmatpush1.msra.mxu0 0.0
    %1755 = vmatprep.subr.mxu0 0.0
    %1756 = vmatpush1.msra.mxu0 0.0
    %1757 = vmatprep.subr.mxu0 0.0
    %1758 = vmatpush1.msra.mxu0 0.0
    %1759 = vmatprep.subr.mxu0 0.0
    %1760 = vmatpush1.msra.mxu0 0.0
    %1761 = vmatprep.mubr.f32.mxu0 0.0
    %1762 = vmatmul.mubr.f32.gmra.mrb[0].mxu0 %v1695
    %v1763 = vpop.f32.mrb[0].mxu0
    %v1764 = vadd.f32 0.0, %v1763
    %v1765 = vpop.f32.mrb[0].mxu0
    %1766 = vdwg.mxu0
    %1767 = vmatprep.subr.mxu0 0.0
    %1768 = vmatpush1.msra.mxu0 %v461
    %1769 = vmatprep.subr.mxu0 0.0
    %1770 = vmatpush1.msra.mxu0 %v462
    %1771 = vmatprep.subr.mxu0 0.0
    %1772 = vmatpush1.msra.mxu0 %v463
    %1773 = vmatprep.subr.mxu0 0.0
    %1774 = vmatpush1.msra.mxu0 %v464
    %1775 = vmatprep.subr.mxu0 0.0
    %1776 = vmatpush1.msra.mxu0 0.0
    %1777 = vmatprep.subr.mxu0 0.0
    %1778 = vmatpush1.msra.mxu0 0.0
    %1779 = vmatprep.subr.mxu0 0.0
    %1780 = vmatpush1.msra.mxu0 0.0
    %1781 = vmatprep.subr.mxu0 0.0
    %1782 = vmatpush1.msra.mxu0 0.0
    %1783 = vmatprep.subr.mxu0 0.0
    %1784 = vmatpush1.msra.mxu0 0.0
    %1785 = vmatprep.subr.mxu0 0.0
    %1786 = vmatpush1.msra.mxu0 0.0
    %1787 = vmatprep.subr.mxu0 0.0
    %1788 = vmatpush1.msra.mxu0 0.0
    %1789 = vmatprep.subr.mxu0 0.0
    %1790 = vmatpush1.msra.mxu0 0.0
    %1791 = vmatprep.subr.mxu0 0.0
    %1792 = vmatpush1.msra.mxu0 0.0
    %1793 = vmatprep.subr.mxu0 0.0
    %1794 = vmatpush1.msra.mxu0 0.0
    %1795 = vmatprep.subr.mxu0 0.0
    %1796 = vmatpush1.msra.mxu0 0.0
    %1797 = vmatprep.subr.mxu0 0.0
    %1798 = vmatpush1.msra.mxu0 0.0
    %1799 = vmatprep.subr.mxu0 0.0
    %1800 = vmatpush1.msra.mxu0 0.0
    %1801 = vmatprep.subr.mxu0 0.0
    %1802 = vmatpush1.msra.mxu0 0.0
    %1803 = vmatprep.subr.mxu0 0.0
    %1804 = vmatpush1.msra.mxu0 0.0
    %1805 = vmatprep.subr.mxu0 0.0
    %1806 = vmatpush1.msra.mxu0 0.0
    %1807 = vmatprep.subr.mxu0 0.0
    %1808 = vmatpush1.msra.mxu0 0.0
    %1809 = vmatprep.subr.mxu0 0.0
    %1810 = vmatpush1.msra.mxu0 0.0
    %1811 = vmatprep.subr.mxu0 0.0
    %1812 = vmatpush1.msra.mxu0 0.0
    %1813 = vmatprep.subr.mxu0 0.0
    %1814 = vmatpush1.msra.mxu0 0.0
    %1815 = vmatprep.subr.mxu0 0.0
    %1816 = vmatpush1.msra.mxu0 0.0
    %1817 = vmatprep.subr.mxu0 0.0
    %1818 = vmatpush1.msra.mxu0 0.0
    %1819 = vmatprep.subr.mxu0 0.0
    %1820 = vmatpush1.msra.mxu0 0.0
    %1821 = vmatprep.subr.mxu0 0.0
    %1822 = vmatpush1.msra.mxu0 0.0
    %1823 = vmatprep.subr.mxu0 0.0
    %1824 = vmatpush1.msra.mxu0 0.0
    %1825 = vmatprep.subr.mxu0 0.0
    %1826 = vmatpush1.msra.mxu0 0.0
    %1827 = vmatprep.subr.mxu0 0.0
    %1828 = vmatpush1.msra.mxu0 0.0
    %1829 = vmatprep.subr.mxu0 0.0
    %1830 = vmatpush1.msra.mxu0 0.0
    %1831 = vmatprep.mubr.f32.mxu0 0.0
    %1832 = vmatmul.mubr.f32.gmra.mrb[0].mxu0 %v1695
    %v1833 = vpop.f32.mrb[0].mxu0
    %v1834 = vadd.f32 0.0, %v1833
    %v1835 = vpop.f32.mrb[0].mxu0
    %1836 = vdwg.mxu0
    %v1837 = vadd.f32 %v200, %v1764
    %v1838 = vxor.u32 %v1837, 2147483648
    %v1839 = vmul.f32 %v1838, 1.442695
    %v1840 = vpow.pop %v1839
    %v1841 = vadd.f32 %v1840, 1.0
    %v1842 = vrcp.pop %v1841
    %v1843 = vmul.f32 1.0, %v1842
    %v1844 = vadd.f32 %v322, %v1834
    %v1845 = vxor.u32 %v1844, 2147483648
    %v1846 = vmul.f32 %v1845, 1.442695
    %v1847 = vpow.pop %v1846
    %v1848 = vadd.f32 %v1847, 1.0
    %v1849 = vrcp.pop %v1848
    %v1850 = vmul.f32 1.0, %v1849
    %1851 = vmatprep.subr.mxu0 0.0
    %1852 = vmatpush1.msra.mxu0 %v465
    %1853 = vmatprep.subr.mxu0 0.0
    %1854 = vmatpush1.msra.mxu0 %v466
    %1855 = vmatprep.subr.mxu0 0.0
    %1856 = vmatpush1.msra.mxu0 %v467
    %1857 = vmatprep.subr.mxu0 0.0
    %1858 = vmatpush1.msra.mxu0 %v468
    %1859 = vmatprep.subr.mxu0 0.0
    %1860 = vmatpush1.msra.mxu0 0.0
    %1861 = vmatprep.subr.mxu0 0.0
    %1862 = vmatpush1.msra.mxu0 0.0
    %1863 = vmatprep.subr.mxu0 0.0
    %1864 = vmatpush1.msra.mxu0 0.0
    %1865 = vmatprep.subr.mxu0 0.0
    %1866 = vmatpush1.msra.mxu0 0.0
    %1867 = vmatprep.subr.mxu0 0.0
    %1868 = vmatpush1.msra.mxu0 0.0
    %1869 = vmatprep.subr.mxu0 0.0
    %1870 = vmatpush1.msra.mxu0 0.0
    %1871 = vmatprep.subr.mxu0 0.0
    %1872 = vmatpush1.msra.mxu0 0.0
    %1873 = vmatprep.subr.mxu0 0.0
    %1874 = vmatpush1.msra.mxu0 0.0
    %1875 = vmatprep.subr.mxu0 0.0
    %1876 = vmatpush1.msra.mxu0 0.0
    %1877 = vmatprep.subr.mxu0 0.0
    %1878 = vmatpush1.msra.mxu0 0.0
    %1879 = vmatprep.subr.mxu0 0.0
    %1880 = vmatpush1.msra.mxu0 0.0
    %1881 = vmatprep.subr.mxu0 0.0
    %1882 = vmatpush1.msra.mxu0 0.0
    %1883 = vmatprep.subr.mxu0 0.0
    %1884 = vmatpush1.msra.mxu0 0.0
    %1885 = vmatprep.subr.mxu0 0.0
    %1886 = vmatpush1.msra.mxu0 0.0
    %1887 = vmatprep.subr.mxu0 0.0
    %1888 = vmatpush1.msra.mxu0 0.0
    %1889 = vmatprep.subr.mxu0 0.0
    %1890 = vmatpush1.msra.mxu0 0.0
    %1891 = vmatprep.subr.mxu0 0.0
    %1892 = vmatpush1.msra.mxu0 0.0
    %1893 = vmatprep.subr.mxu0 0.0
    %1894 = vmatpush1.msra.mxu0 0.0
    %1895 = vmatprep.subr.mxu0 0.0
    %1896 = vmatpush1.msra.mxu0 0.0
    %1897 = vmatprep.subr.mxu0 0.0
    %1898 = vmatpush1.msra.mxu0 0.0
    %1899 = vmatprep.subr.mxu0 0.0
    %1900 = vmatpush1.msra.mxu0 0.0
    %1901 = vmatprep.subr.mxu0 0.0
    %1902 = vmatpush1.msra.mxu0 0.0
    %1903 = vmatprep.subr.mxu0 0.0
    %1904 = vmatpush1.msra.mxu0 0.0
    %1905 = vmatprep.subr.mxu0 0.0
    %1906 = vmatpush1.msra.mxu0 0.0
    %1907 = vmatprep.subr.mxu0 0.0
    %1908 = vmatpush1.msra.mxu0 0.0
    %1909 = vmatprep.subr.mxu0 0.0
    %1910 = vmatpush1.msra.mxu0 0.0
    %1911 = vmatprep.subr.mxu0 0.0
    %1912 = vmatpush1.msra.mxu0 0.0
    %1913 = vmatprep.subr.mxu0 0.0
    %1914 = vmatpush1.msra.mxu0 0.0
    %1915 = vmatprep.mubr.f32.mxu0 0.0
    %1916 = vmatmul.mubr.f32.gmra.mrb[0].mxu0 %v1695
    %v1917 = vpop.f32.mrb[0].mxu0
    %v1918 = vadd.f32 %v640, %v1917
    %v1919 = vpop.f32.mrb[0].mxu0
    %1920 = vdwg.mxu0
    %v1921 = vmul.f32 %v1843, %v1918
    %v1922 = vadd.f32 %v444, %v1921
    %v1923 = vtanh.pop %v1922
    %v1924 = vsub.f32 1.0, %v1850
    %v1925 = vmul.f32 %v1924, %v1923
    %v1926 = vmul.f32 %v1850, %v1692
    %v1927 = vadd.f32 %v1925, %v1926
    %vm1928 = vcmp.gt.f32.partialorder %v475, 0.0
    %v1929 = vsel %vm1928, 1, 0
    %1930 = vset.pattern.permute.xlu0 0
    %1931 = vperm.xlu0 %1930, %v1929
    %v1932 = vpop.permute.xlu0 %1931
    %vm1933 = vcmp.eq.s32.totalorder %v1932, 1
    %v1934 = vsel %vm1933, %v1927, %v1692
    %v1935 = vsel %vm1933, %v1927, 0.0
    %v1937 = vsel %vm478, %v1934, 0
    %1939 = vmatprep.subr.mxu0 0.0
    %1940 = vmatpush1.msra.mxu0 %v457
    %1941 = vmatprep.subr.mxu0 0.0
    %1942 = vmatpush1.msra.mxu0 %v458
    %1943 = vmatprep.subr.mxu0 0.0
    %1944 = vmatpush1.msra.mxu0 %v459
    %1945 = vmatprep.subr.mxu0 0.0
    %1946 = vmatpush1.msra.mxu0 %v460
    %1947 = vmatprep.subr.mxu0 0.0
    %1948 = vmatpush1.msra.mxu0 0.0
    %1949 = vmatprep.subr.mxu0 0.0
    %1950 = vmatpush1.msra.mxu0 0.0
    %1951 = vmatprep.subr.mxu0 0.0
    %1952 = vmatpush1.msra.mxu0 0.0
    %1953 = vmatprep.subr.mxu0 0.0
    %1954 = vmatpush1.msra.mxu0 0.0
    %1955 = vmatprep.subr.mxu0 0.0
    %1956 = vmatpush1.msra.mxu0 0.0
    %1957 = vmatprep.subr.mxu0 0.0
    %1958 = vmatpush1.msra.mxu0 0.0
    %1959 = vmatprep.subr.mxu0 0.0
    %1960 = vmatpush1.msra.mxu0 0.0
    %1961 = vmatprep.subr.mxu0 0.0
    %1962 = vmatpush1.msra.mxu0 0.0
    %1963 = vmatprep.subr.mxu0 0.0
    %1964 = vmatpush1.msra.mxu0 0.0
    %1965 = vmatprep.subr.mxu0 0.0
    %1966 = vmatpush1.msra.mxu0 0.0
    %1967 = vmatprep.subr.mxu0 0.0
    %1968 = vmatpush1.msra.mxu0 0.0
    %1969 = vmatprep.subr.mxu0 0.0
    %1970 = vmatpush1.msra.mxu0 0.0
    %1971 = vmatprep.subr.mxu0 0.0
    %1972 = vmatpush1.msra.mxu0 0.0
    %1973 = vmatprep.subr.mxu0 0.0
    %1974 = vmatpush1.msra.mxu0 0.0
    %1975 = vmatprep.subr.mxu0 0.0
    %1976 = vmatpush1.msra.mxu0 0.0
    %1977 = vmatprep.subr.mxu0 0.0
    %1978 = vmatpush1.msra.mxu0 0.0
    %1979 = vmatprep.subr.mxu0 0.0
    %1980 = vmatpush1.msra.mxu0 0.0
    %1981 = vmatprep.subr.mxu0 0.0
    %1982 = vmatpush1.msra.mxu0 0.0
    %1983 = vmatprep.subr.mxu0 0.0
    %1984 = vmatpush1.msra.mxu0 0.0
    %1985 = vmatprep.subr.mxu0 0.0
    %1986 = vmatpush1.msra.mxu0 0.0
    %1987 = vmatprep.subr.mxu0 0.0
    %1988 = vmatpush1.msra.mxu0 0.0
    %1989 = vmatprep.subr.mxu0 0.0
    %1990 = vmatpush1.msra.mxu0 0.0
    %1991 = vmatprep.subr.mxu0 0.0
    %1992 = vmatpush1.msra.mxu0 0.0
    %1993 = vmatprep.subr.mxu0 0.0
    %1994 = vmatpush1.msra.mxu0 0.0
    %1995 = vmatprep.subr.mxu0 0.0
    %1996 = vmatpush1.msra.mxu0 0.0
    %1997 = vmatprep.subr.mxu0 0.0
    %1998 = vmatpush1.msra.mxu0 0.0
    %1999 = vmatprep.subr.mxu0 0.0
    %2000 = vmatpush1.msra.mxu0 0.0
    %2001 = vmatprep.subr.mxu0 0.0
    %2002 = vmatpush1.msra.mxu0 0.0
    %2003 = vmatprep.mubr.f32.mxu0 0.0
    %2004 = vmatmul.mubr.f32.gmra.mrb[0].mxu0 %v1937
    %v2005 = vpop.f32.mrb[0].mxu0
    %v2006 = vadd.f32 0.0, %v2005
    %v2007 = vpop.f32.mrb[0].mxu0
    %2008 = vdwg.mxu0
    %2009 = vmatprep.subr.mxu0 0.0
    %2010 = vmatpush1.msra.mxu0 %v461
    %2011 = vmatprep.subr.mxu0 0.0
    %2012 = vmatpush1.msra.mxu0 %v462
    %2013 = vmatprep.subr.mxu0 0.0
    %2014 = vmatpush1.msra.mxu0 %v463
    %2015 = vmatprep.subr.mxu0 0.0
    %2016 = vmatpush1.msra.mxu0 %v464
    %2017 = vmatprep.subr.mxu0 0.0
    %2018 = vmatpush1.msra.mxu0 0.0
    %2019 = vmatprep.subr.mxu0 0.0
    %2020 = vmatpush1.msra.mxu0 0.0
    %2021 = vmatprep.subr.mxu0 0.0
    %2022 = vmatpush1.msra.mxu0 0.0
    %2023 = vmatprep.subr.mxu0 0.0
    %2024 = vmatpush1.msra.mxu0 0.0
    %2025 = vmatprep.subr.mxu0 0.0
    %2026 = vmatpush1.msra.mxu0 0.0
    %2027 = vmatprep.subr.mxu0 0.0
    %2028 = vmatpush1.msra.mxu0 0.0
    %2029 = vmatprep.subr.mxu0 0.0
    %2030 = vmatpush1.msra.mxu0 0.0
    %2031 = vmatprep.subr.mxu0 0.0
    %2032 = vmatpush1.msra.mxu0 0.0
    %2033 = vmatprep.subr.mxu0 0.0
    %2034 = vmatpush1.msra.mxu0 0.0
    %2035 = vmatprep.subr.mxu0 0.0
    %2036 = vmatpush1.msra.mxu0 0.0
    %2037 = vmatprep.subr.mxu0 0.0
    %2038 = vmatpush1.msra.mxu0 0.0
    %2039 = vmatprep.subr.mxu0 0.0
    %2040 = vmatpush1.msra.mxu0 0.0
    %2041 = vmatprep.subr.mxu0 0.0
    %2042 = vmatpush1.msra.mxu0 0.0
    %2043 = vmatprep.subr.mxu0 0.0
    %2044 = vmatpush1.msra.mxu0 0.0
    %2045 = vmatprep.subr.mxu0 0.0
    %2046 = vmatpush1.msra.mxu0 0.0
    %2047 = vmatprep.subr.mxu0 0.0
    %2048 = vmatpush1.msra.mxu0 0.0
    %2049 = vmatprep.subr.mxu0 0.0
    %2050 = vmatpush1.msra.mxu0 0.0
    %2051 = vmatprep.subr.mxu0 0.0
    %2052 = vmatpush1.msra.mxu0 0.0
    %2053 = vmatprep.subr.mxu0 0.0
    %2054 = vmatpush1.msra.mxu0 0.0
    %2055 = vmatprep.subr.mxu0 0.0
    %2056 = vmatpush1.msra.mxu0 0.0
    %2057 = vmatprep.subr.mxu0 0.0
    %2058 = vmatpush1.msra.mxu0 0.0
    %2059 = vmatprep.subr.mxu0 0.0
    %2060 = vmatpush1.msra.mxu0 0.0
    %2061 = vmatprep.subr.mxu0 0.0
    %2062 = vmatpush1.msra.mxu0 0.0
    %2063 = vmatprep.subr.mxu0 0.0
    %2064 = vmatpush1.msra.mxu0 0.0
    %2065 = vmatprep.subr.mxu0 0.0
    %2066 = vmatpush1.msra.mxu0 0.0
    %2067 = vmatprep.subr.mxu0 0.0
    %2068 = vmatpush1.msra.mxu0 0.0
    %2069 = vmatprep.subr.mxu0 0.0
    %2070 = vmatpush1.msra.mxu0 0.0
    %2071 = vmatprep.subr.mxu0 0.0
    %2072 = vmatpush1.msra.mxu0 0.0
    %2073 = vmatprep.mubr.f32.mxu0 0.0
    %2074 = vmatmul.mubr.f32.gmra.mrb[0].mxu0 %v1937
    %v2075 = vpop.f32.mrb[0].mxu0
    %v2076 = vadd.f32 0.0, %v2075
    %v2077 = vpop.f32.mrb[0].mxu0
    %2078 = vdwg.mxu0
    %v2079 = vadd.f32 %v205, %v2006
    %v2080 = vxor.u32 %v2079, 2147483648
    %v2081 = vmul.f32 %v2080, 1.442695
    %v2082 = vpow.pop %v2081
    %v2083 = vadd.f32 %v2082, 1.0
    %v2084 = vrcp.pop %v2083
    %v2085 = vmul.f32 1.0, %v2084
    %v2086 = vadd.f32 %v327, %v2076
    %v2087 = vxor.u32 %v2086, 2147483648
    %v2088 = vmul.f32 %v2087, 1.442695
    %v2089 = vpow.pop %v2088
    %v2090 = vadd.f32 %v2089, 1.0
    %v2091 = vrcp.pop %v2090
    %v2092 = vmul.f32 1.0, %v2091
    %2093 = vmatprep.subr.mxu0 0.0
    %2094 = vmatpush1.msra.mxu0 %v465
    %2095 = vmatprep.subr.mxu0 0.0
    %2096 = vmatpush1.msra.mxu0 %v466
    %2097 = vmatprep.subr.mxu0 0.0
    %2098 = vmatpush1.msra.mxu0 %v467
    %2099 = vmatprep.subr.mxu0 0.0
    %2100 = vmatpush1.msra.mxu0 %v468
    %2101 = vmatprep.subr.mxu0 0.0
    %2102 = vmatpush1.msra.mxu0 0.0
    %2103 = vmatprep.subr.mxu0 0.0
    %2104 = vmatpush1.msra.mxu0 0.0
    %2105 = vmatprep.subr.mxu0 0.0
    %2106 = vmatpush1.msra.mxu0 0.0
    %2107 = vmatprep.subr.mxu0 0.0
    %2108 = vmatpush1.msra.mxu0 0.0
    %2109 = vmatprep.subr.mxu0 0.0
    %2110 = vmatpush1.msra.mxu0 0.0
    %2111 = vmatprep.subr.mxu0 0.0
    %2112 = vmatpush1.msra.mxu0 0.0
    %2113 = vmatprep.subr.mxu0 0.0
    %2114 = vmatpush1.msra.mxu0 0.0
    %2115 = vmatprep.subr.mxu0 0.0
    %2116 = vmatpush1.msra.mxu0 0.0
    %2117 = vmatprep.subr.mxu0 0.0
    %2118 = vmatpush1.msra.mxu0 0.0
    %2119 = vmatprep.subr.mxu0 0.0
    %2120 = vmatpush1.msra.mxu0 0.0
    %2121 = vmatprep.subr.mxu0 0.0
    %2122 = vmatpush1.msra.mxu0 0.0
    %2123 = vmatprep.subr.mxu0 0.0
    %2124 = vmatpush1.msra.mxu0 0.0
    %2125 = vmatprep.subr.mxu0 0.0
    %2126 = vmatpush1.msra.mxu0 0.0
    %2127 = vmatprep.subr.mxu0 0.0
    %2128 = vmatpush1.msra.mxu0 0.0
    %2129 = vmatprep.subr.mxu0 0.0
    %2130 = vmatpush1.msra.mxu0 0.0
    %2131 = vmatprep.subr.mxu0 0.0
    %2132 = vmatpush1.msra.mxu0 0.0
    %2133 = vmatprep.subr.mxu0 0.0
    %2134 = vmatpush1.msra.mxu0 0.0
    %2135 = vmatprep.subr.mxu0 0.0
    %2136 = vmatpush1.msra.mxu0 0.0
    %2137 = vmatprep.subr.mxu0 0.0
    %2138 = vmatpush1.msra.mxu0 0.0
    %2139 = vmatprep.subr.mxu0 0.0
    %2140 = vmatpush1.msra.mxu0 0.0
    %2141 = vmatprep.subr.mxu0 0.0
    %2142 = vmatpush1.msra.mxu0 0.0
    %2143 = vmatprep.subr.mxu0 0.0
    %2144 = vmatpush1.msra.mxu0 0.0
    %2145 = vmatprep.subr.mxu0 0.0
    %2146 = vmatpush1.msra.mxu0 0.0
    %2147 = vmatprep.subr.mxu0 0.0
    %2148 = vmatpush1.msra.mxu0 0.0
    %2149 = vmatprep.subr.mxu0 0.0
    %2150 = vmatpush1.msra.mxu0 0.0
    %2151 = vmatprep.subr.mxu0 0.0
    %2152 = vmatpush1.msra.mxu0 0.0
    %2153 = vmatprep.subr.mxu0 0.0
    %2154 = vmatpush1.msra.mxu0 0.0
    %2155 = vmatprep.subr.mxu0 0.0
    %2156 = vmatpush1.msra.mxu0 0.0
    %2157 = vmatprep.mubr.f32.mxu0 0.0
    %2158 = vmatmul.mubr.f32.gmra.mrb[0].mxu0 %v1937
    %v2159 = vpop.f32.mrb[0].mxu0
    %v2160 = vadd.f32 %v640, %v2159
    %v2161 = vpop.f32.mrb[0].mxu0
    %2162 = vdwg.mxu0
    %v2163 = vmul.f32 %v2085, %v2160
    %v2164 = vadd.f32 %v449, %v2163
    %v2165 = vtanh.pop %v2164
    %v2166 = vsub.f32 1.0, %v2092
    %v2167 = vmul.f32 %v2166, %v2165
    %v2168 = vmul.f32 %v2092, %v1934
    %v2169 = vadd.f32 %v2167, %v2168
    %vm2170 = vcmp.gt.f32.partialorder %v476, 0.0
    %v2171 = vsel %vm2170, 1, 0
    %2172 = vset.pattern.permute.xlu0 0
    %2173 = vperm.xlu0 %2172, %v2171
    %v2174 = vpop.permute.xlu0 %2173
    %vm2175 = vcmp.eq.s32.totalorder %v2174, 1
    %v2176 = vsel %vm2175, %v2169, %v1934
    %v2177 = vsel %vm2175, %v2169, 0.0
    %v2179 = vsel %vm478, %v2176, 0
    %2181 = vmatprep.subr.mxu0 0.0
    %2182 = vmatpush1.msra.mxu0 %v457
    %2183 = vmatprep.subr.mxu0 0.0
    %2184 = vmatpush1.msra.mxu0 %v458
    %2185 = vmatprep.subr.mxu0 0.0
    %2186 = vmatpush1.msra.mxu0 %v459
    %2187 = vmatprep.subr.mxu0 0.0
    %2188 = vmatpush1.msra.mxu0 %v460
    %2189 = vmatprep.subr.mxu0 0.0
    %2190 = vmatpush1.msra.mxu0 0.0
    %2191 = vmatprep.subr.mxu0 0.0
    %2192 = vmatpush1.msra.mxu0 0.0
    %2193 = vmatprep.subr.mxu0 0.0
    %2194 = vmatpush1.msra.mxu0 0.0
    %2195 = vmatprep.subr.mxu0 0.0
    %2196 = vmatpush1.msra.mxu0 0.0
    %2197 = vmatprep.subr.mxu0 0.0
    %2198 = vmatpush1.msra.mxu0 0.0
    %2199 = vmatprep.subr.mxu0 0.0
    %2200 = vmatpush1.msra.mxu0 0.0
    %2201 = vmatprep.subr.mxu0 0.0
    %2202 = vmatpush1.msra.mxu0 0.0
    %2203 = vmatprep.subr.mxu0 0.0
    %2204 = vmatpush1.msra.mxu0 0.0
    %2205 = vmatprep.subr.mxu0 0.0
    %2206 = vmatpush1.msra.mxu0 0.0
    %2207 = vmatprep.subr.mxu0 0.0
    %2208 = vmatpush1.msra.mxu0 0.0
    %2209 = vmatprep.subr.mxu0 0.0
    %2210 = vmatpush1.msra.mxu0 0.0
    %2211 = vmatprep.subr.mxu0 0.0
    %2212 = vmatpush1.msra.mxu0 0.0
    %2213 = vmatprep.subr.mxu0 0.0
    %2214 = vmatpush1.msra.mxu0 0.0
    %2215 = vmatprep.subr.mxu0 0.0
    %2216 = vmatpush1.msra.mxu0 0.0
    %2217 = vmatprep.subr.mxu0 0.0
    %2218 = vmatpush1.msra.mxu0 0.0
    %2219 = vmatprep.subr.mxu0 0.0
    %2220 = vmatpush1.msra.mxu0 0.0
    %2221 = vmatprep.subr.mxu0 0.0
    %2222 = vmatpush1.msra.mxu0 0.0
    %2223 = vmatprep.subr.mxu0 0.0
    %2224 = vmatpush1.msra.mxu0 0.0
    %2225 = vmatprep.subr.mxu0 0.0
    %2226 = vmatpush1.msra.mxu0 0.0
    %2227 = vmatprep.subr.mxu0 0.0
    %2228 = vmatpush1.msra.mxu0 0.0
    %2229 = vmatprep.subr.mxu0 0.0
    %2230 = vmatpush1.msra.mxu0 0.0
    %2231 = vmatprep.subr.mxu0 0.0
    %2232 = vmatpush1.msra.mxu0 0.0
    %2233 = vmatprep.subr.mxu0 0.0
    %2234 = vmatpush1.msra.mxu0 0.0
    %2235 = vmatprep.subr.mxu0 0.0
    %2236 = vmatpush1.msra.mxu0 0.0
    %2237 = vmatprep.subr.mxu0 0.0
    %2238 = vmatpush1.msra.mxu0 0.0
    %2239 = vmatprep.subr.mxu0 0.0
    %2240 = vmatpush1.msra.mxu0 0.0
    %2241 = vmatprep.subr.mxu0 0.0
    %2242 = vmatpush1.msra.mxu0 0.0
    %2243 = vmatprep.subr.mxu0 0.0
    %2244 = vmatpush1.msra.mxu0 0.0
    %2245 = vmatprep.mubr.f32.mxu0 0.0
    %2246 = vmatmul.mubr.f32.gmra.mrb[0].mxu0 %v2179
    %v2247 = vpop.f32.mrb[0].mxu0
    %v2248 = vadd.f32 0.0, %v2247
    %v2249 = vpop.f32.mrb[0].mxu0
    %2250 = vdwg.mxu0
    %2251 = vmatprep.subr.mxu0 0.0
    %2252 = vmatpush1.msra.mxu0 %v461
    %2253 = vmatprep.subr.mxu0 0.0
    %2254 = vmatpush1.msra.mxu0 %v462
    %2255 = vmatprep.subr.mxu0 0.0
    %2256 = vmatpush1.msra.mxu0 %v463
    %2257 = vmatprep.subr.mxu0 0.0
    %2258 = vmatpush1.msra.mxu0 %v464
    %2259 = vmatprep.subr.mxu0 0.0
    %2260 = vmatpush1.msra.mxu0 0.0
    %2261 = vmatprep.subr.mxu0 0.0
    %2262 = vmatpush1.msra.mxu0 0.0
    %2263 = vmatprep.subr.mxu0 0.0
    %2264 = vmatpush1.msra.mxu0 0.0
    %2265 = vmatprep.subr.mxu0 0.0
    %2266 = vmatpush1.msra.mxu0 0.0
    %2267 = vmatprep.subr.mxu0 0.0
    %2268 = vmatpush1.msra.mxu0 0.0
    %2269 = vmatprep.subr.mxu0 0.0
    %2270 = vmatpush1.msra.mxu0 0.0
    %2271 = vmatprep.subr.mxu0 0.0
    %2272 = vmatpush1.msra.mxu0 0.0
    %2273 = vmatprep.subr.mxu0 0.0
    %2274 = vmatpush1.msra.mxu0 0.0
    %2275 = vmatprep.subr.mxu0 0.0
    %2276 = vmatpush1.msra.mxu0 0.0
    %2277 = vmatprep.subr.mxu0 0.0
    %2278 = vmatpush1.msra.mxu0 0.0
    %2279 = vmatprep.subr.mxu0 0.0
    %2280 = vmatpush1.msra.mxu0 0.0
    %2281 = vmatprep.subr.mxu0 0.0
    %2282 = vmatpush1.msra.mxu0 0.0
    %2283 = vmatprep.subr.mxu0 0.0
    %2284 = vmatpush1.msra.mxu0 0.0
    %2285 = vmatprep.subr.mxu0 0.0
    %2286 = vmatpush1.msra.mxu0 0.0
    %2287 = vmatprep.subr.mxu0 0.0
    %2288 = vmatpush1.msra.mxu0 0.0
    %2289 = vmatprep.subr.mxu0 0.0
    %2290 = vmatpush1.msra.mxu0 0.0
    %2291 = vmatprep.subr.mxu0 0.0
    %2292 = vmatpush1.msra.mxu0 0.0
    %2293 = vmatprep.subr.mxu0 0.0
    %2294 = vmatpush1.msra.mxu0 0.0
    %2295 = vmatprep.subr.mxu0 0.0
    %2296 = vmatpush1.msra.mxu0 0.0
    %2297 = vmatprep.subr.mxu0 0.0
    %2298 = vmatpush1.msra.mxu0 0.0
    %2299 = vmatprep.subr.mxu0 0.0
    %2300 = vmatpush1.msra.mxu0 0.0
    %2301 = vmatprep.subr.mxu0 0.0
    %2302 = vmatpush1.msra.mxu0 0.0
    %2303 = vmatprep.subr.mxu0 0.0
    %2304 = vmatpush1.msra.mxu0 0.0
    %2305 = vmatprep.subr.mxu0 0.0
    %2306 = vmatpush1.msra.mxu0 0.0
    %2307 = vmatprep.subr.mxu0 0.0
    %2308 = vmatpush1.msra.mxu0 0.0
    %2309 = vmatprep.subr.mxu0 0.0
    %2310 = vmatpush1.msra.mxu0 0.0
    %2311 = vmatprep.subr.mxu0 0.0
    %2312 = vmatpush1.msra.mxu0 0.0
    %2313 = vmatprep.subr.mxu0 0.0
    %2314 = vmatpush1.msra.mxu0 0.0
    %2315 = vmatprep.mubr.f32.mxu0 0.0
    %2316 = vmatmul.mubr.f32.gmra.mrb[0].mxu0 %v2179
    %v2317 = vpop.f32.mrb[0].mxu0
    %v2318 = vadd.f32 0.0, %v2317
    %v2319 = vpop.f32.mrb[0].mxu0
    %2320 = vdwg.mxu0
    %v2321 = vadd.f32 %v210, %v2248
    %v2322 = vxor.u32 %v2321, 2147483648
    %v2323 = vmul.f32 %v2322, 1.442695
    %v2324 = vpow.pop %v2323
    %v2325 = vadd.f32 %v2324, 1.0
    %v2326 = vrcp.pop %v2325
    %v2327 = vmul.f32 1.0, %v2326
    %v2328 = vadd.f32 %v332, %v2318
    %v2329 = vxor.u32 %v2328, 2147483648
    %v2330 = vmul.f32 %v2329, 1.442695
    %v2331 = vpow.pop %v2330
    %v2332 = vadd.f32 %v2331, 1.0
    %v2333 = vrcp.pop %v2332
    %v2334 = vmul.f32 1.0, %v2333
    %2335 = vmatprep.subr.mxu0 0.0
    %2336 = vmatpush1.msra.mxu0 %v465
    %2337 = vmatprep.subr.mxu0 0.0
    %2338 = vmatpush1.msra.mxu0 %v466
    %2339 = vmatprep.subr.mxu0 0.0
    %2340 = vmatpush1.msra.mxu0 %v467
    %2341 = vmatprep.subr.mxu0 0.0
    %2342 = vmatpush1.msra.mxu0 %v468
    %2343 = vmatprep.subr.mxu0 0.0
    %2344 = vmatpush1.msra.mxu0 0.0
    %2345 = vmatprep.subr.mxu0 0.0
    %2346 = vmatpush1.msra.mxu0 0.0
    %2347 = vmatprep.subr.mxu0 0.0
    %2348 = vmatpush1.msra.mxu0 0.0
    %2349 = vmatprep.subr.mxu0 0.0
    %2350 = vmatpush1.msra.mxu0 0.0
    %2351 = vmatprep.subr.mxu0 0.0
    %2352 = vmatpush1.msra.mxu0 0.0
    %2353 = vmatprep.subr.mxu0 0.0
    %2354 = vmatpush1.msra.mxu0 0.0
    %2355 = vmatprep.subr.mxu0 0.0
    %2356 = vmatpush1.msra.mxu0 0.0
    %2357 = vmatprep.subr.mxu0 0.0
    %2358 = vmatpush1.msra.mxu0 0.0
    %2359 = vmatprep.subr.mxu0 0.0
    %2360 = vmatpush1.msra.mxu0 0.0
    %2361 = vmatprep.subr.mxu0 0.0
    %2362 = vmatpush1.msra.mxu0 0.0
    %2363 = vmatprep.subr.mxu0 0.0
    %2364 = vmatpush1.msra.mxu0 0.0
    %2365 = vmatprep.subr.mxu0 0.0
    %2366 = vmatpush1.msra.mxu0 0.0
    %2367 = vmatprep.subr.mxu0 0.0
    %2368 = vmatpush1.msra.mxu0 0.0
    %2369 = vmatprep.subr.mxu0 0.0
    %2370 = vmatpush1.msra.mxu0 0.0
    %2371 = vmatprep.subr.mxu0 0.0
    %2372 = vmatpush1.msra.mxu0 0.0
    %2373 = vmatprep.subr.mxu0 0.0
    %2374 = vmatpush1.msra.mxu0 0.0
    %2375 = vmatprep.subr.mxu0 0.0
    %2376 = vmatpush1.msra.mxu0 0.0
    %2377 = vmatprep.subr.mxu0 0.0
    %2378 = vmatpush1.msra.mxu0 0.0
    %2379 = vmatprep.subr.mxu0 0.0
    %2380 = vmatpush1.msra.mxu0 0.0
    %2381 = vmatprep.subr.mxu0 0.0
    %2382 = vmatpush1.msra.mxu0 0.0
    %2383 = vmatprep.subr.mxu0 0.0
    %2384 = vmatpush1.msra.mxu0 0.0
    %2385 = vmatprep.subr.mxu0 0.0
    %2386 = vmatpush1.msra.mxu0 0.0
    %2387 = vmatprep.subr.mxu0 0.0
    %2388 = vmatpush1.msra.mxu0 0.0
    %2389 = vmatprep.subr.mxu0 0.0
    %2390 = vmatpush1.msra.mxu0 0.0
    %2391 = vmatprep.subr.mxu0 0.0
    %2392 = vmatpush1.msra.mxu0 0.0
    %2393 = vmatprep.subr.mxu0 0.0
    %2394 = vmatpush1.msra.mxu0 0.0
    %2395 = vmatprep.subr.mxu0 0.0
    %2396 = vmatpush1.msra.mxu0 0.0
    %2397 = vmatprep.subr.mxu0 0.0
    %2398 = vmatpush1.msra.mxu0 0.0
    %2399 = vmatprep.mubr.f32.mxu0 0.0
    %2400 = vmatmul.mubr.f32.gmra.mrb[0].mxu0 %v2179
    %v2401 = vpop.f32.mrb[0].mxu0
    %v2402 = vadd.f32 %v640, %v2401
    %v2403 = vpop.f32.mrb[0].mxu0
    %2404 = vdwg.mxu0
    %v2405 = vmul.f32 %v2327, %v2402
    %v2406 = vadd.f32 %v454, %v2405
    %v2407 = vtanh.pop %v2406
    %v2408 = vsub.f32 1.0, %v2334
    %v2409 = vmul.f32 %v2408, %v2407
    %v2410 = vmul.f32 %v2334, %v2176
    %v2411 = vadd.f32 %v2409, %v2410
    %vm2412 = vcmp.gt.f32.partialorder %v477, 0.0
    %v2413 = vsel %vm2412, 1, 0
    %2414 = vset.pattern.permute.xlu0 0
    %2415 = vperm.xlu0 %2414, %v2413
    %v2416 = vpop.permute.xlu0 %2415
    %vm2417 = vcmp.eq.s32.totalorder %v2416, 1
    %v2418 = vsel %vm2417, %v2411, %v2176
    %v2419 = vsel %vm2417, %v2411, 0.0
    %v2420 = vld [vmem:[%s13] sm:$0xff]
    %v2421 = vld [vmem:[%s13 + $0x8] sm:$0xff]
    %v2422 = vld [vmem:[%s13 + $0x10] sm:$0xff]
    %v2423 = vld [vmem:[%s13 + $0x18] sm:$0xff]
    %v2425 = vsel %vm478, %v967, 0
    %v2428 = vsel %vm478, %v1209, 0
    %v2431 = vsel %vm478, %v1451, 0
    %v2434 = vsel %vm478, %v1693, 0
    %v2437 = vsel %vm478, %v1935, 0
    %v2440 = vsel %vm478, %v2177, 0
    %v2443 = vsel %vm478, %v2419, 0
    %2445 = vmatprep.subr.mxu0 0.0
    %2446 = vmatpush1.msra.mxu0 %v2420
    %2447 = vmatprep.subr.mxu0 0.0
    %2448 = vmatpush1.msra.mxu0 %v2421
    %2449 = vmatprep.subr.mxu0 0.0
    %2450 = vmatpush1.msra.mxu0 %v2422
    %2451 = vmatprep.subr.mxu0 0.0
    %2452 = vmatpush1.msra.mxu0 %v2423
    %2453 = vmatprep.subr.mxu0 0.0
    %2454 = vmatpush1.msra.mxu0 0.0
    %2455 = vmatprep.subr.mxu0 0.0
    %2456 = vmatpush1.msra.mxu0 0.0
    %2457 = vmatprep.subr.mxu0 0.0
    %2458 = vmatpush1.msra.mxu0 0.0
    %2459 = vmatprep.subr.mxu0 0.0
    %2460 = vmatpush1.msra.mxu0 0.0
    %2461 = vmatprep.subr.mxu0 0.0
    %2462 = vmatpush1.msra.mxu0 0.0
    %2463 = vmatprep.subr.mxu0 0.0
    %2464 = vmatpush1.msra.mxu0 0.0
    %2465 = vmatprep.subr.mxu0 0.0
    %2466 = vmatpush1.msra.mxu0 0.0
    %2467 = vmatprep.subr.mxu0 0.0
    %2468 = vmatpush1.msra.mxu0 0.0
    %2469 = vmatprep.subr.mxu0 0.0
    %2470 = vmatpush1.msra.mxu0 0.0
    %2471 = vmatprep.subr.mxu0 0.0
    %2472 = vmatpush1.msra.mxu0 0.0
    %2473 = vmatprep.subr.mxu0 0.0
    %2474 = vmatpush1.msra.mxu0 0.0
    %2475 = vmatprep.subr.mxu0 0.0
    %2476 = vmatpush1.msra.mxu0 0.0
    %2477 = vmatprep.subr.mxu0 0.0
    %2478 = vmatpush1.msra.mxu0 0.0
    %2479 = vmatprep.subr.mxu0 0.0
    %2480 = vmatpush1.msra.mxu0 0.0
    %2481 = vmatprep.subr.mxu0 0.0
    %2482 = vmatpush1.msra.mxu0 0.0
    %2483 = vmatprep.subr.mxu0 0.0
    %2484 = vmatpush1.msra.mxu0 0.0
    %2485 = vmatprep.subr.mxu0 0.0
    %2486 = vmatpush1.msra.mxu0 0.0
    %2487 = vmatprep.subr.mxu0 0.0
    %2488 = vmatpush1.msra.mxu0 0.0
    %2489 = vmatprep.subr.mxu0 0.0
    %2490 = vmatpush1.msra.mxu0 0.0
    %2491 = vmatprep.subr.mxu0 0.0
    %2492 = vmatpush1.msra.mxu0 0.0
    %2493 = vmatprep.subr.mxu0 0.0
    %2494 = vmatpush1.msra.mxu0 0.0
    %2495 = vmatprep.subr.mxu0 0.0
    %2496 = vmatpush1.msra.mxu0 0.0
    %2497 = vmatprep.subr.mxu0 0.0
    %2498 = vmatpush1.msra.mxu0 0.0
    %2499 = vmatprep.subr.mxu0 0.0
    %2500 = vmatpush1.msra.mxu0 0.0
    %2501 = vmatprep.subr.mxu0 0.0
    %2502 = vmatpush1.msra.mxu0 0.0
    %2503 = vmatprep.subr.mxu0 0.0
    %2504 = vmatpush1.msra.mxu0 0.0
    %2505 = vmatprep.subr.mxu0 0.0
    %2506 = vmatpush1.msra.mxu0 0.0
    %2507 = vmatprep.subr.mxu0 0.0
    %2508 = vmatpush1.msra.mxu0 0.0
    %2509 = vmatprep.mubr.f32.mxu0 0.0
    %2510 = vmatmul.mubr.f32.gmra.mrb[0].mxu0 %v727
    %v2511 = vpop.f32.mrb[0].mxu0
    %v2512 = vadd.f32 0.0, %v2511
    %v2513 = vpop.f32.mrb[0].mxu0
    %2514 = vmatprep.mubr.f32.mxu0 0.0
    %2515 = vmatmul.mubr.f32.gmra.mrb[0].mxu0 %v2425
    %v2516 = vpop.f32.mrb[0].mxu0
    %v2517 = vadd.f32 0.0, %v2516
    %v2518 = vpop.f32.mrb[0].mxu0
    %2519 = vmatprep.mubr.f32.mxu0 0.0
    %2520 = vmatmul.mubr.f32.gmra.mrb[0].mxu0 %v2428
    %v2521 = vpop.f32.mrb[0].mxu0
    %v2522 = vadd.f32 0.0, %v2521
    %v2523 = vpop.f32.mrb[0].mxu0
    %2524 = vmatprep.mubr.f32.mxu0 0.0
    %2525 = vmatmul.mubr.f32.gmra.mrb[0].mxu0 %v2431
    %v2526 = vpop.f32.mrb[0].mxu0
    %v2527 = vadd.f32 0.0, %v2526
    %v2528 = vpop.f32.mrb[0].mxu0
    %2529 = vmatprep.mubr.f32.mxu0 0.0
    %2530 = vmatmul.mubr.f32.gmra.mrb[0].mxu0 %v2434
    %v2531 = vpop.f32.mrb[0].mxu0
    %v2532 = vadd.f32 0.0, %v2531
    %v2533 = vpop.f32.mrb[0].mxu0
    %2534 = vmatprep.mubr.f32.mxu0 0.0
    %2535 = vmatmul.mubr.f32.gmra.mrb[0].mxu0 %v2437
    %v2536 = vpop.f32.mrb[0].mxu0
    %v2537 = vadd.f32 0.0, %v2536
    %v2538 = vpop.f32.mrb[0].mxu0
    %2539 = vmatprep.mubr.f32.mxu0 0.0
    %2540 = vmatmul.mubr.f32.gmra.mrb[0].mxu0 %v2440
    %v2541 = vpop.f32.mrb[0].mxu0
    %v2542 = vadd.f32 0.0, %v2541
    %v2543 = vpop.f32.mrb[0].mxu0
    %2544 = vmatprep.mubr.f32.mxu0 0.0
    %2545 = vmatmul.mubr.f32.gmra.mrb[0].mxu0 %v2443
    %v2546 = vpop.f32.mrb[0].mxu0
    %v2547 = vadd.f32 0.0, %v2546
    %v2548 = vpop.f32.mrb[0].mxu0
    %2549 = vdwg.mxu0
    %v2550 = vld [vmem:[%s14] sm:$0xff]
    %v2551 = vld [vmem:[%s14 + $0x8] sm:$0xff]
    %v2552 = vld [vmem:[%s14 + $0x10] sm:$0xff]
    %v2553 = vld [vmem:[%s14 + $0x18] sm:$0xff]
    %v2555 = vsel %vm478, %v2418, 0
    %2557 = vmatprep.subr.mxu0 0.0
    %2558 = vmatpush1.msra.mxu0 %v2550
    %2559 = vmatprep.subr.mxu0 0.0
    %2560 = vmatpush1.msra.mxu0 %v2551
    %2561 = vmatprep.subr.mxu0 0.0
    %2562 = vmatpush1.msra.mxu0 %v2552
    %2563 = vmatprep.subr.mxu0 0.0
    %2564 = vmatpush1.msra.mxu0 %v2553
    %2565 = vmatprep.subr.mxu0 0.0
    %2566 = vmatpush1.msra.mxu0 0.0
    %2567 = vmatprep.subr.mxu0 0.0
    %2568 = vmatpush1.msra.mxu0 0.0
    %2569 = vmatprep.subr.mxu0 0.0
    %2570 = vmatpush1.msra.mxu0 0.0
    %2571 = vmatprep.subr.mxu0 0.0
    %2572 = vmatpush1.msra.mxu0 0.0
    %2573 = vmatprep.subr.mxu0 0.0
    %2574 = vmatpush1.msra.mxu0 0.0
    %2575 = vmatprep.subr.mxu0 0.0
    %2576 = vmatpush1.msra.mxu0 0.0
    %2577 = vmatprep.subr.mxu0 0.0
    %2578 = vmatpush1.msra.mxu0 0.0
    %2579 = vmatprep.subr.mxu0 0.0
    %2580 = vmatpush1.msra.mxu0 0.0
    %2581 = vmatprep.subr.mxu0 0.0
    %2582 = vmatpush1.msra.mxu0 0.0
    %2583 = vmatprep.subr.mxu0 0.0
    %2584 = vmatpush1.msra.mxu0 0.0
    %2585 = vmatprep.subr.mxu0 0.0
    %2586 = vmatpush1.msra.mxu0 0.0
    %2587 = vmatprep.subr.mxu0 0.0
    %2588 = vmatpush1.msra.mxu0 0.0
    %2589 = vmatprep.subr.mxu0 0.0
    %2590 = vmatpush1.msra.mxu0 0.0
    %2591 = vmatprep.subr.mxu0 0.0
    %2592 = vmatpush1.msra.mxu0 0.0
    %2593 = vmatprep.subr.mxu0 0.0
    %2594 = vmatpush1.msra.mxu0 0.0
    %2595 = vmatprep.subr.mxu0 0.0
    %2596 = vmatpush1.msra.mxu0 0.0
    %2597 = vmatprep.subr.mxu0 0.0
    %2598 = vmatpush1.msra.mxu0 0.0
    %2599 = vmatprep.subr.mxu0 0.0
    %2600 = vmatpush1.msra.mxu0 0.0
    %2601 = vmatprep.subr.mxu0 0.0
    %2602 = vmatpush1.msra.mxu0 0.0
    %2603 = vmatprep.subr.mxu0 0.0
    %2604 = vmatpush1.msra.mxu0 0.0
    %2605 = vmatprep.subr.mxu0 0.0
    %2606 = vmatpush1.msra.mxu0 0.0
    %2607 = vmatprep.subr.mxu0 0.0
    %2608 = vmatpush1.msra.mxu0 0.0
    %2609 = vmatprep.subr.mxu0 0.0
    %2610 = vmatpush1.msra.mxu0 0.0
    %2611 = vmatprep.subr.mxu0 0.0
    %2612 = vmatpush1.msra.mxu0 0.0
    %2613 = vmatprep.subr.mxu0 0.0
    %2614 = vmatpush1.msra.mxu0 0.0
    %2615 = vmatprep.subr.mxu0 0.0
    %2616 = vmatpush1.msra.mxu0 0.0
    %2617 = vmatprep.subr.mxu0 0.0
    %2618 = vmatpush1.msra.mxu0 0.0
    %2619 = vmatprep.subr.mxu0 0.0
    %2620 = vmatpush1.msra.mxu0 0.0
    %2621 = vmatprep.mubr.f32.mxu0 0.0
    %2622 = vmatmul.mubr.f32.gmra.mrb[0].mxu0 %v2555
    %v2623 = vpop.f32.mrb[0].mxu0
    %v2624 = vadd.f32 0.0, %v2623
    %v2625 = vpop.f32.mrb[0].mxu0
    %2626 = vdwg.mxu0
    %v2627 = vld [vmem:[%s2] sm:$0xff]
    %v2628 = vld [vmem:[%s2 + $0x8] sm:$0xff]
    %v2629 = vld [vmem:[%s2 + $0x10] sm:$0xff]
    %v2630 = vld [vmem:[%s2 + $0x18] sm:$0xff]
    %v2631 = vld [vmem:[%s2 + $0x20] sm:$0xff]
    %v2632 = vld [vmem:[%s2 + $0x28] sm:$0xff]
    %v2633 = vld [vmem:[%s2 + $0x30] sm:$0xff]
    %v2634 = vld [vmem:[%s2 + $0x38] sm:$0xff]
    %2636 = vset.pattern.permute.xlu0 0
    %2637 = vperm.xlu0 %2636, %v2627
    %v2638 = vpop.permute.xlu0 %2637
    %2641 = vset.pattern.permute.xlu0 0
    %2642 = vperm.xlu0 %2641, %v2628
    %v2643 = vpop.permute.xlu0 %2642
    %2646 = vset.pattern.permute.xlu0 0
    %2647 = vperm.xlu0 %2646, %v2629
    %v2648 = vpop.permute.xlu0 %2647
    %2651 = vset.pattern.permute.xlu0 0
    %2652 = vperm.xlu0 %2651, %v2630
    %v2653 = vpop.permute.xlu0 %2652
    %2656 = vset.pattern.permute.xlu0 0
    %2657 = vperm.xlu0 %2656, %v2631
    %v2658 = vpop.permute.xlu0 %2657
    %2661 = vset.pattern.permute.xlu0 0
    %2662 = vperm.xlu0 %2661, %v2632
    %v2663 = vpop.permute.xlu0 %2662
    %2666 = vset.pattern.permute.xlu0 0
    %2667 = vperm.xlu0 %2666, %v2633
    %v2668 = vpop.permute.xlu0 %2667
    %2671 = vset.pattern.permute.xlu0 0
    %2672 = vperm.xlu0 %2671, %v2634
    %v2673 = vpop.permute.xlu0 %2672
    %v2675 = vmul.f32 %v2638, %v2624
    %v2676 = vmul.f32 %v2643, %v2624
    %v2677 = vmul.f32 %v2648, %v2624
    %v2678 = vmul.f32 %v2653, %v2624
    %v2679 = vmul.f32 %v2658, %v2624
    %v2680 = vmul.f32 %v2663, %v2624
    %v2681 = vmul.f32 %v2668, %v2624
    %v2682 = vmul.f32 %v2673, %v2624
    %v2683 = vadd.f32 %v2512, %v2675
    %v2684 = vadd.f32 %v2517, %v2676
    %v2685 = vadd.f32 %v2522, %v2677
    %v2686 = vadd.f32 %v2527, %v2678
    %v2687 = vadd.f32 %v2532, %v2679
    %v2688 = vadd.f32 %v2537, %v2680
    %v2689 = vadd.f32 %v2542, %v2681
    %v2690 = vadd.f32 %v2547, %v2682
    %v2691 = vxor.u32 %v2683, 2147483648
    %v2692 = vxor.u32 %v2684, 2147483648
    %v2693 = vxor.u32 %v2685, 2147483648
    %v2694 = vxor.u32 %v2686, 2147483648
    %v2695 = vxor.u32 %v2687, 2147483648
    %v2696 = vxor.u32 %v2688, 2147483648
    %v2697 = vxor.u32 %v2689, 2147483648
    %v2698 = vxor.u32 %v2690, 2147483648
    %v2699 = vmul.f32 %v2691, 1.442695
    %v2700 = vpow.pop %v2699
    %v2701 = vmul.f32 %v2692, 1.442695
    %v2702 = vpow.pop %v2701
    %v2703 = vmul.f32 %v2693, 1.442695
    %v2704 = vpow.pop %v2703
    %v2705 = vmul.f32 %v2694, 1.442695
    %v2706 = vpow.pop %v2705
    %v2707 = vmul.f32 %v2695, 1.442695
    %v2708 = vpow.pop %v2707
    %v2709 = vmul.f32 %v2696, 1.442695
    %v2710 = vpow.pop %v2709
    %v2711 = vmul.f32 %v2697, 1.442695
    %v2712 = vpow.pop %v2711
    %v2713 = vmul.f32 %v2698, 1.442695
    %v2714 = vpow.pop %v2713
    %v2715 = vadd.f32 %v2700, 1.0
    %v2716 = vadd.f32 %v2702, 1.0
    %v2717 = vadd.f32 %v2704, 1.0
    %v2718 = vadd.f32 %v2706, 1.0
    %v2719 = vadd.f32 %v2708, 1.0
    %v2720 = vadd.f32 %v2710, 1.0
    %v2721 = vadd.f32 %v2712, 1.0
    %v2722 = vadd.f32 %v2714, 1.0
    %v2723 = vrcp.pop %v2715
    %v2724 = vmul.f32 1.0, %v2723
    %v2725 = vrcp.pop %v2716
    %v2726 = vmul.f32 1.0, %v2725
    %v2727 = vrcp.pop %v2717
    %v2728 = vmul.f32 1.0, %v2727
    %v2729 = vrcp.pop %v2718
    %v2730 = vmul.f32 1.0, %v2729
    %v2731 = vrcp.pop %v2719
    %v2732 = vmul.f32 1.0, %v2731
    %v2733 = vrcp.pop %v2720
    %v2734 = vmul.f32 1.0, %v2733
    %v2735 = vrcp.pop %v2721
    %v2736 = vmul.f32 1.0, %v2735
    %v2737 = vrcp.pop %v2722
    %v2738 = vmul.f32 1.0, %v2737
    %v2739 = vld [vmem:[%s15] sm:$0x1]
    %v2741 = vlaneseq
    %v2742 = vshrl.u32 %v2741, 7
    %v2743 = vsub.s32 0, %v2742
    %v2744 = vrot.slane %v2739, %v2743
    %v2746 = vmul.f32 %v2724, %v2744
    %v2747 = vmul.f32 %v2726, %v2744
    %v2748 = vmul.f32 %v2728, %v2744
    %v2749 = vmul.f32 %v2730, %v2744
    %v2750 = vmul.f32 %v2732, %v2744
    %v2751 = vmul.f32 %v2734, %v2744
    %v2752 = vmul.f32 %v2736, %v2744
    %v2753 = vmul.f32 %v2738, %v2744
    %v2754 = vsel %vm478, %v2746, 0.0
    %2755 = vadd.xlane.f32.xlu0 %v2754
    %v2756 = vpop.xlane.xlu0 %2755
    %v2757 = vsel %vm478, %v2747, 0.0
    %2758 = vadd.xlane.f32.xlu0 %v2757
    %v2759 = vpop.xlane.xlu0 %2758
    %v2760 = vsel %vm478, %v2748, 0.0
    %2761 = vadd.xlane.f32.xlu0 %v2760
    %v2762 = vpop.xlane.xlu0 %2761
    %v2763 = vsel %vm478, %v2749, 0.0
    %2764 = vadd.xlane.f32.xlu0 %v2763
    %v2765 = vpop.xlane.xlu0 %2764
    %v2766 = vsel %vm478, %v2750, 0.0
    %2767 = vadd.xlane.f32.xlu0 %v2766
    %v2768 = vpop.xlane.xlu0 %2767
    %v2769 = vsel %vm478, %v2751, 0.0
    %2770 = vadd.xlane.f32.xlu0 %v2769
    %v2771 = vpop.xlane.xlu0 %2770
    %v2772 = vsel %vm478, %v2752, 0.0
    %2773 = vadd.xlane.f32.xlu0 %v2772
    %v2774 = vpop.xlane.xlu0 %2773
    %v2775 = vsel %vm478, %v2753, 0.0
    %2776 = vadd.xlane.f32.xlu0 %v2775
    %v2777 = vpop.xlane.xlu0 %2776
    %v2778 = vmul.f32 %v2756, %v725
    %v2779 = vmul.f32 %v2759, %v967
    %v2780 = vmul.f32 %v2762, %v1209
    %v2781 = vmul.f32 %v2765, %v1451
    %v2782 = vmul.f32 %v2768, %v1693
    %v2783 = vmul.f32 %v2771, %v1935
    %v2784 = vmul.f32 %v2774, %v2177
    %v2785 = vmul.f32 %v2777, %v2419
    %v2786 = vsel %vm478, %v2778, 0.0
    %v2787 = vsel %vm478, %v2779, 0.0
    %v2788 = vadd.f32 %v2786, %v2787
    %v2789 = vsel %vm478, %v2780, 0.0
    %v2790 = vadd.f32 %v2788, %v2789
    %v2791 = vsel %vm478, %v2781, 0.0
    %v2792 = vadd.f32 %v2790, %v2791
    %v2793 = vsel %vm478, %v2782, 0.0
    %v2794 = vadd.f32 %v2792, %v2793
    %v2795 = vsel %vm478, %v2783, 0.0
    %v2796 = vadd.f32 %v2794, %v2795
    %v2797 = vsel %vm478, %v2784, 0.0
    %v2798 = vadd.f32 %v2796, %v2797
    %v2799 = vsel %vm478, %v2785, 0.0
    %v2800 = vadd.f32 %v2798, %v2799
    %2801 = vst.msk [vmem:[#allocation2] sm:$0xff] %vm478, %v2800
    %2802 = vst.msk [vmem:[#allocation4] sm:$0xff] %vm478, %v2418
    // Predicated region
    $region66: #{tpu_custom_call.1} parent=1 // pred_check
      _
    $region67: #{tpu_custom_call.1} parent=1 // pred_check_branch
      %2804 = sbr.rel (0) target = $region69
    $region68: #{tpu_custom_call.1} parent=1 // pred_region
      %s2806 = ssub.s32 128, 128
      %2807 = vsyncadd [#allocation3], %s2806
      %s2809 = sshll.u32 [#allocation2], 4
      %s2810 = int_to_ptr.vmem [resolvable:$true] %s2809
      %2812 = dma.vmem_to_hbm [thread:$0]  %s2810, 128, %s16, [#allocation3]
    $region69: #{tpu_custom_call.1} parent=1 // pred_fallthru
      _
    // Predicated region
    $region70: #{tpu_custom_call.1} parent=1 // pred_check
      _
    $region71: #{tpu_custom_call.1} parent=1 // pred_check_branch
      %2814 = sbr.rel (0) target = $region73
    $region72: #{tpu_custom_call.1} parent=1 // pred_region
      %s2816 = ssub.s32 128, 128
      %2817 = vsyncadd [#allocation5], %s2816
      %s2819 = sshll.u32 [#allocation4], 4
      %s2820 = int_to_ptr.vmem [resolvable:$true] %s2819
      %2822 = dma.vmem_to_hbm [thread:$0]  %s2820, 128, %s17, [#allocation5]
    $region73: #{tpu_custom_call.1} parent=1 // pred_fallthru
      _
    // Predicated region
    $region74: #{tpu_custom_call.1} parent=1 // pred_check
      _
    $region75: #{tpu_custom_call.1} parent=1 // pred_check_branch
      %2824 = sbr.rel (0) target = $region77
    $region76: #{tpu_custom_call.1} parent=1 // pred_region
      %2825 = dma.done [#allocation3], 128
    $region77: #{tpu_custom_call.1} parent=1 // pred_fallthru
      _
    // Predicated region
    $region78: #{tpu_custom_call.1} parent=1 // pred_check
      _
    $region79: #{tpu_custom_call.1} parent=1 // pred_check_branch
      %2827 = sbr.rel (0) target = $region81
    $region80: #{tpu_custom_call.1} parent=1 // pred_region
      %2828 = dma.done [#allocation5], 128
    $region81: #{tpu_custom_call.1} parent=1 // pred_fallthru
      _
    %2829 = vsyncpa [#allocation3], 1
    %2830 = vsyncpa [#allocation5], 1

</llo_original>
